<compile_context>
chip_gen: v7x
topology: tpu7x:2x2x1
jax: 0.10.0
libtpu: 0.0.40
codegen_flags: <defaults>
</compile_context>

<pallas_src>
import functools

import jax
import jax.numpy as jnp
from jax.experimental import pallas as pl
from jax.experimental.pallas import tpu as pltpu


def _cross_attn_kernel(*refs, n_head, d_model, inv_temp, eps, lk_valid,
                       has_qpos, has_pos, mxu_dtype):
    it = iter(refs)
    tgt_ref = next(it)
    qp_ref = next(it) if has_qpos else None
    mem_ref = next(it)
    pos_ref = next(it) if has_pos else None
    wq_ref = next(it)
    wk_ref = next(it)
    wv_ref = next(it)
    wfc_ref = next(it)
    gamma_ref = next(it)
    beta_ref = next(it)
    out_ref = next(it)
    logits_ref = next(it)

    bb, lq, d = tgt_ref.shape
    lk = mem_ref.shape[1]            # padded key length (multiple of 128)
    hd = n_head * d_model

    # ---- fused positional adds (VPU work hidden under the matmuls) ----
    x_tgt = tgt_ref[...]                                     # (BB, Lq, D) f32
    q_in = (x_tgt + qp_ref[...]) if has_qpos else x_tgt
    x_mem = mem_ref[...]                                     # (BB, Lk, D) f32
    k_in = (x_mem + pos_ref[...]) if has_pos else x_mem

    # ---- QKV projections on flattened (BB*L, D) slabs (tall MXU matmuls) ----
    q2d = q_in.reshape(bb * lq, d).astype(mxu_dtype)
    k2d = k_in.reshape(bb * lk, d).astype(mxu_dtype)
    v2d = x_mem.reshape(bb * lk, d).astype(mxu_dtype)

    # temperature hoisted: one multiply on Q instead of a divide per head slice
    Q = jnp.dot(q2d, wq_ref[...].astype(mxu_dtype),
                preferred_element_type=jnp.float32) * inv_temp
    K = jnp.dot(k2d, wk_ref[...].astype(mxu_dtype),
                preferred_element_type=jnp.float32)
    V = jnp.dot(v2d, wv_ref[...].astype(mxu_dtype),
                preferred_element_type=jnp.float32)

    Qc = Q.reshape(bb, lq, hd).astype(mxu_dtype)
    Kc = K.reshape(bb, lk, hd).astype(mxu_dtype)
    Vc = V.reshape(bb, lk, hd).astype(mxu_dtype)
    wfc_c = wfc_ref[...].astype(mxu_dtype)

    # static padding-key bias (only materialized when Lk was padded to 128 lanes)
    if lk_valid < lk:
        col = jax.lax.broadcasted_iota(jnp.int32, (1, lk), 1)
        key_bias = jnp.where(col < lk_valid, 0.0, -1e9).astype(jnp.float32)
    else:
        key_bias = None

    dn_scores = (((2,), (2,)), ((0,), (0,)))   # contract D (no explicit K transpose)
    dn_pv = (((2,), (1,)), ((0,), (0,)))       # contract Lk

    logits_acc = jnp.zeros((bb, lq, lk), jnp.float32)
    proj = jnp.zeros((bb * lq, d_model), jnp.float32)

    for h in range(n_head):                    # static, unrolled head loop
        sl = slice(h * d_model, (h + 1) * d_model)
        qh = Qc[:, :, sl]
        kh = Kc[:, :, sl]
        vh = Vc[:, :, sl]

        scores = jax.lax.dot_general(qh, kh, dimension_numbers=dn_scores,
                                     preferred_element_type=jnp.float32)  # (BB,Lq,Lk)
        logits_acc = logits_acc + scores

        # softmax over keys, always in f32 (v5e has no bf16 VPU/EUP path)
        s = scores if key_bias is None else scores + key_bias
        m = jnp.max(s, axis=-1, keepdims=True)
        e = jnp.exp(s - m)
        p = e * pl.reciprocal(jnp.sum(e, axis=-1, keepdims=True), approx=False)

        oh = jax.lax.dot_general(p.astype(mxu_dtype), vh, dimension_numbers=dn_pv,
                                 preferred_element_type=jnp.float32)      # (BB,Lq,D)
        # fold this head's slice of Wfc in directly (no concat of head outputs)
        proj = proj + jnp.dot(oh.reshape(bb * lq, d_model).astype(mxu_dtype),
                              wfc_c[sl, :],
                              preferred_element_type=jnp.float32)

    # mean over heads of pre-softmax logits; store is lane-dense (Lk padded to 128)
    logits_ref[...] = logits_acc * jnp.float32(1.0 / n_head)

    # ---- residual + LayerNorm (f32) on the flattened slab ----
    res = x_tgt.reshape(bb * lq, d_model) + proj
    mu = jnp.mean(res, axis=-1, keepdims=True)
    var = jnp.mean(jnp.square(res - mu), axis=-1, keepdims=True)
    normed = (res - mu) * jax.lax.rsqrt(var + eps)
    out = normed * gamma_ref[...] + beta_ref[...]
    out_ref[...] = out.reshape(bb, lq, d_model)


def _pick_bb(batch, max_bb=8):
    """Largest divisor of `batch` <= max_bb that keeps >= 2 grid steps when
    batch >= 2 (v7x shards the 'parallel' grid axis over 2 TensorCores)."""
    target = max(1, min(max_bb, batch // 2 if batch >= 2 else batch))
    for bb in range(target, 0, -1):
        if batch % bb == 0:
            return bb
    return 1


def cross_attention_layer(tgt, memory, params, pos=None, query_pos=None,
                          *, mxu_dtype=jnp.float32, max_bb=8):
    """tgt: (Lq, B, D), memory: (Lk, B, D) (seq-first, PyTorch convention).
    Returns (out (Lq, B, D), attn_logits (B, 1, Lq, Lk))."""
    wq_t, wk_t, wv_t, wfc_t = (params["wq_t"], params["wk_t"],
                               params["wv_t"], params["wfc_t"])
    gamma, beta, n_head = params["gamma"], params["beta"], params["n_head"]

    Lq, B, D = tgt.shape
    Lk = memory.shape[0]
    HD = n_head * D
    inv_temp = 1.0 / (float(D) ** 0.5)
    eps = 1e-5                              # outer nn.LayerNorm default
    Lk_pad = ((Lk + 127) // 128) * 128      # lane-dense scores / logits writeback
    BB = _pick_bb(B, max_bb)

    to_bf = lambda x: jnp.transpose(x, (1, 0, 2)).astype(jnp.float32)
    pad_k = (lambda x: x) if Lk_pad == Lk else (
        lambda x: jnp.pad(x, ((0, 0), (0, Lk_pad - Lk), (0, 0))))

    q_spec = pl.BlockSpec((BB, Lq, D), lambda b: (b, 0, 0))
    k_spec = pl.BlockSpec((BB, Lk_pad, D), lambda b: (b, 0, 0))
    full2d = lambda shp: pl.BlockSpec(shp, lambda b: (0, 0))

    inputs, in_specs = [to_bf(tgt)], [q_spec]
    if query_pos is not None:
        inputs.append(to_bf(query_pos))
        in_specs.append(q_spec)
    inputs.append(pad_k(to_bf(memory)))
    in_specs.append(k_spec)
    if pos is not None:
        inputs.append(pad_k(to_bf(pos)))
        in_specs.append(k_spec)
    inputs += [wq_t, wk_t, wv_t, wfc_t, gamma.reshape(1, D), beta.reshape(1, D)]
    in_specs += [full2d((D, HD)), full2d((D, HD)), full2d((D, HD)),
                 full2d((HD, D)), full2d((1, D)), full2d((1, D))]

    kernel = functools.partial(
        _cross_attn_kernel, n_head=n_head, d_model=D, inv_temp=inv_temp,
        eps=eps, lk_valid=Lk, has_qpos=query_pos is not None,
        has_pos=pos is not None, mxu_dtype=mxu_dtype)

    # Explicit VMEM budget: double-buffered pipeline (incl. the constant-index
    # weight blocks, which still occupy 2x their size) plus headroom for
    # in-kernel temporaries.  Capped well below v7x's 64 MiB physical VMEM.
    blk_bytes = 4 * (BB * Lq * D * (2 if query_pos is not None else 1)
                     + BB * Lk_pad * D * (2 if pos is not None else 1)
                     + 4 * D * HD + 2 * D
                     + BB * Lq * D + BB * Lq * Lk_pad)
    vmem_limit = int(min(max(4 * blk_bytes, 8 << 20), 48 << 20))
    # TODO(synk): for very long Lk on v7x (64 MiB VMEM), add an 'arbitrary' grid
    # axis over Lk with a flash-style running softmax instead of holding full K/V.

    out_b, logits_b = pl.pallas_call(
        kernel,
        grid=(B // BB,),
        in_specs=in_specs,
        out_specs=[
            pl.BlockSpec((BB, Lq, D), lambda b: (b, 0, 0)),
            pl.BlockSpec((BB, Lq, Lk_pad), lambda b: (b, 0, 0)),
        ],
        out_shape=[
            jax.ShapeDtypeStruct((B, Lq, D), jnp.float32),
            jax.ShapeDtypeStruct((B, Lq, Lk_pad), jnp.float32),
        ],
        compiler_params=pltpu.CompilerParams(
            dimension_semantics=("parallel",),
            vmem_limit_bytes=vmem_limit),
    )(*inputs)

    out = jnp.transpose(out_b, (1, 0, 2))          # back to (Lq, B, D)
    attn_logits = logits_b[:, None, :, :Lk]        # drop lane padding
    return out, attn_logits


def _xavier_uniform(key, shape):
    # shape = (out_features, in_features), PyTorch convention
    fan_out, fan_in = shape
    bound = (6.0 / (fan_in + fan_out)) ** 0.5
    return jax.random.uniform(key, shape, jnp.float32, -bound, bound)


def init_params(key, d_model, n_head):
    k1, k2, k3, k4 = jax.random.split(key, 4)
    HD = n_head * d_model
    wq = _xavier_uniform(k1, (HD, d_model))
    wk = _xavier_uniform(k2, (HD, d_model))
    wv = _xavier_uniform(k3, (HD, d_model))
    wfc = _xavier_uniform(k4, (d_model, HD))
    return {
        "wq_t": wq.T, "wk_t": wk.T, "wv_t": wv.T, "wfc_t": wfc.T,
        "gamma": jnp.ones((d_model,), jnp.float32),
        "beta": jnp.zeros((d_model,), jnp.float32),
        "n_head": n_head,
    }


def _reference(tgt, memory, params, pos=None, query_pos=None):
    """Pure-JAX reference mirroring the PyTorch forward (dropout=0)."""
    n_head = params["n_head"]
    Lq, B, D = tgt.shape
    Lk = memory.shape[0]
    q = (tgt if query_pos is None else tgt + query_pos).transpose(1, 0, 2)
    k = (memory if pos is None else memory + pos).transpose(1, 0, 2)
    v = memory.transpose(1, 0, 2)
    Q = (q @ params["wq_t"]).reshape(B, Lq, n_head, D).transpose(0, 2, 1, 3)
    K = (k @ params["wk_t"]).reshape(B, Lk, n_head, D).transpose(0, 2, 1, 3)
    V = (v @ params["wv_t"]).reshape(B, Lk, n_head, D).transpose(0, 2, 1, 3)
    logits = jnp.einsum("bhqd,bhkd->bhqk", Q / (D ** 0.5), K)
    p = jax.nn.softmax(logits, axis=-1)
    o = jnp.einsum("bhqk,bhkd->bhqd", p, V)
    o = o.transpose(0, 2, 1, 3).reshape(B, Lq, n_head * D)
    tgt2 = (o @ params["wfc_t"]).transpose(1, 0, 2)   # (Lq, B, D)
    x = tgt + tgt2
    mu = x.mean(-1, keepdims=True)
    var = ((x - mu) ** 2).mean(-1, keepdims=True)
    out = (x - mu) / jnp.sqrt(var + 1e-5) * params["gamma"] + params["beta"]
    attn_logits = jnp.mean(logits, axis=1, keepdims=True) if n_head > 1 else logits
    return out, attn_logits


if __name__ == "__main__":
    key = jax.random.PRNGKey(0)
    kp, kt, km, kqp, kpp = jax.random.split(key, 5)

    B, Lq, Lk, D, H = 4, 8, 16, 32, 4
    params = init_params(kp, D, H)

    tgt = jax.random.normal(kt, (Lq, B, D), jnp.float32)
    memory = jax.random.normal(km, (Lk, B, D), jnp.float32)
    query_pos = jax.random.normal(kqp, (Lq, B, D), jnp.float32)
    pos = jax.random.normal(kpp, (Lk, B, D), jnp.float32)

    ref_out, ref_logits = _reference(tgt, memory, params,
                                     pos=pos, query_pos=query_pos)

    # f32 MXU path (exact): tight tolerance.
    out, attn_logits = cross_attention_layer(tgt, memory, params,
                                             pos=pos, query_pos=query_pos)
    out = jax.block_until_ready(out)
    attn_logits = jax.block_until_ready(attn_logits)
    assert out.shape == (Lq, B, D)
    assert attn_logits.shape == (B, 1, Lq, Lk)
    assert jnp.allclose(out, ref_out, atol=1e-4, rtol=1e-4)
    assert jnp.allclose(attn_logits, ref_logits, atol=1e-4, rtol=1e-4)

    # bf16 MXU-operand fast path (v6e/v7x); softmax/LayerNorm stay f32, so only
    # small reduced-precision drift is expected -> loose tolerance.
    out_bf, logits_bf = cross_attention_layer(tgt, memory, params, pos=pos,
                                              query_pos=query_pos,
                                              mxu_dtype=jnp.bfloat16)
    out_bf = jax.block_until_ready(out_bf)
    logits_bf = jax.block_until_ready(logits_bf)
    assert jnp.allclose(out_bf, ref_out, atol=1e-1, rtol=1e-1)
    assert jnp.allclose(logits_bf, ref_logits, atol=1e-1, rtol=1e-1)

    print("KERNEL_OK")
</pallas_src>

<mosaic_0001>
module attributes {stable_mosaic.version = 11 : i64} {
  func.func @_cross_attn_kernel(%arg0: i32, %arg1: memref<2x8x32xf32, #tpu.memory_space<vmem>>, %arg2: memref<2x8x32xf32, #tpu.memory_space<vmem>>, %arg3: memref<2x128x32xf32, #tpu.memory_space<vmem>>, %arg4: memref<2x128x32xf32, #tpu.memory_space<vmem>>, %arg5: memref<32x128xf32, #tpu.memory_space<vmem>>, %arg6: memref<32x128xf32, #tpu.memory_space<vmem>>, %arg7: memref<32x128xf32, #tpu.memory_space<vmem>>, %arg8: memref<128x32xf32, #tpu.memory_space<vmem>>, %arg9: memref<1x32xf32, #tpu.memory_space<vmem>>, %arg10: memref<1x32xf32, #tpu.memory_space<vmem>>, %arg11: memref<2x8x32xf32, #tpu.memory_space<vmem>>, %arg12: memref<2x8x128xf32, #tpu.memory_space<vmem>>) attributes {dimension_semantics = [#tpu.dimension_semantics<parallel>], iteration_bounds = array<i64: 2>, scalar_prefetch = 0 : i64, scratch_operands = 0 : i64, tpu.core_type = #tpu.core_type<tc>, window_params = [{transform_indices = @transform_0, window_bounds = array<i64: 2, 8, 32>}, {transform_indices = @transform_1, window_bounds = array<i64: 2, 8, 32>}, {transform_indices = @transform_2, window_bounds = array<i64: 2, 128, 32>}, {transform_indices = @transform_3, window_bounds = array<i64: 2, 128, 32>}, {pipeline_mode = #tpu.pipeline_mode<synchronous>, transform_indices = @transform_4, window_bounds = array<i64: 32, 128>}, {pipeline_mode = #tpu.pipeline_mode<synchronous>, transform_indices = @transform_5, window_bounds = array<i64: 32, 128>}, {pipeline_mode = #tpu.pipeline_mode<synchronous>, transform_indices = @transform_6, window_bounds = array<i64: 32, 128>}, {pipeline_mode = #tpu.pipeline_mode<synchronous>, transform_indices = @transform_7, window_bounds = array<i64: 128, 32>}, {pipeline_mode = #tpu.pipeline_mode<synchronous>, transform_indices = @transform_8, window_bounds = array<i64: 1, 32>}, {pipeline_mode = #tpu.pipeline_mode<synchronous>, transform_indices = @transform_9, window_bounds = array<i64: 1, 32>}, {transform_indices = @transform_10, window_bounds = array<i64: 2, 8, 32>}, {transform_indices = @transform_11, window_bounds = array<i64: 2, 8, 128>}]} {
    %c0 = arith.constant 0 : index
    %c0_0 = arith.constant 0 : index
    %c0_1 = arith.constant 0 : index
    %0 = vector.load %arg1[%c0, %c0_0, %c0_1] : memref<2x8x32xf32, #tpu.memory_space<vmem>>, vector<2x8x32xf32>
    %c0_2 = arith.constant 0 : index
    %c0_3 = arith.constant 0 : index
    %c0_4 = arith.constant 0 : index
    %1 = vector.load %arg2[%c0_2, %c0_3, %c0_4] : memref<2x8x32xf32, #tpu.memory_space<vmem>>, vector<2x8x32xf32>
    %2 = arith.addf %0, %1 : vector<2x8x32xf32>
    %c0_5 = arith.constant 0 : index
    %c0_6 = arith.constant 0 : index
    %c0_7 = arith.constant 0 : index
    %3 = vector.load %arg3[%c0_5, %c0_6, %c0_7] : memref<2x128x32xf32, #tpu.memory_space<vmem>>, vector<2x128x32xf32>
    %c0_8 = arith.constant 0 : index
    %c0_9 = arith.constant 0 : index
    %c0_10 = arith.constant 0 : index
    %4 = vector.load %arg4[%c0_8, %c0_9, %c0_10] : memref<2x128x32xf32, #tpu.memory_space<vmem>>, vector<2x128x32xf32>
    %5 = arith.addf %3, %4 : vector<2x128x32xf32>
    %6 = vector.shape_cast %2 : vector<2x8x32xf32> to vector<16x32xf32>
    %7 = vector.shape_cast %5 : vector<2x128x32xf32> to vector<256x32xf32>
    %8 = vector.shape_cast %3 : vector<2x128x32xf32> to vector<256x32xf32>
    %c0_11 = arith.constant 0 : index
    %c0_12 = arith.constant 0 : index
    %9 = vector.load %arg5[%c0_11, %c0_12] : memref<32x128xf32, #tpu.memory_space<vmem>>, vector<32x128xf32>
    %cst = arith.constant dense<0.000000e+00> : vector<16x128xf32>
    %10 = tpu.matmul %6, %9, %cst {dimension_numbers = #tpu.dot_dimension_numbers<[1], [0], [0], [1], [0, 0, 1, 1], [], []>} : vector<16x32xf32>, vector<32x128xf32>, vector<16x128xf32> -> vector<16x128xf32>
    %cst_13 = arith.constant 0.176776692 : f32
    %11 = vector.broadcast %cst_13 : f32 to vector<16x128xf32>
    %12 = arith.mulf %10, %11 : vector<16x128xf32>
    %c0_14 = arith.constant 0 : index
    %c0_15 = arith.constant 0 : index
    %13 = vector.load %arg6[%c0_14, %c0_15] : memref<32x128xf32, #tpu.memory_space<vmem>>, vector<32x128xf32>
    %cst_16 = arith.constant dense<0.000000e+00> : vector<256x128xf32>
    %14 = tpu.matmul %7, %13, %cst_16 {dimension_numbers = #tpu.dot_dimension_numbers<[1], [0], [0], [1], [0, 0, 1, 1], [], []>} : vector<256x32xf32>, vector<32x128xf32>, vector<256x128xf32> -> vector<256x128xf32>
    %c0_17 = arith.constant 0 : index
    %c0_18 = arith.constant 0 : index
    %15 = vector.load %arg7[%c0_17, %c0_18] : memref<32x128xf32, #tpu.memory_space<vmem>>, vector<32x128xf32>
    %cst_19 = arith.constant dense<0.000000e+00> : vector<256x128xf32>
    %16 = tpu.matmul %8, %15, %cst_19 {dimension_numbers = #tpu.dot_dimension_numbers<[1], [0], [0], [1], [0, 0, 1, 1], [], []>} : vector<256x32xf32>, vector<32x128xf32>, vector<256x128xf32> -> vector<256x128xf32>
    %17 = vector.shape_cast %12 : vector<16x128xf32> to vector<2x8x128xf32>
    %18 = vector.shape_cast %14 : vector<256x128xf32> to vector<2x128x128xf32>
    %19 = vector.shape_cast %16 : vector<256x128xf32> to vector<2x128x128xf32>
    %c0_20 = arith.constant 0 : index
    %c0_21 = arith.constant 0 : index
    %20 = vector.load %arg8[%c0_20, %c0_21] : memref<128x32xf32, #tpu.memory_space<vmem>>, vector<128x32xf32>
    %21 = tpu.iota {dimensions = array<i32: 1>} : vector<1x128xi32>
    %c16_i32 = arith.constant 16 : i32
    %22 = vector.broadcast %c16_i32 : i32 to vector<1x128xi32>
    %23 = arith.cmpi slt, %21, %22 : vector<1x128xi32>
    %cst_22 = arith.constant 0.000000e+00 : f32
    %cst_23 = arith.constant -1.000000e+09 : f32
    %24 = vector.broadcast %cst_22 : f32 to vector<1x128xf32>
    %25 = vector.broadcast %cst_23 : f32 to vector<1x128xf32>
    %26 = arith.select %23, %24, %25 : vector<1x128xi1>, vector<1x128xf32>
    %cst_24 = arith.constant 0.000000e+00 : f32
    %27 = vector.broadcast %cst_24 : f32 to vector<2x8x128xf32>
    %cst_25 = arith.constant 0.000000e+00 : f32
    %28 = vector.broadcast %cst_25 : f32 to vector<16x32xf32>
    %29 = vector.extract_strided_slice %17 {offsets = [0, 0, 0], sizes = [2, 8, 32], strides = [1, 1, 1]} : vector<2x8x128xf32> to vector<2x8x32xf32>
    %30 = vector.extract_strided_slice %18 {offsets = [0, 0, 0], sizes = [2, 128, 32], strides = [1, 1, 1]} : vector<2x128x128xf32> to vector<2x128x32xf32>
    %31 = vector.extract_strided_slice %19 {offsets = [0, 0, 0], sizes = [2, 128, 32], strides = [1, 1, 1]} : vector<2x128x128xf32> to vector<2x128x32xf32>
    %cst_26 = arith.constant dense<0.000000e+00> : vector<2x8x128xf32>
    %32 = tpu.matmul %29, %30, %cst_26 {dimension_numbers = #tpu.dot_dimension_numbers<[2], [2], [1], [1], [0, 0, 0, 1, 1, 1], [0], [0]>} : vector<2x8x32xf32>, vector<2x128x32xf32>, vector<2x8x128xf32> -> vector<2x8x128xf32>
    %33 = arith.addf %27, %32 : vector<2x8x128xf32>
    %34 = vector.shape_cast %26 : vector<1x128xf32> to vector<1x1x128xf32>
    %35 = vector.broadcast %34 : vector<1x1x128xf32> to vector<2x8x128xf32>
    %36 = arith.addf %32, %35 : vector<2x8x128xf32>
    %cst_27 = arith.constant dense<0xFF800000> : vector<2x8xf32>
    %37 = vector.multi_reduction <maximumf>, %36, %cst_27 [2] : vector<2x8x128xf32> to vector<2x8xf32>
    %38 = vector.shape_cast %37 : vector<2x8xf32> to vector<2x8x1xf32>
    %39 = vector.broadcast %38 : vector<2x8x1xf32> to vector<2x8x128xf32>
    %40 = arith.subf %36, %39 : vector<2x8x128xf32>
    %41 = math.exp %40 : vector<2x8x128xf32>
    %cst_28 = arith.constant dense<0.000000e+00> : vector<2x8xf32>
    %42 = vector.multi_reduction <add>, %41, %cst_28 [2] : vector<2x8x128xf32> to vector<2x8xf32>
    %43 = vector.shape_cast %42 : vector<2x8xf32> to vector<2x8x1xf32>
    %44 = tpu.reciprocal %43 : vector<2x8x1xf32> -> vector<2x8x1xf32>
    %45 = vector.broadcast %44 : vector<2x8x1xf32> to vector<2x8x128xf32>
    %46 = arith.mulf %41, %45 : vector<2x8x128xf32>
    %cst_29 = arith.constant dense<0.000000e+00> : vector<2x8x32xf32>
    %47 = tpu.matmul %46, %31, %cst_29 {dimension_numbers = #tpu.dot_dimension_numbers<[2], [1], [1], [2], [0, 0, 0, 1, 1, 2], [0], [0]>} : vector<2x8x128xf32>, vector<2x128x32xf32>, vector<2x8x32xf32> -> vector<2x8x32xf32>
    %48 = vector.shape_cast %47 : vector<2x8x32xf32> to vector<16x32xf32>
    %49 = vector.extract_strided_slice %20 {offsets = [0, 0], sizes = [32, 32], strides = [1, 1]} : vector<128x32xf32> to vector<32x32xf32>
    %cst_30 = arith.constant dense<0.000000e+00> : vector<16x32xf32>
    %50 = tpu.matmul %48, %49, %cst_30 {dimension_numbers = #tpu.dot_dimension_numbers<[1], [0], [0], [1], [0, 0, 1, 1], [], []>} : vector<16x32xf32>, vector<32x32xf32>, vector<16x32xf32> -> vector<16x32xf32>
    %51 = arith.addf %28, %50 : vector<16x32xf32>
    %52 = vector.extract_strided_slice %17 {offsets = [0, 0, 32], sizes = [2, 8, 32], strides = [1, 1, 1]} : vector<2x8x128xf32> to vector<2x8x32xf32>
    %53 = vector.extract_strided_slice %18 {offsets = [0, 0, 32], sizes = [2, 128, 32], strides = [1, 1, 1]} : vector<2x128x128xf32> to vector<2x128x32xf32>
    %54 = vector.extract_strided_slice %19 {offsets = [0, 0, 32], sizes = [2, 128, 32], strides = [1, 1, 1]} : vector<2x128x128xf32> to vector<2x128x32xf32>
    %cst_31 = arith.constant dense<0.000000e+00> : vector<2x8x128xf32>
    %55 = tpu.matmul %52, %53, %cst_31 {dimension_numbers = #tpu.dot_dimension_numbers<[2], [2], [1], [1], [0, 0, 0, 1, 1, 1], [0], [0]>} : vector<2x8x32xf32>, vector<2x128x32xf32>, vector<2x8x128xf32> -> vector<2x8x128xf32>
    %56 = arith.addf %33, %55 : vector<2x8x128xf32>
    %57 = vector.shape_cast %26 : vector<1x128xf32> to vector<1x1x128xf32>
    %58 = vector.broadcast %57 : vector<1x1x128xf32> to vector<2x8x128xf32>
    %59 = arith.addf %55, %58 : vector<2x8x128xf32>
    %cst_32 = arith.constant dense<0xFF800000> : vector<2x8xf32>
    %60 = vector.multi_reduction <maximumf>, %59, %cst_32 [2] : vector<2x8x128xf32> to vector<2x8xf32>
    %61 = vector.shape_cast %60 : vector<2x8xf32> to vector<2x8x1xf32>
    %62 = vector.broadcast %61 : vector<2x8x1xf32> to vector<2x8x128xf32>
    %63 = arith.subf %59, %62 : vector<2x8x128xf32>
    %64 = math.exp %63 : vector<2x8x128xf32>
    %cst_33 = arith.constant dense<0.000000e+00> : vector<2x8xf32>
    %65 = vector.multi_reduction <add>, %64, %cst_33 [2] : vector<2x8x128xf32> to vector<2x8xf32>
    %66 = vector.shape_cast %65 : vector<2x8xf32> to vector<2x8x1xf32>
    %67 = tpu.reciprocal %66 : vector<2x8x1xf32> -> vector<2x8x1xf32>
    %68 = vector.broadcast %67 : vector<2x8x1xf32> to vector<2x8x128xf32>
    %69 = arith.mulf %64, %68 : vector<2x8x128xf32>
    %cst_34 = arith.constant dense<0.000000e+00> : vector<2x8x32xf32>
    %70 = tpu.matmul %69, %54, %cst_34 {dimension_numbers = #tpu.dot_dimension_numbers<[2], [1], [1], [2], [0, 0, 0, 1, 1, 2], [0], [0]>} : vector<2x8x128xf32>, vector<2x128x32xf32>, vector<2x8x32xf32> -> vector<2x8x32xf32>
    %71 = vector.shape_cast %70 : vector<2x8x32xf32> to vector<16x32xf32>
    %72 = vector.extract_strided_slice %20 {offsets = [32, 0], sizes = [32, 32], strides = [1, 1]} : vector<128x32xf32> to vector<32x32xf32>
    %cst_35 = arith.constant dense<0.000000e+00> : vector<16x32xf32>
    %73 = tpu.matmul %71, %72, %cst_35 {dimension_numbers = #tpu.dot_dimension_numbers<[1], [0], [0], [1], [0, 0, 1, 1], [], []>} : vector<16x32xf32>, vector<32x32xf32>, vector<16x32xf32> -> vector<16x32xf32>
    %74 = arith.addf %51, %73 : vector<16x32xf32>
    %75 = vector.extract_strided_slice %17 {offsets = [0, 0, 64], sizes = [2, 8, 32], strides = [1, 1, 1]} : vector<2x8x128xf32> to vector<2x8x32xf32>
    %76 = vector.extract_strided_slice %18 {offsets = [0, 0, 64], sizes = [2, 128, 32], strides = [1, 1, 1]} : vector<2x128x128xf32> to vector<2x128x32xf32>
    %77 = vector.extract_strided_slice %19 {offsets = [0, 0, 64], sizes = [2, 128, 32], strides = [1, 1, 1]} : vector<2x128x128xf32> to vector<2x128x32xf32>
    %cst_36 = arith.constant dense<0.000000e+00> : vector<2x8x128xf32>
    %78 = tpu.matmul %75, %76, %cst_36 {dimension_numbers = #tpu.dot_dimension_numbers<[2], [2], [1], [1], [0, 0, 0, 1, 1, 1], [0], [0]>} : vector<2x8x32xf32>, vector<2x128x32xf32>, vector<2x8x128xf32> -> vector<2x8x128xf32>
    %79 = arith.addf %56, %78 : vector<2x8x128xf32>
    %80 = vector.shape_cast %26 : vector<1x128xf32> to vector<1x1x128xf32>
    %81 = vector.broadcast %80 : vector<1x1x128xf32> to vector<2x8x128xf32>
    %82 = arith.addf %78, %81 : vector<2x8x128xf32>
    %cst_37 = arith.constant dense<0xFF800000> : vector<2x8xf32>
    %83 = vector.multi_reduction <maximumf>, %82, %cst_37 [2] : vector<2x8x128xf32> to vector<2x8xf32>
    %84 = vector.shape_cast %83 : vector<2x8xf32> to vector<2x8x1xf32>
    %85 = vector.broadcast %84 : vector<2x8x1xf32> to vector<2x8x128xf32>
    %86 = arith.subf %82, %85 : vector<2x8x128xf32>
    %87 = math.exp %86 : vector<2x8x128xf32>
    %cst_38 = arith.constant dense<0.000000e+00> : vector<2x8xf32>
    %88 = vector.multi_reduction <add>, %87, %cst_38 [2] : vector<2x8x128xf32> to vector<2x8xf32>
    %89 = vector.shape_cast %88 : vector<2x8xf32> to vector<2x8x1xf32>
    %90 = tpu.reciprocal %89 : vector<2x8x1xf32> -> vector<2x8x1xf32>
    %91 = vector.broadcast %90 : vector<2x8x1xf32> to vector<2x8x128xf32>
    %92 = arith.mulf %87, %91 : vector<2x8x128xf32>
    %cst_39 = arith.constant dense<0.000000e+00> : vector<2x8x32xf32>
    %93 = tpu.matmul %92, %77, %cst_39 {dimension_numbers = #tpu.dot_dimension_numbers<[2], [1], [1], [2], [0, 0, 0, 1, 1, 2], [0], [0]>} : vector<2x8x128xf32>, vector<2x128x32xf32>, vector<2x8x32xf32> -> vector<2x8x32xf32>
    %94 = vector.shape_cast %93 : vector<2x8x32xf32> to vector<16x32xf32>
    %95 = vector.extract_strided_slice %20 {offsets = [64, 0], sizes = [32, 32], strides = [1, 1]} : vector<128x32xf32> to vector<32x32xf32>
    %cst_40 = arith.constant dense<0.000000e+00> : vector<16x32xf32>
    %96 = tpu.matmul %94, %95, %cst_40 {dimension_numbers = #tpu.dot_dimension_numbers<[1], [0], [0], [1], [0, 0, 1, 1], [], []>} : vector<16x32xf32>, vector<32x32xf32>, vector<16x32xf32> -> vector<16x32xf32>
    %97 = arith.addf %74, %96 : vector<16x32xf32>
    %98 = vector.extract_strided_slice %17 {offsets = [0, 0, 96], sizes = [2, 8, 32], strides = [1, 1, 1]} : vector<2x8x128xf32> to vector<2x8x32xf32>
    %99 = vector.extract_strided_slice %18 {offsets = [0, 0, 96], sizes = [2, 128, 32], strides = [1, 1, 1]} : vector<2x128x128xf32> to vector<2x128x32xf32>
    %100 = vector.extract_strided_slice %19 {offsets = [0, 0, 96], sizes = [2, 128, 32], strides = [1, 1, 1]} : vector<2x128x128xf32> to vector<2x128x32xf32>
    %cst_41 = arith.constant dense<0.000000e+00> : vector<2x8x128xf32>
    %101 = tpu.matmul %98, %99, %cst_41 {dimension_numbers = #tpu.dot_dimension_numbers<[2], [2], [1], [1], [0, 0, 0, 1, 1, 1], [0], [0]>} : vector<2x8x32xf32>, vector<2x128x32xf32>, vector<2x8x128xf32> -> vector<2x8x128xf32>
    %102 = arith.addf %79, %101 : vector<2x8x128xf32>
    %103 = vector.shape_cast %26 : vector<1x128xf32> to vector<1x1x128xf32>
    %104 = vector.broadcast %103 : vector<1x1x128xf32> to vector<2x8x128xf32>
    %105 = arith.addf %101, %104 : vector<2x8x128xf32>
    %cst_42 = arith.constant dense<0xFF800000> : vector<2x8xf32>
    %106 = vector.multi_reduction <maximumf>, %105, %cst_42 [2] : vector<2x8x128xf32> to vector<2x8xf32>
    %107 = vector.shape_cast %106 : vector<2x8xf32> to vector<2x8x1xf32>
    %108 = vector.broadcast %107 : vector<2x8x1xf32> to vector<2x8x128xf32>
    %109 = arith.subf %105, %108 : vector<2x8x128xf32>
    %110 = math.exp %109 : vector<2x8x128xf32>
    %cst_43 = arith.constant dense<0.000000e+00> : vector<2x8xf32>
    %111 = vector.multi_reduction <add>, %110, %cst_43 [2] : vector<2x8x128xf32> to vector<2x8xf32>
    %112 = vector.shape_cast %111 : vector<2x8xf32> to vector<2x8x1xf32>
    %113 = tpu.reciprocal %112 : vector<2x8x1xf32> -> vector<2x8x1xf32>
    %114 = vector.broadcast %113 : vector<2x8x1xf32> to vector<2x8x128xf32>
    %115 = arith.mulf %110, %114 : vector<2x8x128xf32>
    %cst_44 = arith.constant dense<0.000000e+00> : vector<2x8x32xf32>
    %116 = tpu.matmul %115, %100, %cst_44 {dimension_numbers = #tpu.dot_dimension_numbers<[2], [1], [1], [2], [0, 0, 0, 1, 1, 2], [0], [0]>} : vector<2x8x128xf32>, vector<2x128x32xf32>, vector<2x8x32xf32> -> vector<2x8x32xf32>
    %117 = vector.shape_cast %116 : vector<2x8x32xf32> to vector<16x32xf32>
    %118 = vector.extract_strided_slice %20 {offsets = [96, 0], sizes = [32, 32], strides = [1, 1]} : vector<128x32xf32> to vector<32x32xf32>
    %cst_45 = arith.constant dense<0.000000e+00> : vector<16x32xf32>
    %119 = tpu.matmul %117, %118, %cst_45 {dimension_numbers = #tpu.dot_dimension_numbers<[1], [0], [0], [1], [0, 0, 1, 1], [], []>} : vector<16x32xf32>, vector<32x32xf32>, vector<16x32xf32> -> vector<16x32xf32>
    %120 = arith.addf %97, %119 : vector<16x32xf32>
    %cst_46 = arith.constant 2.500000e-01 : f32
    %121 = vector.broadcast %cst_46 : f32 to vector<2x8x128xf32>
    %122 = arith.mulf %102, %121 : vector<2x8x128xf32>
    %c0_47 = arith.constant 0 : index
    %c0_48 = arith.constant 0 : index
    %c0_49 = arith.constant 0 : index
    %123 = vector.load %arg12[%c0_47, %c0_48, %c0_49] : memref<2x8x128xf32, #tpu.memory_space<vmem>>, vector<2x8x128xf32>
    tpu.vector_store %arg12[%c0_47, %c0_48, %c0_49], %122 {strides = array<i32>} : memref<2x8x128xf32, #tpu.memory_space<vmem>>, vector<2x8x128xf32>,
    %124 = vector.shape_cast %0 : vector<2x8x32xf32> to vector<16x32xf32>
    %125 = arith.addf %124, %120 : vector<16x32xf32>
    %cst_50 = arith.constant dense<0.000000e+00> : vector<16xf32>
    %126 = vector.multi_reduction <add>, %125, %cst_50 [1] : vector<16x32xf32> to vector<16xf32>
    %127 = vector.shape_cast %126 : vector<16xf32> to vector<16x1xf32>
    %cst_51 = arith.constant 3.200000e+01 : f32
    %128 = vector.broadcast %cst_51 : f32 to vector<16x1xf32>
    %129 = arith.divf %127, %128 : vector<16x1xf32>
    %130 = vector.broadcast %129 : vector<16x1xf32> to vector<16x32xf32>
    %131 = arith.subf %125, %130 : vector<16x32xf32>
    %132 = arith.mulf %131, %131 : vector<16x32xf32>
    %cst_52 = arith.constant dense<0.000000e+00> : vector<16xf32>
    %133 = vector.multi_reduction <add>, %132, %cst_52 [1] : vector<16x32xf32> to vector<16xf32>
    %134 = vector.shape_cast %133 : vector<16xf32> to vector<16x1xf32>
    %cst_53 = arith.constant 3.200000e+01 : f32
    %135 = vector.broadcast %cst_53 : f32 to vector<16x1xf32>
    %136 = arith.divf %134, %135 : vector<16x1xf32>
    %137 = vector.broadcast %129 : vector<16x1xf32> to vector<16x32xf32>
    %138 = arith.subf %125, %137 : vector<16x32xf32>
    %cst_54 = arith.constant 9.99999974E-6 : f32
    %139 = vector.broadcast %cst_54 : f32 to vector<16x1xf32>
    %140 = arith.addf %136, %139 : vector<16x1xf32>
    %141 = math.rsqrt %140 : vector<16x1xf32>
    %142 = vector.broadcast %141 : vector<16x1xf32> to vector<16x32xf32>
    %143 = arith.mulf %138, %142 : vector<16x32xf32>
    %c0_55 = arith.constant 0 : index
    %c0_56 = arith.constant 0 : index
    %144 = vector.load %arg9[%c0_55, %c0_56] : memref<1x32xf32, #tpu.memory_space<vmem>>, vector<1x32xf32>
    %145 = vector.broadcast %144 : vector<1x32xf32> to vector<16x32xf32>
    %146 = arith.mulf %143, %145 : vector<16x32xf32>
    %c0_57 = arith.constant 0 : index
    %c0_58 = arith.constant 0 : index
    %147 = vector.load %arg10[%c0_57, %c0_58] : memref<1x32xf32, #tpu.memory_space<vmem>>, vector<1x32xf32>
    %148 = vector.broadcast %147 : vector<1x32xf32> to vector<16x32xf32>
    %149 = arith.addf %146, %148 : vector<16x32xf32>
    %150 = vector.shape_cast %149 : vector<16x32xf32> to vector<2x8x32xf32>
    %c0_59 = arith.constant 0 : index
    %c0_60 = arith.constant 0 : index
    %c0_61 = arith.constant 0 : index
    %151 = vector.load %arg11[%c0_59, %c0_60, %c0_61] : memref<2x8x32xf32, #tpu.memory_space<vmem>>, vector<2x8x32xf32>
    tpu.vector_store %arg11[%c0_59, %c0_60, %c0_61], %150 {strides = array<i32>} : memref<2x8x32xf32, #tpu.memory_space<vmem>>, vector<2x8x32xf32>,
    return
  }
  func.func @transform_0(%arg0: i32) -> (i32, i32, i32) {
    %c0_i32 = arith.constant 0 : i32
    %c0_i32_0 = arith.constant 0 : i32
    %c0_i32_1 = arith.constant 0 : i32
    return %arg0, %c0_i32, %c0_i32_0 : i32, i32, i32
  }
  func.func @transform_1(%arg0: i32) -> (i32, i32, i32) {
    %c0_i32 = arith.constant 0 : i32
    %c0_i32_0 = arith.constant 0 : i32
    %c0_i32_1 = arith.constant 0 : i32
    return %arg0, %c0_i32, %c0_i32_0 : i32, i32, i32
  }
  func.func @transform_2(%arg0: i32) -> (i32, i32, i32) {
    %c0_i32 = arith.constant 0 : i32
    %c0_i32_0 = arith.constant 0 : i32
    %c0_i32_1 = arith.constant 0 : i32
    return %arg0, %c0_i32, %c0_i32_0 : i32, i32, i32
  }
  func.func @transform_3(%arg0: i32) -> (i32, i32, i32) {
    %c0_i32 = arith.constant 0 : i32
    %c0_i32_0 = arith.constant 0 : i32
    %c0_i32_1 = arith.constant 0 : i32
    return %arg0, %c0_i32, %c0_i32_0 : i32, i32, i32
  }
  func.func @transform_4(%arg0: i32) -> (i32, i32) {
    %c0_i32 = arith.constant 0 : i32
    %c0_i32_0 = arith.constant 0 : i32
    %c0_i32_1 = arith.constant 0 : i32
    return %c0_i32, %c0_i32_0 : i32, i32
  }
  func.func @transform_5(%arg0: i32) -> (i32, i32) {
    %c0_i32 = arith.constant 0 : i32
    %c0_i32_0 = arith.constant 0 : i32
    %c0_i32_1 = arith.constant 0 : i32
    return %c0_i32, %c0_i32_0 : i32, i32
  }
  func.func @transform_6(%arg0: i32) -> (i32, i32) {
    %c0_i32 = arith.constant 0 : i32
    %c0_i32_0 = arith.constant 0 : i32
    %c0_i32_1 = arith.constant 0 : i32
    return %c0_i32, %c0_i32_0 : i32, i32
  }
  func.func @transform_7(%arg0: i32) -> (i32, i32) {
    %c0_i32 = arith.constant 0 : i32
    %c0_i32_0 = arith.constant 0 : i32
    %c0_i32_1 = arith.constant 0 : i32
    return %c0_i32, %c0_i32_0 : i32, i32
  }
  func.func @transform_8(%arg0: i32) -> (i32, i32) {
    %c0_i32 = arith.constant 0 : i32
    %c0_i32_0 = arith.constant 0 : i32
    %c0_i32_1 = arith.constant 0 : i32
    return %c0_i32, %c0_i32_0 : i32, i32
  }
  func.func @transform_9(%arg0: i32) -> (i32, i32) {
    %c0_i32 = arith.constant 0 : i32
    %c0_i32_0 = arith.constant 0 : i32
    %c0_i32_1 = arith.constant 0 : i32
    return %c0_i32, %c0_i32_0 : i32, i32
  }
  func.func @transform_10(%arg0: i32) -> (i32, i32, i32) {
    %c0_i32 = arith.constant 0 : i32
    %c0_i32_0 = arith.constant 0 : i32
    %c0_i32_1 = arith.constant 0 : i32
    return %arg0, %c0_i32, %c0_i32_0 : i32, i32, i32
  }
  func.func @transform_11(%arg0: i32) -> (i32, i32, i32) {
    %c0_i32 = arith.constant 0 : i32
    %c0_i32_0 = arith.constant 0 : i32
    %c0_i32_1 = arith.constant 0 : i32
    return %arg0, %c0_i32, %c0_i32_0 : i32, i32, i32
  }
}

</mosaic_0001>

<llo_original>
// kernel: tpu_custom_call.1
$region0: #{tpu_custom_call.1}
  #allocation0 [shape = 'u32[]', space=smem, size = 0x4, offset = 0x4, fixed_abs, tag = 'smem constant byte address 0x4 - core index']
  #allocation1 [shape = 'u32[144,128]{1,0:T(1,128)}', space=vmem, size = 0x12000, scoped, tag = 'internal scratch']
  %s0 = inlined_call_operand.vmem [shape: f32[4,8,32], index: 0, kind: input, shape index: {}]
  %s1 = inlined_call_operand.vmem [shape: f32[4,8,32], index: 1, kind: input, shape index: {}]
  %s2 = inlined_call_operand.vmem [shape: f32[4,128,32], index: 2, kind: input, shape index: {}]
  %s3 = inlined_call_operand.vmem [shape: f32[4,128,32], index: 3, kind: input, shape index: {}]
  %s4 = inlined_call_operand.vmem [shape: f32[32,128], index: 4, kind: input, shape index: {}]
  %s5 = inlined_call_operand.vmem [shape: f32[32,128], index: 5, kind: input, shape index: {}]
  %s6 = inlined_call_operand.vmem [shape: f32[32,128], index: 6, kind: input, shape index: {}]
  %s7 = inlined_call_operand.vmem [shape: f32[128,32], index: 7, kind: input, shape index: {}]
  %s8 = inlined_call_operand.vmem [shape: f32[1,32], index: 8, kind: input, shape index: {}]
  %s9 = inlined_call_operand.vmem [shape: f32[1,32], index: 9, kind: input, shape index: {}]
  %s10 = inlined_call_operand.hbm [shape: f32[4,8,32], index: 10, kind: output, shape index: {0}]
  %s11 = inlined_call_operand.hbm [shape: f32[4,8,128], index: 11, kind: output, shape index: {1}]
  %12 = xla_tuple %s10, %s11
  %s13 = sld [smem:[#allocation0]]
  $region81: #{tpu_custom_call.1} parent=0
    _
  %s15 = ssub.s32 1, %s13
  %s16 = scalar_select 0, %s15, %s13
  $region1: #{tpu_custom_call.1} parent=0
    #allocation2 [shape = 'u8[16384]{0}', space=vmem, size = 0x4000, scoped, tag = 'output window, operand 0']
    #allocation3 [shape = 's32[2]{0}', space=sflag, size = 0x8, scoped, tag = 'scoped memory for tpu_custom_call.1']
    #allocation4 [shape = 'u8[16384]{0}', space=vmem, size = 0x4000, scoped, tag = 'output window, operand 1']
    #allocation5 [shape = 's32[2]{0}', space=sflag, size = 0x8, scoped, tag = 'scoped memory for tpu_custom_call.1']
    %17 = vsyncpa [#allocation3], 0
    %s18 = scalar_lea.sflag [#allocation3], 1
    %19 = vsyncpa %s18, 0
    %20 = vsyncpa [#allocation5], 0
    %s21 = scalar_lea.sflag [#allocation5], 1
    %22 = vsyncpa %s21, 0
    loop: start=0, step=1, limit=4
    $region2: #{tpu_custom_call.1} parent=1 // loop_pre_header
      _
    $region3: #{tpu_custom_call.1} parent=1 // loop_header
      %s24 = sphi 0, %s28
      %p25 = scmp.ge.s32.totalorder %s24, 4
      %s34 = sphi 0, %s36
      %s37 = sphi 0, %s34
      %s38 = sphi 0, %s37
      %s54 = sphi 0, %s38
      %s60 = sphi 0, %s62
      %s63 = sphi 0, %s60
      %s64 = sphi 0, %s63
      %s80 = sphi 0, %s64
      %s86 = sphi 0, %s88
      %s89 = sphi 0, %s86
      %s90 = sphi 0, %s89
      %s106 = sphi 0, %s90
      %s112 = sphi 0, %s114
      %s115 = sphi 0, %s112
      %s116 = sphi 0, %s115
      %s132 = sphi 0, %s116
      %s136 = sphi 0, %s136
      %s138 = sphi 0, %s136
      %s139 = sphi 0, %s138
      %s153 = sphi 0, %s139
      %s157 = sphi 0, %s157
      %s159 = sphi 0, %s157
      %s160 = sphi 0, %s159
      %s174 = sphi 0, %s160
      %s178 = sphi 0, %s178
      %s180 = sphi 0, %s178
      %s181 = sphi 0, %s180
      %s195 = sphi 0, %s181
      %s199 = sphi 0, %s199
      %s201 = sphi 0, %s199
      %s202 = sphi 0, %s201
      %s216 = sphi 0, %s202
      %s220 = sphi 0, %s220
      %s222 = sphi 0, %s220
      %s223 = sphi 0, %s222
      %s237 = sphi 0, %s223
      %s241 = sphi 0, %s241
      %s243 = sphi 0, %s241
      %s244 = sphi 0, %s243
      %s258 = sphi 0, %s244
      %s264 = sphi 0, %s266
      %s267 = sphi 0, %s264
      %s268 = sphi 0, %s267
      %s284 = sphi 0, %s268
      %s290 = sphi 0, %s292
      %s293 = sphi 0, %s290
      %s294 = sphi 0, %s293
      %s310 = sphi 0, %s294
    $region4: #{tpu_custom_call.1} parent=1 // loop_header_branch
      %27 = sbr.rel (%p25) target = $region8
    $region5: #{tpu_custom_call.1} parent=1 // loop_body
      %s29 = ssub.s32 %s24, 1
      %s30 = ssub.s32 %s24, 2
      %s31 = sadd.s32 %s24, 1
      %s32 = ssub.s32 %s24, %s31
      %p33 = scmp.eq.s32.totalorder %s32, 0
      %s35 = sadd.s32 %s34, 1
      %s36 = scalar_select %p33, %s34, %s35
      %p39 = pneg %p33
      %p40 = scmp.eq.s32.totalorder %s24, 1
      %p41 = por %p39, %p40
      %p42 = scmp.ne.s32.totalorder %s34, %s37
      %p43 = scmp.eq.s32.totalorder %s24, 0
      %p44 = por %p42, %p43
      %p45 = scmp.ne.s32.totalorder %s34, %s37
      %p46 = scmp.eq.s32.totalorder %s29, 1
      %p47 = por %p45, %p46
      %p48 = scmp.ne.s32.totalorder %s37, %s38
      %p49 = scmp.eq.s32.totalorder %s29, 0
      %p50 = por %p48, %p49
      %p51 = scmp.ne.s32.totalorder %s37, %s38
      %p52 = scmp.eq.s32.totalorder %s30, 1
      %p53 = por %p51, %p52
      %p55 = scmp.ne.s32.totalorder %s38, %s54
      %p56 = scmp.eq.s32.totalorder %s30, 0
      %p57 = por %p55, %p56
      %s58 = ssub.s32 %s24, %s31
      %p59 = scmp.eq.s32.totalorder %s58, 0
      %s61 = sadd.s32 %s60, 1
      %s62 = scalar_select %p59, %s60, %s61
      %p65 = pneg %p59
      %p66 = scmp.eq.s32.totalorder %s24, 1
      %p67 = por %p65, %p66
      %p68 = scmp.ne.s32.totalorder %s60, %s63
      %p69 = scmp.eq.s32.totalorder %s24, 0
      %p70 = por %p68, %p69
      %p71 = scmp.ne.s32.totalorder %s60, %s63
      %p72 = scmp.eq.s32.totalorder %s29, 1
      %p73 = por %p71, %p72
      %p74 = scmp.ne.s32.totalorder %s63, %s64
      %p75 = scmp.eq.s32.totalorder %s29, 0
      %p76 = por %p74, %p75
      %p77 = scmp.ne.s32.totalorder %s63, %s64
      %p78 = scmp.eq.s32.totalorder %s30, 1
      %p79 = por %p77, %p78
      %p81 = scmp.ne.s32.totalorder %s64, %s80
      %p82 = scmp.eq.s32.totalorder %s30, 0
      %p83 = por %p81, %p82
      %s84 = ssub.s32 %s24, %s31
      %p85 = scmp.eq.s32.totalorder %s84, 0
      %s87 = sadd.s32 %s86, 1
      %s88 = scalar_select %p85, %s86, %s87
      %p91 = pneg %p85
      %p92 = scmp.eq.s32.totalorder %s24, 1
      %p93 = por %p91, %p92
      %p94 = scmp.ne.s32.totalorder %s86, %s89
      %p95 = scmp.eq.s32.totalorder %s24, 0
      %p96 = por %p94, %p95
      %p97 = scmp.ne.s32.totalorder %s86, %s89
      %p98 = scmp.eq.s32.totalorder %s29, 1
      %p99 = por %p97, %p98
      %p100 = scmp.ne.s32.totalorder %s89, %s90
      %p101 = scmp.eq.s32.totalorder %s29, 0
      %p102 = por %p100, %p101
      %p103 = scmp.ne.s32.totalorder %s89, %s90
      %p104 = scmp.eq.s32.totalorder %s30, 1
      %p105 = por %p103, %p104
      %p107 = scmp.ne.s32.totalorder %s90, %s106
      %p108 = scmp.eq.s32.totalorder %s30, 0
      %p109 = por %p107, %p108
      %s110 = ssub.s32 %s24, %s31
      %p111 = scmp.eq.s32.totalorder %s110, 0
      %s113 = sadd.s32 %s112, 1
      %s114 = scalar_select %p111, %s112, %s113
      %p117 = pneg %p111
      %p118 = scmp.eq.s32.totalorder %s24, 1
      %p119 = por %p117, %p118
      %p120 = scmp.ne.s32.totalorder %s112, %s115
      %p121 = scmp.eq.s32.totalorder %s24, 0
      %p122 = por %p120, %p121
      %p123 = scmp.ne.s32.totalorder %s112, %s115
      %p124 = scmp.eq.s32.totalorder %s29, 1
      %p125 = por %p123, %p124
      %p126 = scmp.ne.s32.totalorder %s115, %s116
      %p127 = scmp.eq.s32.totalorder %s29, 0
      %p128 = por %p126, %p127
      %p129 = scmp.ne.s32.totalorder %s115, %s116
      %p130 = scmp.eq.s32.totalorder %s30, 1
      %p131 = por %p129, %p130
      %p133 = scmp.ne.s32.totalorder %s116, %s132
      %p134 = scmp.eq.s32.totalorder %s30, 0
      %p135 = por %p133, %p134
      %s137 = sadd.s32 %s136, 1
      %p140 = scmp.eq.s32.totalorder %s24, 1
      %p141 = scmp.ne.s32.totalorder %s136, %s138
      %p142 = scmp.eq.s32.totalorder %s24, 0
      %p143 = por %p141, %p142
      %p144 = scmp.ne.s32.totalorder %s136, %s138
      %p145 = scmp.eq.s32.totalorder %s29, 1
      %p146 = por %p144, %p145
      %p147 = scmp.ne.s32.totalorder %s138, %s139
      %p148 = scmp.eq.s32.totalorder %s29, 0
      %p149 = por %p147, %p148
      %p150 = scmp.ne.s32.totalorder %s138, %s139
      %p151 = scmp.eq.s32.totalorder %s30, 1
      %p152 = por %p150, %p151
      %p154 = scmp.ne.s32.totalorder %s139, %s153
      %p155 = scmp.eq.s32.totalorder %s30, 0
      %p156 = por %p154, %p155
      %s158 = sadd.s32 %s157, 1
      %p161 = scmp.eq.s32.totalorder %s24, 1
      %p162 = scmp.ne.s32.totalorder %s157, %s159
      %p163 = scmp.eq.s32.totalorder %s24, 0
      %p164 = por %p162, %p163
      %p165 = scmp.ne.s32.totalorder %s157, %s159
      %p166 = scmp.eq.s32.totalorder %s29, 1
      %p167 = por %p165, %p166
      %p168 = scmp.ne.s32.totalorder %s159, %s160
      %p169 = scmp.eq.s32.totalorder %s29, 0
      %p170 = por %p168, %p169
      %p171 = scmp.ne.s32.totalorder %s159, %s160
      %p172 = scmp.eq.s32.totalorder %s30, 1
      %p173 = por %p171, %p172
      %p175 = scmp.ne.s32.totalorder %s160, %s174
      %p176 = scmp.eq.s32.totalorder %s30, 0
      %p177 = por %p175, %p176
      %s179 = sadd.s32 %s178, 1
      %p182 = scmp.eq.s32.totalorder %s24, 1
      %p183 = scmp.ne.s32.totalorder %s178, %s180
      %p184 = scmp.eq.s32.totalorder %s24, 0
      %p185 = por %p183, %p184
      %p186 = scmp.ne.s32.totalorder %s178, %s180
      %p187 = scmp.eq.s32.totalorder %s29, 1
      %p188 = por %p186, %p187
      %p189 = scmp.ne.s32.totalorder %s180, %s181
      %p190 = scmp.eq.s32.totalorder %s29, 0
      %p191 = por %p189, %p190
      %p192 = scmp.ne.s32.totalorder %s180, %s181
      %p193 = scmp.eq.s32.totalorder %s30, 1
      %p194 = por %p192, %p193
      %p196 = scmp.ne.s32.totalorder %s181, %s195
      %p197 = scmp.eq.s32.totalorder %s30, 0
      %p198 = por %p196, %p197
      %s200 = sadd.s32 %s199, 1
      %p203 = scmp.eq.s32.totalorder %s24, 1
      %p204 = scmp.ne.s32.totalorder %s199, %s201
      %p205 = scmp.eq.s32.totalorder %s24, 0
      %p206 = por %p204, %p205
      %p207 = scmp.ne.s32.totalorder %s199, %s201
      %p208 = scmp.eq.s32.totalorder %s29, 1
      %p209 = por %p207, %p208
      %p210 = scmp.ne.s32.totalorder %s201, %s202
      %p211 = scmp.eq.s32.totalorder %s29, 0
      %p212 = por %p210, %p211
      %p213 = scmp.ne.s32.totalorder %s201, %s202
      %p214 = scmp.eq.s32.totalorder %s30, 1
      %p215 = por %p213, %p214
      %p217 = scmp.ne.s32.totalorder %s202, %s216
      %p218 = scmp.eq.s32.totalorder %s30, 0
      %p219 = por %p217, %p218
      %s221 = sadd.s32 %s220, 1
      %p224 = scmp.eq.s32.totalorder %s24, 1
      %p225 = scmp.ne.s32.totalorder %s220, %s222
      %p226 = scmp.eq.s32.totalorder %s24, 0
      %p227 = por %p225, %p226
      %p228 = scmp.ne.s32.totalorder %s220, %s222
      %p229 = scmp.eq.s32.totalorder %s29, 1
      %p230 = por %p228, %p229
      %p231 = scmp.ne.s32.totalorder %s222, %s223
      %p232 = scmp.eq.s32.totalorder %s29, 0
      %p233 = por %p231, %p232
      %p234 = scmp.ne.s32.totalorder %s222, %s223
      %p235 = scmp.eq.s32.totalorder %s30, 1
      %p236 = por %p234, %p235
      %p238 = scmp.ne.s32.totalorder %s223, %s237
      %p239 = scmp.eq.s32.totalorder %s30, 0
      %p240 = por %p238, %p239
      %s242 = sadd.s32 %s241, 1
      %p245 = scmp.eq.s32.totalorder %s24, 1
      %p246 = scmp.ne.s32.totalorder %s241, %s243
      %p247 = scmp.eq.s32.totalorder %s24, 0
      %p248 = por %p246, %p247
      %p249 = scmp.ne.s32.totalorder %s241, %s243
      %p250 = scmp.eq.s32.totalorder %s29, 1
      %p251 = por %p249, %p250
      %p252 = scmp.ne.s32.totalorder %s243, %s244
      %p253 = scmp.eq.s32.totalorder %s29, 0
      %p254 = por %p252, %p253
      %p255 = scmp.ne.s32.totalorder %s243, %s244
      %p256 = scmp.eq.s32.totalorder %s30, 1
      %p257 = por %p255, %p256
      %p259 = scmp.ne.s32.totalorder %s244, %s258
      %p260 = scmp.eq.s32.totalorder %s30, 0
      %p261 = por %p259, %p260
      %s262 = ssub.s32 %s24, %s31
      %p263 = scmp.eq.s32.totalorder %s262, 0
      %s265 = sadd.s32 %s264, 1
      %s266 = scalar_select %p263, %s264, %s265
      %p269 = pneg %p263
      %p270 = scmp.eq.s32.totalorder %s24, 1
      %p271 = por %p269, %p270
      %p272 = scmp.ne.s32.totalorder %s264, %s267
      %p273 = scmp.eq.s32.totalorder %s24, 0
      %p274 = por %p272, %p273
      %p275 = scmp.ne.s32.totalorder %s264, %s267
      %p276 = scmp.eq.s32.totalorder %s29, 1
      %p277 = por %p275, %p276
      %p278 = scmp.ne.s32.totalorder %s267, %s268
      %p279 = scmp.eq.s32.totalorder %s29, 0
      %p280 = por %p278, %p279
      %p281 = scmp.ne.s32.totalorder %s267, %s268
      %p282 = scmp.eq.s32.totalorder %s30, 1
      %p283 = por %p281, %p282
      %p285 = scmp.ne.s32.totalorder %s268, %s284
      %p286 = scmp.eq.s32.totalorder %s30, 0
      %p287 = por %p285, %p286
      %s288 = ssub.s32 %s24, %s31
      %p289 = scmp.eq.s32.totalorder %s288, 0
      %s291 = sadd.s32 %s290, 1
      %s292 = scalar_select %p289, %s290, %s291
      %p295 = pneg %p289
      %p296 = scmp.eq.s32.totalorder %s24, 1
      %p297 = por %p295, %p296
      %p298 = scmp.ne.s32.totalorder %s290, %s293
      %p299 = scmp.eq.s32.totalorder %s24, 0
      %p300 = por %p298, %p299
      %p301 = scmp.ne.s32.totalorder %s290, %s293
      %p302 = scmp.eq.s32.totalorder %s29, 1
      %p303 = por %p301, %p302
      %p304 = scmp.ne.s32.totalorder %s293, %s294
      %p305 = scmp.eq.s32.totalorder %s29, 0
      %p306 = por %p304, %p305
      %p307 = scmp.ne.s32.totalorder %s293, %s294
      %p308 = scmp.eq.s32.totalorder %s30, 1
      %p309 = por %p307, %p308
      %p311 = scmp.ne.s32.totalorder %s294, %s310
      %p312 = scmp.eq.s32.totalorder %s30, 0
      %p313 = por %p311, %p312
      %p314 = scmp.le.s32.totalorder 1, %s24
      %p315 = scmp.lt.s32.totalorder %s24, 3
      %p316 = pnand %p314, %p315
      %p317 = pneg %p316
      // Predicated region
      $region9: #{tpu_custom_call.1} parent=5 // pred_check
        _
      $region10: #{tpu_custom_call.1} parent=5 // pred_check_branch
        %319 = sbr.rel (%p316) target = $region12
      $region11: #{tpu_custom_call.1} parent=5 // pred_region
        %s320 = ssub.s32 %s24, 1
        // Predicated region
        $region13: #{tpu_custom_call.1} parent=11 // pred_check
          %p321 = pneg %p149
        $region14: #{tpu_custom_call.1} parent=11 // pred_check_branch
          %323 = sbr.rel (%p321) target = $region16
        $region15: #{tpu_custom_call.1} parent=11 // pred_region
          _
        $region16: #{tpu_custom_call.1} parent=11 // pred_fallthru
          _
        // Predicated region
        $region17: #{tpu_custom_call.1} parent=11 // pred_check
          %p324 = pneg %p170
        $region18: #{tpu_custom_call.1} parent=11 // pred_check_branch
          %326 = sbr.rel (%p324) target = $region20
        $region19: #{tpu_custom_call.1} parent=11 // pred_region
          _
        $region20: #{tpu_custom_call.1} parent=11 // pred_fallthru
          _
        // Predicated region
        $region21: #{tpu_custom_call.1} parent=11 // pred_check
          %p327 = pneg %p191
        $region22: #{tpu_custom_call.1} parent=11 // pred_check_branch
          %329 = sbr.rel (%p327) target = $region24
        $region23: #{tpu_custom_call.1} parent=11 // pred_region
          _
        $region24: #{tpu_custom_call.1} parent=11 // pred_fallthru
          _
        // Predicated region
        $region25: #{tpu_custom_call.1} parent=11 // pred_check
          %p330 = pneg %p212
        $region26: #{tpu_custom_call.1} parent=11 // pred_check_branch
          %332 = sbr.rel (%p330) target = $region28
        $region27: #{tpu_custom_call.1} parent=11 // pred_region
          _
        $region28: #{tpu_custom_call.1} parent=11 // pred_fallthru
          _
        // Predicated region
        $region29: #{tpu_custom_call.1} parent=11 // pred_check
          %p333 = pneg %p233
        $region30: #{tpu_custom_call.1} parent=11 // pred_check_branch
          %335 = sbr.rel (%p333) target = $region32
        $region31: #{tpu_custom_call.1} parent=11 // pred_region
          _
        $region32: #{tpu_custom_call.1} parent=11 // pred_fallthru
          _
        // Predicated region
        $region33: #{tpu_custom_call.1} parent=11 // pred_check
          %p336 = pneg %p254
        $region34: #{tpu_custom_call.1} parent=11 // pred_check_branch
          %338 = sbr.rel (%p336) target = $region36
        $region35: #{tpu_custom_call.1} parent=11 // pred_region
          _
        $region36: #{tpu_custom_call.1} parent=11 // pred_fallthru
          _
      $region12: #{tpu_custom_call.1} parent=5 // pred_fallthru
        _
      %p339 = scmp.lt.s32.totalorder %s24, 2
      // Predicated region
      $region37: #{tpu_custom_call.1} parent=5 // pred_check
        %p340 = pneg %p339
      $region38: #{tpu_custom_call.1} parent=5 // pred_check_branch
        %342 = sbr.rel (%p340) target = $region40
      $region39: #{tpu_custom_call.1} parent=5 // pred_region
        // Predicated region
        $region41: #{tpu_custom_call.1} parent=39 // pred_check
          %p343 = pneg %p44
        $region42: #{tpu_custom_call.1} parent=39 // pred_check_branch
          %345 = sbr.rel (%p343) target = $region44
        $region43: #{tpu_custom_call.1} parent=39 // pred_region
          %s346 = smul.u32 2, %s24
          %p347 = scmp.lt.s32.totalorder %s346, 3
          %s348 = scalar_select %p347, %s346, 3
          %s349 = smul.addr %s348, 8
          %s350 = scalar_lea.vmem %s0, %s349
          %s351 = smul.u32 2, %s24
        $region44: #{tpu_custom_call.1} parent=39 // pred_fallthru
          _
        // Predicated region
        $region45: #{tpu_custom_call.1} parent=39 // pred_check
          %p352 = pneg %p70
        $region46: #{tpu_custom_call.1} parent=39 // pred_check_branch
          %354 = sbr.rel (%p352) target = $region48
        $region47: #{tpu_custom_call.1} parent=39 // pred_region
          %s355 = smul.u32 2, %s24
          %p356 = scmp.lt.s32.totalorder %s355, 3
          %s357 = scalar_select %p356, %s355, 3
          %s358 = smul.addr %s357, 8
          %s359 = scalar_lea.vmem %s1, %s358
          %s360 = smul.u32 2, %s24
        $region48: #{tpu_custom_call.1} parent=39 // pred_fallthru
          _
        // Predicated region
        $region49: #{tpu_custom_call.1} parent=39 // pred_check
          %p361 = pneg %p96
        $region50: #{tpu_custom_call.1} parent=39 // pred_check_branch
          %363 = sbr.rel (%p361) target = $region52
        $region51: #{tpu_custom_call.1} parent=39 // pred_region
          %s364 = smul.u32 2, %s24
          %p365 = scmp.lt.s32.totalorder %s364, 3
          %s366 = scalar_select %p365, %s364, 3
          %s367 = smul.addr %s366, 16
          %s368 = smul.addr %s367, 8
          %s369 = scalar_lea.vmem %s2, %s368
          %s370 = smul.u32 2, %s24
        $region52: #{tpu_custom_call.1} parent=39 // pred_fallthru
          _
        // Predicated region
        $region53: #{tpu_custom_call.1} parent=39 // pred_check
          %p371 = pneg %p122
        $region54: #{tpu_custom_call.1} parent=39 // pred_check_branch
          %373 = sbr.rel (%p371) target = $region56
        $region55: #{tpu_custom_call.1} parent=39 // pred_region
          %s374 = smul.u32 2, %s24
          %p375 = scmp.lt.s32.totalorder %s374, 3
          %s376 = scalar_select %p375, %s374, 3
          %s377 = smul.addr %s376, 16
          %s378 = smul.addr %s377, 8
          %s379 = scalar_lea.vmem %s3, %s378
          %s380 = smul.u32 2, %s24
        $region56: #{tpu_custom_call.1} parent=39 // pred_fallthru
          _
      $region40: #{tpu_custom_call.1} parent=5 // pred_fallthru
        _
      %p381 = scmp.le.s32.totalorder 1, %s24
      %p382 = scmp.lt.s32.totalorder %s24, 3
      %p383 = pnand %p381, %p382
      %p384 = pneg %p383
      // Predicated region
      $region57: #{tpu_custom_call.1} parent=5 // pred_check
        _
      $region58: #{tpu_custom_call.1} parent=5 // pred_check_branch
        %386 = sbr.rel (%p383) target = $region60
      $region59: #{tpu_custom_call.1} parent=5 // pred_region
        %s387 = ssub.s32 %s24, 1
        %s388 = smul.u32 2, %s29
        %p389 = scmp.lt.s32.totalorder %s388, 3
        %s390 = scalar_select %p389, %s388, 3
        %s391 = smul.addr %s390, 8
        %s392 = scalar_lea.vmem %s0, %s391
        %p393 = pneg %p50
        %p394 = pneg %p47
        %s395 = smul.u32 2, %s29
        %p396 = scmp.lt.s32.totalorder %s395, 3
        %s397 = scalar_select %p396, %s395, 3
        %s398 = smul.addr %s397, 8
        %s399 = scalar_lea.vmem %s1, %s398
        %p400 = pneg %p76
        %p401 = pneg %p73
        %s402 = smul.u32 2, %s29
        %p403 = scmp.lt.s32.totalorder %s402, 3
        %s404 = scalar_select %p403, %s402, 3
        %s405 = smul.addr %s404, 16
        %s406 = smul.addr %s405, 8
        %s407 = scalar_lea.vmem %s2, %s406
        %p408 = pneg %p102
        %p409 = pneg %p99
        %s410 = smul.u32 2, %s29
        %p411 = scmp.lt.s32.totalorder %s410, 3
        %s412 = scalar_select %p411, %s410, 3
        %s413 = smul.addr %s412, 16
        %s414 = smul.addr %s413, 8
        %s415 = scalar_lea.vmem %s3, %s414
        %p416 = pneg %p128
        %p417 = pneg %p125
        %p418 = pneg %p149
        %p419 = pneg %p146
        %p420 = pneg %p170
        %p421 = pneg %p167
        %p422 = pneg %p191
        %p423 = pneg %p188
        %p424 = pneg %p212
        %p425 = pneg %p209
        %p426 = pneg %p233
        %p427 = pneg %p230
        %p428 = pneg %p254
        %p429 = pneg %p251
        %p430 = pneg %p280
        %p431 = pneg %p277
        %s432 = sand.u32 %s267, 1
        %s433 = scalar_lea.sflag [#allocation3], %s432
        %s434 = sand.u32 %s267, 1
        %s435 = smul.addr %s434, 16
        %s436 = scalar_lea.vmem [#allocation2], %s435
        %p437 = pneg %p306
        %p438 = pneg %p303
        %s439 = sand.u32 %s293, 1
        %s440 = scalar_lea.sflag [#allocation5], %s439
        %s441 = sand.u32 %s293, 1
        %s442 = smul.addr %s441, 16
        %s443 = scalar_lea.vmem [#allocation4], %s442
        %s444 = smul.u32 2, %s29
        %p445 = scmp.lt.s32.totalorder %s444, 3
        %s446 = scalar_select %p445, %s444, 3
        %s447 = smul.addr %s446, 8
        %s448 = scalar_lea.vmem %s0, %s447
        %s449 = smul.u32 2, %s29
        %s450 = smul.u32 2, %s29
        %p451 = scmp.lt.s32.totalorder %s450, 3
        %s452 = scalar_select %p451, %s450, 3
        %s453 = smul.addr %s452, 8
        %s454 = scalar_lea.vmem %s1, %s453
        %s455 = smul.u32 2, %s29
        %s456 = smul.u32 2, %s29
        %p457 = scmp.lt.s32.totalorder %s456, 3
        %s458 = scalar_select %p457, %s456, 3
        %s459 = smul.addr %s458, 16
        %s460 = smul.addr %s459, 8
        %s461 = scalar_lea.vmem %s2, %s460
        %s462 = smul.u32 2, %s29
        %s463 = smul.u32 2, %s29
        %p464 = scmp.lt.s32.totalorder %s463, 3
        %s465 = scalar_select %p464, %s463, 3
        %s466 = smul.addr %s465, 16
        %s467 = smul.addr %s466, 8
        %s468 = scalar_lea.vmem %s3, %s467
        %s469 = smul.u32 2, %s29
        %s470 = smul.u32 2, %s29
        %s471 = smul.u32 2, %s29
        %v472 = vld [vmem:[%s448] sm:$0xff]
        %v473 = vld [vmem:[%s448 + $0x8] sm:$0xff]
        %v474 = vld [vmem:[%s454] sm:$0xff]
        %v475 = vld [vmem:[%s454 + $0x8] sm:$0xff]
        %v476 = vadd.f32 %v472, %v474
        %v477 = vadd.f32 %v473, %v475
        %v478 = vld [vmem:[%s461] sm:$0xff]
        %v479 = vld [vmem:[%s461 + $0x8] sm:$0xff]
        %v480 = vld [vmem:[%s461 + $0x10] sm:$0xff]
        %v481 = vld [vmem:[%s461 + $0x18] sm:$0xff]
        %v482 = vld [vmem:[%s461 + $0x20] sm:$0xff]
        %v483 = vld [vmem:[%s461 + $0x28] sm:$0xff]
        %v484 = vld [vmem:[%s461 + $0x30] sm:$0xff]
        %v485 = vld [vmem:[%s461 + $0x38] sm:$0xff]
        %v486 = vld [vmem:[%s461 + $0x40] sm:$0xff]
        %v487 = vld [vmem:[%s461 + $0x48] sm:$0xff]
        %v488 = vld [vmem:[%s461 + $0x50] sm:$0xff]
        %v489 = vld [vmem:[%s461 + $0x58] sm:$0xff]
        %v490 = vld [vmem:[%s461 + $0x60] sm:$0xff]
        %v491 = vld [vmem:[%s461 + $0x68] sm:$0xff]
        %v492 = vld [vmem:[%s461 + $0x70] sm:$0xff]
        %v493 = vld [vmem:[%s461 + $0x78] sm:$0xff]
        %v494 = vld [vmem:[%s461 + $0x80] sm:$0xff]
        %v495 = vld [vmem:[%s461 + $0x88] sm:$0xff]
        %v496 = vld [vmem:[%s461 + $0x90] sm:$0xff]
        %v497 = vld [vmem:[%s461 + $0x98] sm:$0xff]
        %v498 = vld [vmem:[%s461 + $0xa0] sm:$0xff]
        %v499 = vld [vmem:[%s461 + $0xa8] sm:$0xff]
        %v500 = vld [vmem:[%s461 + $0xb0] sm:$0xff]
        %v501 = vld [vmem:[%s461 + $0xb8] sm:$0xff]
        %v502 = vld [vmem:[%s461 + $0xc0] sm:$0xff]
        %v503 = vld [vmem:[%s461 + $0xc8] sm:$0xff]
        %v504 = vld [vmem:[%s461 + $0xd0] sm:$0xff]
        %v505 = vld [vmem:[%s461 + $0xd8] sm:$0xff]
        %v506 = vld [vmem:[%s461 + $0xe0] sm:$0xff]
        %v507 = vld [vmem:[%s461 + $0xe8] sm:$0xff]
        %v508 = vld [vmem:[%s461 + $0xf0] sm:$0xff]
        %v509 = vld [vmem:[%s461 + $0xf8] sm:$0xff]
        %v510 = vld [vmem:[%s468] sm:$0xff]
        %v511 = vld [vmem:[%s468 + $0x8] sm:$0xff]
        %v512 = vld [vmem:[%s468 + $0x10] sm:$0xff]
        %v513 = vld [vmem:[%s468 + $0x18] sm:$0xff]
        %v514 = vld [vmem:[%s468 + $0x20] sm:$0xff]
        %v515 = vld [vmem:[%s468 + $0x28] sm:$0xff]
        %v516 = vld [vmem:[%s468 + $0x30] sm:$0xff]
        %v517 = vld [vmem:[%s468 + $0x38] sm:$0xff]
        %v518 = vld [vmem:[%s468 + $0x40] sm:$0xff]
        %v519 = vld [vmem:[%s468 + $0x48] sm:$0xff]
        %v520 = vld [vmem:[%s468 + $0x50] sm:$0xff]
        %v521 = vld [vmem:[%s468 + $0x58] sm:$0xff]
        %v522 = vld [vmem:[%s468 + $0x60] sm:$0xff]
        %v523 = vld [vmem:[%s468 + $0x68] sm:$0xff]
        %v524 = vld [vmem:[%s468 + $0x70] sm:$0xff]
        %v525 = vld [vmem:[%s468 + $0x78] sm:$0xff]
        %v526 = vld [vmem:[%s468 + $0x80] sm:$0xff]
        %v527 = vld [vmem:[%s468 + $0x88] sm:$0xff]
        %v528 = vld [vmem:[%s468 + $0x90] sm:$0xff]
        %v529 = vld [vmem:[%s468 + $0x98] sm:$0xff]
        %v530 = vld [vmem:[%s468 + $0xa0] sm:$0xff]
        %v531 = vld [vmem:[%s468 + $0xa8] sm:$0xff]
        %v532 = vld [vmem:[%s468 + $0xb0] sm:$0xff]
        %v533 = vld [vmem:[%s468 + $0xb8] sm:$0xff]
        %v534 = vld [vmem:[%s468 + $0xc0] sm:$0xff]
        %v535 = vld [vmem:[%s468 + $0xc8] sm:$0xff]
        %v536 = vld [vmem:[%s468 + $0xd0] sm:$0xff]
        %v537 = vld [vmem:[%s468 + $0xd8] sm:$0xff]
        %v538 = vld [vmem:[%s468 + $0xe0] sm:$0xff]
        %v539 = vld [vmem:[%s468 + $0xe8] sm:$0xff]
        %v540 = vld [vmem:[%s468 + $0xf0] sm:$0xff]
        %v541 = vld [vmem:[%s468 + $0xf8] sm:$0xff]
        %v542 = vadd.f32 %v478, %v510
        %v543 = vadd.f32 %v479, %v511
        %v544 = vadd.f32 %v480, %v512
        %v545 = vadd.f32 %v481, %v513
        %v546 = vadd.f32 %v482, %v514
        %v547 = vadd.f32 %v483, %v515
        %v548 = vadd.f32 %v484, %v516
        %v549 = vadd.f32 %v485, %v517
        %v550 = vadd.f32 %v486, %v518
        %v551 = vadd.f32 %v487, %v519
        %v552 = vadd.f32 %v488, %v520
        %v553 = vadd.f32 %v489, %v521
        %v554 = vadd.f32 %v490, %v522
        %v555 = vadd.f32 %v491, %v523
        %v556 = vadd.f32 %v492, %v524
        %v557 = vadd.f32 %v493, %v525
        %v558 = vadd.f32 %v494, %v526
        %v559 = vadd.f32 %v495, %v527
        %v560 = vadd.f32 %v496, %v528
        %v561 = vadd.f32 %v497, %v529
        %v562 = vadd.f32 %v498, %v530
        %v563 = vadd.f32 %v499, %v531
        %v564 = vadd.f32 %v500, %v532
        %v565 = vadd.f32 %v501, %v533
        %v566 = vadd.f32 %v502, %v534
        %v567 = vadd.f32 %v503, %v535
        %v568 = vadd.f32 %v504, %v536
        %v569 = vadd.f32 %v505, %v537
        %v570 = vadd.f32 %v506, %v538
        %v571 = vadd.f32 %v507, %v539
        %v572 = vadd.f32 %v508, %v540
        %v573 = vadd.f32 %v509, %v541
        %v574 = vld [vmem:[%s4] sm:$0xff]
        %v575 = vld [vmem:[%s4 + $0x8] sm:$0xff]
        %v576 = vld [vmem:[%s4 + $0x10] sm:$0xff]
        %v577 = vld [vmem:[%s4 + $0x18] sm:$0xff]
        %vm578 = vcmask 261120
        %v580 = vsel %vm578, %v476, 0
        %v583 = vsel %vm578, %v477, 0
        %585 = vmatprep.subr.mxu0 0.0
        %586 = vmatpush1.msra.mxu0 %v574
        %587 = vmatprep.subr.mxu0 0.0
        %588 = vmatpush1.msra.mxu0 %v575
        %589 = vmatprep.subr.mxu0 0.0
        %590 = vmatpush1.msra.mxu0 %v576
        %591 = vmatprep.subr.mxu0 0.0
        %592 = vmatpush1.msra.mxu0 %v577
        %593 = vmatprep.subr.mxu0 0.0
        %594 = vmatpush1.msra.mxu0 0.0
        %595 = vmatprep.subr.mxu0 0.0
        %596 = vmatpush1.msra.mxu0 0.0
        %597 = vmatprep.subr.mxu0 0.0
        %598 = vmatpush1.msra.mxu0 0.0
        %599 = vmatprep.subr.mxu0 0.0
        %600 = vmatpush1.msra.mxu0 0.0
        %601 = vmatprep.subr.mxu0 0.0
        %602 = vmatpush1.msra.mxu0 0.0
        %603 = vmatprep.subr.mxu0 0.0
        %604 = vmatpush1.msra.mxu0 0.0
        %605 = vmatprep.subr.mxu0 0.0
        %606 = vmatpush1.msra.mxu0 0.0
        %607 = vmatprep.subr.mxu0 0.0
        %608 = vmatpush1.msra.mxu0 0.0
        %609 = vmatprep.subr.mxu0 0.0
        %610 = vmatpush1.msra.mxu0 0.0
        %611 = vmatprep.subr.mxu0 0.0
        %612 = vmatpush1.msra.mxu0 0.0
        %613 = vmatprep.subr.mxu0 0.0
        %614 = vmatpush1.msra.mxu0 0.0
        %615 = vmatprep.subr.mxu0 0.0
        %616 = vmatpush1.msra.mxu0 0.0
        %617 = vmatprep.subr.mxu0 0.0
        %618 = vmatpush1.msra.mxu0 0.0
        %619 = vmatprep.subr.mxu0 0.0
        %620 = vmatpush1.msra.mxu0 0.0
        %621 = vmatprep.subr.mxu0 0.0
        %622 = vmatpush1.msra.mxu0 0.0
        %623 = vmatprep.subr.mxu0 0.0
        %624 = vmatpush1.msra.mxu0 0.0
        %625 = vmatprep.subr.mxu0 0.0
        %626 = vmatpush1.msra.mxu0 0.0
        %627 = vmatprep.subr.mxu0 0.0
        %628 = vmatpush1.msra.mxu0 0.0
        %629 = vmatprep.subr.mxu0 0.0
        %630 = vmatpush1.msra.mxu0 0.0
        %631 = vmatprep.subr.mxu0 0.0
        %632 = vmatpush1.msra.mxu0 0.0
        %633 = vmatprep.subr.mxu0 0.0
        %634 = vmatpush1.msra.mxu0 0.0
        %635 = vmatprep.subr.mxu0 0.0
        %636 = vmatpush1.msra.mxu0 0.0
        %637 = vmatprep.subr.mxu0 0.0
        %638 = vmatpush1.msra.mxu0 0.0
        %639 = vmatprep.subr.mxu0 0.0
        %640 = vmatpush1.msra.mxu0 0.0
        %641 = vmatprep.subr.mxu0 0.0
        %642 = vmatpush1.msra.mxu0 0.0
        %643 = vmatprep.subr.mxu0 0.0
        %644 = vmatpush1.msra.mxu0 0.0
        %645 = vmatprep.subr.mxu0 0.0
        %646 = vmatpush1.msra.mxu0 0.0
        %647 = vmatprep.subr.mxu0 0.0
        %648 = vmatpush1.msra.mxu0 0.0
        %649 = vmatprep.mubr.f32.mxu0 0.0
        %650 = vmatmul.mubr.f32.gmra.mrb[0].mxu0 %v580
        %v651 = vpop.f32.mrb[0].mxu0
        %v652 = vadd.f32 0.0, %v651
        %v653 = vpop.f32.mrb[0].mxu0
        %654 = vmatprep.mubr.f32.mxu0 0.0
        %655 = vmatmul.mubr.f32.gmra.mrb[0].mxu0 %v583
        %v656 = vpop.f32.mrb[0].mxu0
        %v657 = vadd.f32 0.0, %v656
        %v658 = vpop.f32.mrb[0].mxu0
        %659 = vdwg.mxu0
        %v660 = vmul.f32 %v652, 0.17677669
        %v661 = vmul.f32 %v657, 0.17677669
        %v662 = vld [vmem:[%s5] sm:$0xff]
        %v663 = vld [vmem:[%s5 + $0x8] sm:$0xff]
        %v664 = vld [vmem:[%s5 + $0x10] sm:$0xff]
        %v665 = vld [vmem:[%s5 + $0x18] sm:$0xff]
        %v667 = vsel %vm578, %v542, 0
        %v670 = vsel %vm578, %v543, 0
        %v673 = vsel %vm578, %v544, 0
        %v676 = vsel %vm578, %v545, 0
        %v679 = vsel %vm578, %v546, 0
        %v682 = vsel %vm578, %v547, 0
        %v685 = vsel %vm578, %v548, 0
        %v688 = vsel %vm578, %v549, 0
        %v691 = vsel %vm578, %v550, 0
        %v694 = vsel %vm578, %v551, 0
        %v697 = vsel %vm578, %v552, 0
        %v700 = vsel %vm578, %v553, 0
        %v703 = vsel %vm578, %v554, 0
        %v706 = vsel %vm578, %v555, 0
        %v709 = vsel %vm578, %v556, 0
        %v712 = vsel %vm578, %v557, 0
        %v715 = vsel %vm578, %v558, 0
        %v718 = vsel %vm578, %v559, 0
        %v721 = vsel %vm578, %v560, 0
        %v724 = vsel %vm578, %v561, 0
        %v727 = vsel %vm578, %v562, 0
        %v730 = vsel %vm578, %v563, 0
        %v733 = vsel %vm578, %v564, 0
        %v736 = vsel %vm578, %v565, 0
        %v739 = vsel %vm578, %v566, 0
        %v742 = vsel %vm578, %v567, 0
        %v745 = vsel %vm578, %v568, 0
        %v748 = vsel %vm578, %v569, 0
        %v751 = vsel %vm578, %v570, 0
        %v754 = vsel %vm578, %v571, 0
        %v757 = vsel %vm578, %v572, 0
        %v760 = vsel %vm578, %v573, 0
        %762 = vmatprep.subr.mxu0 0.0
        %763 = vmatpush1.msra.mxu0 %v662
        %764 = vmatprep.subr.mxu0 0.0
        %765 = vmatpush1.msra.mxu0 %v663
        %766 = vmatprep.subr.mxu0 0.0
        %767 = vmatpush1.msra.mxu0 %v664
        %768 = vmatprep.subr.mxu0 0.0
        %769 = vmatpush1.msra.mxu0 %v665
        %770 = vmatprep.subr.mxu0 0.0
        %771 = vmatpush1.msra.mxu0 0.0
        %772 = vmatprep.subr.mxu0 0.0
        %773 = vmatpush1.msra.mxu0 0.0
        %774 = vmatprep.subr.mxu0 0.0
        %775 = vmatpush1.msra.mxu0 0.0
        %776 = vmatprep.subr.mxu0 0.0
        %777 = vmatpush1.msra.mxu0 0.0
        %778 = vmatprep.subr.mxu0 0.0
        %779 = vmatpush1.msra.mxu0 0.0
        %780 = vmatprep.subr.mxu0 0.0
        %781 = vmatpush1.msra.mxu0 0.0
        %782 = vmatprep.subr.mxu0 0.0
        %783 = vmatpush1.msra.mxu0 0.0
        %784 = vmatprep.subr.mxu0 0.0
        %785 = vmatpush1.msra.mxu0 0.0
        %786 = vmatprep.subr.mxu0 0.0
        %787 = vmatpush1.msra.mxu0 0.0
        %788 = vmatprep.subr.mxu0 0.0
        %789 = vmatpush1.msra.mxu0 0.0
        %790 = vmatprep.subr.mxu0 0.0
        %791 = vmatpush1.msra.mxu0 0.0
        %792 = vmatprep.subr.mxu0 0.0
        %793 = vmatpush1.msra.mxu0 0.0
        %794 = vmatprep.subr.mxu0 0.0
        %795 = vmatpush1.msra.mxu0 0.0
        %796 = vmatprep.subr.mxu0 0.0
        %797 = vmatpush1.msra.mxu0 0.0
        %798 = vmatprep.subr.mxu0 0.0
        %799 = vmatpush1.msra.mxu0 0.0
        %800 = vmatprep.subr.mxu0 0.0
        %801 = vmatpush1.msra.mxu0 0.0
        %802 = vmatprep.subr.mxu0 0.0
        %803 = vmatpush1.msra.mxu0 0.0
        %804 = vmatprep.subr.mxu0 0.0
        %805 = vmatpush1.msra.mxu0 0.0
        %806 = vmatprep.subr.mxu0 0.0
        %807 = vmatpush1.msra.mxu0 0.0
        %808 = vmatprep.subr.mxu0 0.0
        %809 = vmatpush1.msra.mxu0 0.0
        %810 = vmatprep.subr.mxu0 0.0
        %811 = vmatpush1.msra.mxu0 0.0
        %812 = vmatprep.subr.mxu0 0.0
        %813 = vmatpush1.msra.mxu0 0.0
        %814 = vmatprep.subr.mxu0 0.0
        %815 = vmatpush1.msra.mxu0 0.0
        %816 = vmatprep.subr.mxu0 0.0
        %817 = vmatpush1.msra.mxu0 0.0
        %818 = vmatprep.subr.mxu0 0.0
        %819 = vmatpush1.msra.mxu0 0.0
        %820 = vmatprep.subr.mxu0 0.0
        %821 = vmatpush1.msra.mxu0 0.0
        %822 = vmatprep.subr.mxu0 0.0
        %823 = vmatpush1.msra.mxu0 0.0
        %824 = vmatprep.subr.mxu0 0.0
        %825 = vmatpush1.msra.mxu0 0.0
        %826 = vmatprep.mubr.f32.mxu0 0.0
        %827 = vmatmul.mubr.f32.gmra.mrb[0].mxu0 %v667
        %v828 = vpop.f32.mrb[0].mxu0
        %v829 = vadd.f32 0.0, %v828
        %v830 = vpop.f32.mrb[0].mxu0
        %831 = vmatprep.mubr.f32.mxu0 0.0
        %832 = vmatmul.mubr.f32.gmra.mrb[0].mxu0 %v670
        %v833 = vpop.f32.mrb[0].mxu0
        %v834 = vadd.f32 0.0, %v833
        %v835 = vpop.f32.mrb[0].mxu0
        %836 = vmatprep.mubr.f32.mxu0 0.0
        %837 = vmatmul.mubr.f32.gmra.mrb[0].mxu0 %v673
        %v838 = vpop.f32.mrb[0].mxu0
        %v839 = vadd.f32 0.0, %v838
        %v840 = vpop.f32.mrb[0].mxu0
        %841 = vmatprep.mubr.f32.mxu0 0.0
        %842 = vmatmul.mubr.f32.gmra.mrb[0].mxu0 %v676
        %v843 = vpop.f32.mrb[0].mxu0
        %v844 = vadd.f32 0.0, %v843
        %v845 = vpop.f32.mrb[0].mxu0
        %846 = vmatprep.mubr.f32.mxu0 0.0
        %847 = vmatmul.mubr.f32.gmra.mrb[0].mxu0 %v679
        %v848 = vpop.f32.mrb[0].mxu0
        %v849 = vadd.f32 0.0, %v848
        %v850 = vpop.f32.mrb[0].mxu0
        %851 = vmatprep.mubr.f32.mxu0 0.0
        %852 = vmatmul.mubr.f32.gmra.mrb[0].mxu0 %v682
        %v853 = vpop.f32.mrb[0].mxu0
        %v854 = vadd.f32 0.0, %v853
        %v855 = vpop.f32.mrb[0].mxu0
        %856 = vmatprep.mubr.f32.mxu0 0.0
        %857 = vmatmul.mubr.f32.gmra.mrb[0].mxu0 %v685
        %v858 = vpop.f32.mrb[0].mxu0
        %v859 = vadd.f32 0.0, %v858
        %v860 = vpop.f32.mrb[0].mxu0
        %861 = vmatprep.mubr.f32.mxu0 0.0
        %862 = vmatmul.mubr.f32.gmra.mrb[0].mxu0 %v688
        %v863 = vpop.f32.mrb[0].mxu0
        %v864 = vadd.f32 0.0, %v863
        %v865 = vpop.f32.mrb[0].mxu0
        %866 = vmatprep.mubr.f32.mxu0 0.0
        %867 = vmatmul.mubr.f32.gmra.mrb[0].mxu0 %v691
        %v868 = vpop.f32.mrb[0].mxu0
        %v869 = vadd.f32 0.0, %v868
        %v870 = vpop.f32.mrb[0].mxu0
        %871 = vmatprep.mubr.f32.mxu0 0.0
        %872 = vmatmul.mubr.f32.gmra.mrb[0].mxu0 %v694
        %v873 = vpop.f32.mrb[0].mxu0
        %v874 = vadd.f32 0.0, %v873
        %v875 = vpop.f32.mrb[0].mxu0
        %876 = vmatprep.mubr.f32.mxu0 0.0
        %877 = vmatmul.mubr.f32.gmra.mrb[0].mxu0 %v697
        %v878 = vpop.f32.mrb[0].mxu0
        %v879 = vadd.f32 0.0, %v878
        %v880 = vpop.f32.mrb[0].mxu0
        %881 = vmatprep.mubr.f32.mxu0 0.0
        %882 = vmatmul.mubr.f32.gmra.mrb[0].mxu0 %v700
        %v883 = vpop.f32.mrb[0].mxu0
        %v884 = vadd.f32 0.0, %v883
        %v885 = vpop.f32.mrb[0].mxu0
        %886 = vmatprep.mubr.f32.mxu0 0.0
        %887 = vmatmul.mubr.f32.gmra.mrb[0].mxu0 %v703
        %v888 = vpop.f32.mrb[0].mxu0
        %v889 = vadd.f32 0.0, %v888
        %v890 = vpop.f32.mrb[0].mxu0
        %891 = vmatprep.mubr.f32.mxu0 0.0
        %892 = vmatmul.mubr.f32.gmra.mrb[0].mxu0 %v706
        %v893 = vpop.f32.mrb[0].mxu0
        %v894 = vadd.f32 0.0, %v893
        %v895 = vpop.f32.mrb[0].mxu0
        %896 = vmatprep.mubr.f32.mxu0 0.0
        %897 = vmatmul.mubr.f32.gmra.mrb[0].mxu0 %v709
        %v898 = vpop.f32.mrb[0].mxu0
        %v899 = vadd.f32 0.0, %v898
        %v900 = vpop.f32.mrb[0].mxu0
        %901 = vmatprep.mubr.f32.mxu0 0.0
        %902 = vmatmul.mubr.f32.gmra.mrb[0].mxu0 %v712
        %v903 = vpop.f32.mrb[0].mxu0
        %v904 = vadd.f32 0.0, %v903
        %v905 = vpop.f32.mrb[0].mxu0
        %906 = vmatprep.mubr.f32.mxu0 0.0
        %907 = vmatmul.mubr.f32.gmra.mrb[0].mxu0 %v715
        %v908 = vpop.f32.mrb[0].mxu0
        %v909 = vadd.f32 0.0, %v908
        %v910 = vpop.f32.mrb[0].mxu0
        %911 = vmatprep.mubr.f32.mxu0 0.0
        %912 = vmatmul.mubr.f32.gmra.mrb[0].mxu0 %v718
        %v913 = vpop.f32.mrb[0].mxu0
        %v914 = vadd.f32 0.0, %v913
        %v915 = vpop.f32.mrb[0].mxu0
        %916 = vmatprep.mubr.f32.mxu0 0.0
        %917 = vmatmul.mubr.f32.gmra.mrb[0].mxu0 %v721
        %v918 = vpop.f32.mrb[0].mxu0
        %v919 = vadd.f32 0.0, %v918
        %v920 = vpop.f32.mrb[0].mxu0
        %921 = vmatprep.mubr.f32.mxu0 0.0
        %922 = vmatmul.mubr.f32.gmra.mrb[0].mxu0 %v724
        %v923 = vpop.f32.mrb[0].mxu0
        %v924 = vadd.f32 0.0, %v923
        %v925 = vpop.f32.mrb[0].mxu0
        %926 = vmatprep.mubr.f32.mxu0 0.0
        %927 = vmatmul.mubr.f32.gmra.mrb[0].mxu0 %v727
        %v928 = vpop.f32.mrb[0].mxu0
        %v929 = vadd.f32 0.0, %v928
        %v930 = vpop.f32.mrb[0].mxu0
        %931 = vmatprep.mubr.f32.mxu0 0.0
        %932 = vmatmul.mubr.f32.gmra.mrb[0].mxu0 %v730
        %v933 = vpop.f32.mrb[0].mxu0
        %v934 = vadd.f32 0.0, %v933
        %v935 = vpop.f32.mrb[0].mxu0
        %936 = vmatprep.mubr.f32.mxu0 0.0
        %937 = vmatmul.mubr.f32.gmra.mrb[0].mxu0 %v733
        %v938 = vpop.f32.mrb[0].mxu0
        %v939 = vadd.f32 0.0, %v938
        %v940 = vpop.f32.mrb[0].mxu0
        %941 = vmatprep.mubr.f32.mxu0 0.0
        %942 = vmatmul.mubr.f32.gmra.mrb[0].mxu0 %v736
        %v943 = vpop.f32.mrb[0].mxu0
        %v944 = vadd.f32 0.0, %v943
        %v945 = vpop.f32.mrb[0].mxu0
        %946 = vmatprep.mubr.f32.mxu0 0.0
        %947 = vmatmul.mubr.f32.gmra.mrb[0].mxu0 %v739
        %v948 = vpop.f32.mrb[0].mxu0
        %v949 = vadd.f32 0.0, %v948
        %v950 = vpop.f32.mrb[0].mxu0
        %951 = vmatprep.mubr.f32.mxu0 0.0
        %952 = vmatmul.mubr.f32.gmra.mrb[0].mxu0 %v742
        %v953 = vpop.f32.mrb[0].mxu0
        %v954 = vadd.f32 0.0, %v953
        %v955 = vpop.f32.mrb[0].mxu0
        %956 = vmatprep.mubr.f32.mxu0 0.0
        %957 = vmatmul.mubr.f32.gmra.mrb[0].mxu0 %v745
        %v958 = vpop.f32.mrb[0].mxu0
        %v959 = vadd.f32 0.0, %v958
        %v960 = vpop.f32.mrb[0].mxu0
        %961 = vmatprep.mubr.f32.mxu0 0.0
        %962 = vmatmul.mubr.f32.gmra.mrb[0].mxu0 %v748
        %v963 = vpop.f32.mrb[0].mxu0
        %v964 = vadd.f32 0.0, %v963
        %v965 = vpop.f32.mrb[0].mxu0
        %966 = vmatprep.mubr.f32.mxu0 0.0
        %967 = vmatmul.mubr.f32.gmra.mrb[0].mxu0 %v751
        %v968 = vpop.f32.mrb[0].mxu0
        %v969 = vadd.f32 0.0, %v968
        %v970 = vpop.f32.mrb[0].mxu0
        %971 = vmatprep.mubr.f32.mxu0 0.0
        %972 = vmatmul.mubr.f32.gmra.mrb[0].mxu0 %v754
        %v973 = vpop.f32.mrb[0].mxu0
        %v974 = vadd.f32 0.0, %v973
        %v975 = vpop.f32.mrb[0].mxu0
        %976 = vmatprep.mubr.f32.mxu0 0.0
        %977 = vmatmul.mubr.f32.gmra.mrb[0].mxu0 %v757
        %v978 = vpop.f32.mrb[0].mxu0
        %v979 = vadd.f32 0.0, %v978
        %v980 = vpop.f32.mrb[0].mxu0
        %981 = vmatprep.mubr.f32.mxu0 0.0
        %982 = vmatmul.mubr.f32.gmra.mrb[0].mxu0 %v760
        %v983 = vpop.f32.mrb[0].mxu0
        %v984 = vadd.f32 0.0, %v983
        %v985 = vpop.f32.mrb[0].mxu0
        %986 = vdwg.mxu0
        %v987 = vld [vmem:[%s6] sm:$0xff]
        %v988 = vld [vmem:[%s6 + $0x8] sm:$0xff]
        %v989 = vld [vmem:[%s6 + $0x10] sm:$0xff]
        %v990 = vld [vmem:[%s6 + $0x18] sm:$0xff]
        %v992 = vsel %vm578, %v478, 0
        %v995 = vsel %vm578, %v479, 0
        %v998 = vsel %vm578, %v480, 0
        %v1001 = vsel %vm578, %v481, 0
        %v1004 = vsel %vm578, %v482, 0
        %v1007 = vsel %vm578, %v483, 0
        %v1010 = vsel %vm578, %v484, 0
        %v1013 = vsel %vm578, %v485, 0
        %v1016 = vsel %vm578, %v486, 0
        %v1019 = vsel %vm578, %v487, 0
        %v1022 = vsel %vm578, %v488, 0
        %v1025 = vsel %vm578, %v489, 0
        %v1028 = vsel %vm578, %v490, 0
        %v1031 = vsel %vm578, %v491, 0
        %v1034 = vsel %vm578, %v492, 0
        %v1037 = vsel %vm578, %v493, 0
        %v1040 = vsel %vm578, %v494, 0
        %v1043 = vsel %vm578, %v495, 0
        %v1046 = vsel %vm578, %v496, 0
        %v1049 = vsel %vm578, %v497, 0
        %v1052 = vsel %vm578, %v498, 0
        %v1055 = vsel %vm578, %v499, 0
        %v1058 = vsel %vm578, %v500, 0
        %v1061 = vsel %vm578, %v501, 0
        %v1064 = vsel %vm578, %v502, 0
        %v1067 = vsel %vm578, %v503, 0
        %v1070 = vsel %vm578, %v504, 0
        %v1073 = vsel %vm578, %v505, 0
        %v1076 = vsel %vm578, %v506, 0
        %v1079 = vsel %vm578, %v507, 0
        %v1082 = vsel %vm578, %v508, 0
        %v1085 = vsel %vm578, %v509, 0
        %1087 = vmatprep.subr.mxu0 0.0
        %1088 = vmatpush1.msra.mxu0 %v987
        %1089 = vmatprep.subr.mxu0 0.0
        %1090 = vmatpush1.msra.mxu0 %v988
        %1091 = vmatprep.subr.mxu0 0.0
        %1092 = vmatpush1.msra.mxu0 %v989
        %1093 = vmatprep.subr.mxu0 0.0
        %1094 = vmatpush1.msra.mxu0 %v990
        %1095 = vmatprep.subr.mxu0 0.0
        %1096 = vmatpush1.msra.mxu0 0.0
        %1097 = vmatprep.subr.mxu0 0.0
        %1098 = vmatpush1.msra.mxu0 0.0
        %1099 = vmatprep.subr.mxu0 0.0
        %1100 = vmatpush1.msra.mxu0 0.0
        %1101 = vmatprep.subr.mxu0 0.0
        %1102 = vmatpush1.msra.mxu0 0.0
        %1103 = vmatprep.subr.mxu0 0.0
        %1104 = vmatpush1.msra.mxu0 0.0
        %1105 = vmatprep.subr.mxu0 0.0
        %1106 = vmatpush1.msra.mxu0 0.0
        %1107 = vmatprep.subr.mxu0 0.0
        %1108 = vmatpush1.msra.mxu0 0.0
        %1109 = vmatprep.subr.mxu0 0.0
        %1110 = vmatpush1.msra.mxu0 0.0
        %1111 = vmatprep.subr.mxu0 0.0
        %1112 = vmatpush1.msra.mxu0 0.0
        %1113 = vmatprep.subr.mxu0 0.0
        %1114 = vmatpush1.msra.mxu0 0.0
        %1115 = vmatprep.subr.mxu0 0.0
        %1116 = vmatpush1.msra.mxu0 0.0
        %1117 = vmatprep.subr.mxu0 0.0
        %1118 = vmatpush1.msra.mxu0 0.0
        %1119 = vmatprep.subr.mxu0 0.0
        %1120 = vmatpush1.msra.mxu0 0.0
        %1121 = vmatprep.subr.mxu0 0.0
        %1122 = vmatpush1.msra.mxu0 0.0
        %1123 = vmatprep.subr.mxu0 0.0
        %1124 = vmatpush1.msra.mxu0 0.0
        %1125 = vmatprep.subr.mxu0 0.0
        %1126 = vmatpush1.msra.mxu0 0.0
        %1127 = vmatprep.subr.mxu0 0.0
        %1128 = vmatpush1.msra.mxu0 0.0
        %1129 = vmatprep.subr.mxu0 0.0
        %1130 = vmatpush1.msra.mxu0 0.0
        %1131 = vmatprep.subr.mxu0 0.0
        %1132 = vmatpush1.msra.mxu0 0.0
        %1133 = vmatprep.subr.mxu0 0.0
        %1134 = vmatpush1.msra.mxu0 0.0
        %1135 = vmatprep.subr.mxu0 0.0
        %1136 = vmatpush1.msra.mxu0 0.0
        %1137 = vmatprep.subr.mxu0 0.0
        %1138 = vmatpush1.msra.mxu0 0.0
        %1139 = vmatprep.subr.mxu0 0.0
        %1140 = vmatpush1.msra.mxu0 0.0
        %1141 = vmatprep.subr.mxu0 0.0
        %1142 = vmatpush1.msra.mxu0 0.0
        %1143 = vmatprep.subr.mxu0 0.0
        %1144 = vmatpush1.msra.mxu0 0.0
        %1145 = vmatprep.subr.mxu0 0.0
        %1146 = vmatpush1.msra.mxu0 0.0
        %1147 = vmatprep.subr.mxu0 0.0
        %1148 = vmatpush1.msra.mxu0 0.0
        %1149 = vmatprep.subr.mxu0 0.0
        %1150 = vmatpush1.msra.mxu0 0.0
        %1151 = vmatprep.mubr.f32.mxu0 0.0
        %1152 = vmatmul.mubr.f32.gmra.mrb[0].mxu0 %v992
        %v1153 = vpop.f32.mrb[0].mxu0
        %v1154 = vadd.f32 0.0, %v1153
        %v1155 = vpop.f32.mrb[0].mxu0
        %1156 = vmatprep.mubr.f32.mxu0 0.0
        %1157 = vmatmul.mubr.f32.gmra.mrb[0].mxu0 %v995
        %v1158 = vpop.f32.mrb[0].mxu0
        %v1159 = vadd.f32 0.0, %v1158
        %v1160 = vpop.f32.mrb[0].mxu0
        %1161 = vmatprep.mubr.f32.mxu0 0.0
        %1162 = vmatmul.mubr.f32.gmra.mrb[0].mxu0 %v998
        %v1163 = vpop.f32.mrb[0].mxu0
        %v1164 = vadd.f32 0.0, %v1163
        %v1165 = vpop.f32.mrb[0].mxu0
        %1166 = vmatprep.mubr.f32.mxu0 0.0
        %1167 = vmatmul.mubr.f32.gmra.mrb[0].mxu0 %v1001
        %v1168 = vpop.f32.mrb[0].mxu0
        %v1169 = vadd.f32 0.0, %v1168
        %v1170 = vpop.f32.mrb[0].mxu0
        %1171 = vmatprep.mubr.f32.mxu0 0.0
        %1172 = vmatmul.mubr.f32.gmra.mrb[0].mxu0 %v1004
        %v1173 = vpop.f32.mrb[0].mxu0
        %v1174 = vadd.f32 0.0, %v1173
        %v1175 = vpop.f32.mrb[0].mxu0
        %1176 = vmatprep.mubr.f32.mxu0 0.0
        %1177 = vmatmul.mubr.f32.gmra.mrb[0].mxu0 %v1007
        %v1178 = vpop.f32.mrb[0].mxu0
        %v1179 = vadd.f32 0.0, %v1178
        %v1180 = vpop.f32.mrb[0].mxu0
        %1181 = vmatprep.mubr.f32.mxu0 0.0
        %1182 = vmatmul.mubr.f32.gmra.mrb[0].mxu0 %v1010
        %v1183 = vpop.f32.mrb[0].mxu0
        %v1184 = vadd.f32 0.0, %v1183
        %v1185 = vpop.f32.mrb[0].mxu0
        %1186 = vmatprep.mubr.f32.mxu0 0.0
        %1187 = vmatmul.mubr.f32.gmra.mrb[0].mxu0 %v1013
        %v1188 = vpop.f32.mrb[0].mxu0
        %v1189 = vadd.f32 0.0, %v1188
        %v1190 = vpop.f32.mrb[0].mxu0
        %1191 = vmatprep.mubr.f32.mxu0 0.0
        %1192 = vmatmul.mubr.f32.gmra.mrb[0].mxu0 %v1016
        %v1193 = vpop.f32.mrb[0].mxu0
        %v1194 = vadd.f32 0.0, %v1193
        %v1195 = vpop.f32.mrb[0].mxu0
        %1196 = vmatprep.mubr.f32.mxu0 0.0
        %1197 = vmatmul.mubr.f32.gmra.mrb[0].mxu0 %v1019
        %v1198 = vpop.f32.mrb[0].mxu0
        %v1199 = vadd.f32 0.0, %v1198
        %v1200 = vpop.f32.mrb[0].mxu0
        %1201 = vmatprep.mubr.f32.mxu0 0.0
        %1202 = vmatmul.mubr.f32.gmra.mrb[0].mxu0 %v1022
        %v1203 = vpop.f32.mrb[0].mxu0
        %v1204 = vadd.f32 0.0, %v1203
        %v1205 = vpop.f32.mrb[0].mxu0
        %1206 = vmatprep.mubr.f32.mxu0 0.0
        %1207 = vmatmul.mubr.f32.gmra.mrb[0].mxu0 %v1025
        %v1208 = vpop.f32.mrb[0].mxu0
        %v1209 = vadd.f32 0.0, %v1208
        %v1210 = vpop.f32.mrb[0].mxu0
        %1211 = vmatprep.mubr.f32.mxu0 0.0
        %1212 = vmatmul.mubr.f32.gmra.mrb[0].mxu0 %v1028
        %v1213 = vpop.f32.mrb[0].mxu0
        %v1214 = vadd.f32 0.0, %v1213
        %v1215 = vpop.f32.mrb[0].mxu0
        %1216 = vmatprep.mubr.f32.mxu0 0.0
        %1217 = vmatmul.mubr.f32.gmra.mrb[0].mxu0 %v1031
        %v1218 = vpop.f32.mrb[0].mxu0
        %v1219 = vadd.f32 0.0, %v1218
        %v1220 = vpop.f32.mrb[0].mxu0
        %1221 = vmatprep.mubr.f32.mxu0 0.0
        %1222 = vmatmul.mubr.f32.gmra.mrb[0].mxu0 %v1034
        %v1223 = vpop.f32.mrb[0].mxu0
        %v1224 = vadd.f32 0.0, %v1223
        %v1225 = vpop.f32.mrb[0].mxu0
        %1226 = vmatprep.mubr.f32.mxu0 0.0
        %1227 = vmatmul.mubr.f32.gmra.mrb[0].mxu0 %v1037
        %v1228 = vpop.f32.mrb[0].mxu0
        %v1229 = vadd.f32 0.0, %v1228
        %v1230 = vpop.f32.mrb[0].mxu0
        %1231 = vmatprep.mubr.f32.mxu0 0.0
        %1232 = vmatmul.mubr.f32.gmra.mrb[0].mxu0 %v1040
        %v1233 = vpop.f32.mrb[0].mxu0
        %v1234 = vadd.f32 0.0, %v1233
        %v1235 = vpop.f32.mrb[0].mxu0
        %1236 = vmatprep.mubr.f32.mxu0 0.0
        %1237 = vmatmul.mubr.f32.gmra.mrb[0].mxu0 %v1043
        %v1238 = vpop.f32.mrb[0].mxu0
        %v1239 = vadd.f32 0.0, %v1238
        %v1240 = vpop.f32.mrb[0].mxu0
        %1241 = vmatprep.mubr.f32.mxu0 0.0
        %1242 = vmatmul.mubr.f32.gmra.mrb[0].mxu0 %v1046
        %v1243 = vpop.f32.mrb[0].mxu0
        %v1244 = vadd.f32 0.0, %v1243
        %v1245 = vpop.f32.mrb[0].mxu0
        %1246 = vmatprep.mubr.f32.mxu0 0.0
        %1247 = vmatmul.mubr.f32.gmra.mrb[0].mxu0 %v1049
        %v1248 = vpop.f32.mrb[0].mxu0
        %v1249 = vadd.f32 0.0, %v1248
        %v1250 = vpop.f32.mrb[0].mxu0
        %1251 = vmatprep.mubr.f32.mxu0 0.0
        %1252 = vmatmul.mubr.f32.gmra.mrb[0].mxu0 %v1052
        %v1253 = vpop.f32.mrb[0].mxu0
        %v1254 = vadd.f32 0.0, %v1253
        %v1255 = vpop.f32.mrb[0].mxu0
        %1256 = vmatprep.mubr.f32.mxu0 0.0
        %1257 = vmatmul.mubr.f32.gmra.mrb[0].mxu0 %v1055
        %v1258 = vpop.f32.mrb[0].mxu0
        %v1259 = vadd.f32 0.0, %v1258
        %v1260 = vpop.f32.mrb[0].mxu0
        %1261 = vmatprep.mubr.f32.mxu0 0.0
        %1262 = vmatmul.mubr.f32.gmra.mrb[0].mxu0 %v1058
        %v1263 = vpop.f32.mrb[0].mxu0
        %v1264 = vadd.f32 0.0, %v1263
        %v1265 = vpop.f32.mrb[0].mxu0
        %1266 = vmatprep.mubr.f32.mxu0 0.0
        %1267 = vmatmul.mubr.f32.gmra.mrb[0].mxu0 %v1061
        %v1268 = vpop.f32.mrb[0].mxu0
        %v1269 = vadd.f32 0.0, %v1268
        %v1270 = vpop.f32.mrb[0].mxu0
        %1271 = vmatprep.mubr.f32.mxu0 0.0
        %1272 = vmatmul.mubr.f32.gmra.mrb[0].mxu0 %v1064
        %v1273 = vpop.f32.mrb[0].mxu0
        %v1274 = vadd.f32 0.0, %v1273
        %v1275 = vpop.f32.mrb[0].mxu0
        %1276 = vmatprep.mubr.f32.mxu0 0.0
        %1277 = vmatmul.mubr.f32.gmra.mrb[0].mxu0 %v1067
        %v1278 = vpop.f32.mrb[0].mxu0
        %v1279 = vadd.f32 0.0, %v1278
        %v1280 = vpop.f32.mrb[0].mxu0
        %1281 = vmatprep.mubr.f32.mxu0 0.0
        %1282 = vmatmul.mubr.f32.gmra.mrb[0].mxu0 %v1070
        %v1283 = vpop.f32.mrb[0].mxu0
        %v1284 = vadd.f32 0.0, %v1283
        %v1285 = vpop.f32.mrb[0].mxu0
        %1286 = vmatprep.mubr.f32.mxu0 0.0
        %1287 = vmatmul.mubr.f32.gmra.mrb[0].mxu0 %v1073
        %v1288 = vpop.f32.mrb[0].mxu0
        %v1289 = vadd.f32 0.0, %v1288
        %v1290 = vpop.f32.mrb[0].mxu0
        %1291 = vmatprep.mubr.f32.mxu0 0.0
        %1292 = vmatmul.mubr.f32.gmra.mrb[0].mxu0 %v1076
        %v1293 = vpop.f32.mrb[0].mxu0
        %v1294 = vadd.f32 0.0, %v1293
        %v1295 = vpop.f32.mrb[0].mxu0
        %1296 = vmatprep.mubr.f32.mxu0 0.0
        %1297 = vmatmul.mubr.f32.gmra.mrb[0].mxu0 %v1079
        %v1298 = vpop.f32.mrb[0].mxu0
        %v1299 = vadd.f32 0.0, %v1298
        %v1300 = vpop.f32.mrb[0].mxu0
        %1301 = vmatprep.mubr.f32.mxu0 0.0
        %1302 = vmatmul.mubr.f32.gmra.mrb[0].mxu0 %v1082
        %v1303 = vpop.f32.mrb[0].mxu0
        %v1304 = vadd.f32 0.0, %v1303
        %v1305 = vpop.f32.mrb[0].mxu0
        %1306 = vmatprep.mubr.f32.mxu0 0.0
        %1307 = vmatmul.mubr.f32.gmra.mrb[0].mxu0 %v1085
        %v1308 = vpop.f32.mrb[0].mxu0
        %v1309 = vadd.f32 0.0, %v1308
        %v1310 = vpop.f32.mrb[0].mxu0
        %1311 = vdwg.mxu0
        %v1312 = vld [vmem:[%s7] sm:$0xff]
        %v1313 = vld [vmem:[%s7 + $0x8] sm:$0xff]
        %v1314 = vld [vmem:[%s7 + $0x10] sm:$0xff]
        %v1315 = vld [vmem:[%s7 + $0x18] sm:$0xff]
        %v1316 = vld [vmem:[%s7 + $0x20] sm:$0xff]
        %v1317 = vld [vmem:[%s7 + $0x28] sm:$0xff]
        %v1318 = vld [vmem:[%s7 + $0x30] sm:$0xff]
        %v1319 = vld [vmem:[%s7 + $0x38] sm:$0xff]
        %v1320 = vld [vmem:[%s7 + $0x40] sm:$0xff]
        %v1321 = vld [vmem:[%s7 + $0x48] sm:$0xff]
        %v1322 = vld [vmem:[%s7 + $0x50] sm:$0xff]
        %v1323 = vld [vmem:[%s7 + $0x58] sm:$0xff]
        %v1324 = vld [vmem:[%s7 + $0x60] sm:$0xff]
        %v1325 = vld [vmem:[%s7 + $0x68] sm:$0xff]
        %v1326 = vld [vmem:[%s7 + $0x70] sm:$0xff]
        %v1327 = vld [vmem:[%s7 + $0x78] sm:$0xff]
        %v1328 = vlaneseq
        %v1329 = vand.u32 %v1328, 127
        %vm1330 = vcmp.lt.s32.totalorder %v1329, 16
        %v1331 = vsel %vm1330, 0.0, -1e+09
        %v1333 = vsel %vm578, %v660, 0
        %v1336 = vsel %vm578, %v829, 0
        %v1339 = vsel %vm578, %v834, 0
        %v1342 = vsel %vm578, %v839, 0
        %v1345 = vsel %vm578, %v844, 0
        %v1348 = vsel %vm578, %v849, 0
        %v1351 = vsel %vm578, %v854, 0
        %v1354 = vsel %vm578, %v859, 0
        %v1357 = vsel %vm578, %v864, 0
        %v1360 = vsel %vm578, %v869, 0
        %v1363 = vsel %vm578, %v874, 0
        %v1366 = vsel %vm578, %v879, 0
        %v1369 = vsel %vm578, %v884, 0
        %v1372 = vsel %vm578, %v889, 0
        %v1375 = vsel %vm578, %v894, 0
        %v1378 = vsel %vm578, %v899, 0
        %v1381 = vsel %vm578, %v904, 0
        %1383 = vmatprep.subr.mxu0 0.0
        %1384 = vmatpush1.xpose.msra.mxu0 %v1336
        %1385 = vmatprep.subr.mxu0 0.0
        %1386 = vmatpush1.xpose.msra.mxu0 %v1339
        %1387 = vmatprep.subr.mxu0 0.0
        %1388 = vmatpush1.xpose.msra.mxu0 %v1342
        %1389 = vmatprep.subr.mxu0 0.0
        %1390 = vmatpush1.xpose.msra.mxu0 %v1345
        %1391 = vmatprep.subr.mxu0 0.0
        %1392 = vmatpush1.xpose.msra.mxu0 %v1348
        %1393 = vmatprep.subr.mxu0 0.0
        %1394 = vmatpush1.xpose.msra.mxu0 %v1351
        %1395 = vmatprep.subr.mxu0 0.0
        %1396 = vmatpush1.xpose.msra.mxu0 %v1354
        %1397 = vmatprep.subr.mxu0 0.0
        %1398 = vmatpush1.xpose.msra.mxu0 %v1357
        %1399 = vmatprep.subr.mxu0 0.0
        %1400 = vmatpush1.xpose.msra.mxu0 %v1360
        %1401 = vmatprep.subr.mxu0 0.0
        %1402 = vmatpush1.xpose.msra.mxu0 %v1363
        %1403 = vmatprep.subr.mxu0 0.0
        %1404 = vmatpush1.xpose.msra.mxu0 %v1366
        %1405 = vmatprep.subr.mxu0 0.0
        %1406 = vmatpush1.xpose.msra.mxu0 %v1369
        %1407 = vmatprep.subr.mxu0 0.0
        %1408 = vmatpush1.xpose.msra.mxu0 %v1372
        %1409 = vmatprep.subr.mxu0 0.0
        %1410 = vmatpush1.xpose.msra.mxu0 %v1375
        %1411 = vmatprep.subr.mxu0 0.0
        %1412 = vmatpush1.xpose.msra.mxu0 %v1378
        %1413 = vmatprep.subr.mxu0 0.0
        %1414 = vmatpush1.xpose.msra.mxu0 %v1381
        %1415 = vmatprep.subr.mxu0 0.0
        %1416 = vmatpush1.xpose.msra.mxu0 0.0
        %1417 = vmatprep.subr.mxu0 0.0
        %1418 = vmatpush1.xpose.msra.mxu0 0.0
        %1419 = vmatprep.subr.mxu0 0.0
        %1420 = vmatpush1.xpose.msra.mxu0 0.0
        %1421 = vmatprep.subr.mxu0 0.0
        %1422 = vmatpush1.xpose.msra.mxu0 0.0
        %1423 = vmatprep.subr.mxu0 0.0
        %1424 = vmatpush1.xpose.msra.mxu0 0.0
        %1425 = vmatprep.subr.mxu0 0.0
        %1426 = vmatpush1.xpose.msra.mxu0 0.0
        %1427 = vmatprep.subr.mxu0 0.0
        %1428 = vmatpush1.xpose.msra.mxu0 0.0
        %1429 = vmatprep.subr.mxu0 0.0
        %1430 = vmatpush1.xpose.msra.mxu0 0.0
        %1431 = vmatprep.subr.mxu0 0.0
        %1432 = vmatpush1.xpose.msra.mxu0 0.0
        %1433 = vmatprep.subr.mxu0 0.0
        %1434 = vmatpush1.xpose.msra.mxu0 0.0
        %1435 = vmatprep.subr.mxu0 0.0
        %1436 = vmatpush1.xpose.msra.mxu0 0.0
        %1437 = vmatprep.subr.mxu0 0.0
        %1438 = vmatpush1.xpose.msra.mxu0 0.0
        %1439 = vmatprep.subr.mxu0 0.0
        %1440 = vmatpush1.xpose.msra.mxu0 0.0
        %1441 = vmatprep.subr.mxu0 0.0
        %1442 = vmatpush1.xpose.msra.mxu0 0.0
        %1443 = vmatprep.subr.mxu0 0.0
        %1444 = vmatpush1.xpose.msra.mxu0 0.0
        %1445 = vmatprep.subr.mxu0 0.0
        %1446 = vmatpush1.xpose.msra.mxu0 0.0
        %1447 = vmatprep.mubr.f32.mxu0 0.0
        %1448 = vmatmul.mubr.f32.gmra.mrb[0].mxu0 %v1333
        %v1449 = vpop.f32.mrb[0].mxu0
        %v1450 = vadd.f32 0.0, %v1449
        %v1451 = vpop.f32.mrb[0].mxu0
        %1452 = vdwg.mxu0
        %v1454 = vsel %vm578, %v661, 0
        %v1457 = vsel %vm578, %v909, 0
        %v1460 = vsel %vm578, %v914, 0
        %v1463 = vsel %vm578, %v919, 0
        %v1466 = vsel %vm578, %v924, 0
        %v1469 = vsel %vm578, %v929, 0
        %v1472 = vsel %vm578, %v934, 0
        %v1475 = vsel %vm578, %v939, 0
        %v1478 = vsel %vm578, %v944, 0
        %v1481 = vsel %vm578, %v949, 0
        %v1484 = vsel %vm578, %v954, 0
        %v1487 = vsel %vm578, %v959, 0
        %v1490 = vsel %vm578, %v964, 0
        %v1493 = vsel %vm578, %v969, 0
        %v1496 = vsel %vm578, %v974, 0
        %v1499 = vsel %vm578, %v979, 0
        %v1502 = vsel %vm578, %v984, 0
        %1504 = vmatprep.subr.mxu0 0.0
        %1505 = vmatpush1.xpose.msra.mxu0 %v1457
        %1506 = vmatprep.subr.mxu0 0.0
        %1507 = vmatpush1.xpose.msra.mxu0 %v1460
        %1508 = vmatprep.subr.mxu0 0.0
        %1509 = vmatpush1.xpose.msra.mxu0 %v1463
        %1510 = vmatprep.subr.mxu0 0.0
        %1511 = vmatpush1.xpose.msra.mxu0 %v1466
        %1512 = vmatprep.subr.mxu0 0.0
        %1513 = vmatpush1.xpose.msra.mxu0 %v1469
        %1514 = vmatprep.subr.mxu0 0.0
        %1515 = vmatpush1.xpose.msra.mxu0 %v1472
        %1516 = vmatprep.subr.mxu0 0.0
        %1517 = vmatpush1.xpose.msra.mxu0 %v1475
        %1518 = vmatprep.subr.mxu0 0.0
        %1519 = vmatpush1.xpose.msra.mxu0 %v1478
        %1520 = vmatprep.subr.mxu0 0.0
        %1521 = vmatpush1.xpose.msra.mxu0 %v1481
        %1522 = vmatprep.subr.mxu0 0.0
        %1523 = vmatpush1.xpose.msra.mxu0 %v1484
        %1524 = vmatprep.subr.mxu0 0.0
        %1525 = vmatpush1.xpose.msra.mxu0 %v1487
        %1526 = vmatprep.subr.mxu0 0.0
        %1527 = vmatpush1.xpose.msra.mxu0 %v1490
        %1528 = vmatprep.subr.mxu0 0.0
        %1529 = vmatpush1.xpose.msra.mxu0 %v1493
        %1530 = vmatprep.subr.mxu0 0.0
        %1531 = vmatpush1.xpose.msra.mxu0 %v1496
        %1532 = vmatprep.subr.mxu0 0.0
        %1533 = vmatpush1.xpose.msra.mxu0 %v1499
        %1534 = vmatprep.subr.mxu0 0.0
        %1535 = vmatpush1.xpose.msra.mxu0 %v1502
        %1536 = vmatprep.subr.mxu0 0.0
        %1537 = vmatpush1.xpose.msra.mxu0 0.0
        %1538 = vmatprep.subr.mxu0 0.0
        %1539 = vmatpush1.xpose.msra.mxu0 0.0
        %1540 = vmatprep.subr.mxu0 0.0
        %1541 = vmatpush1.xpose.msra.mxu0 0.0
        %1542 = vmatprep.subr.mxu0 0.0
        %1543 = vmatpush1.xpose.msra.mxu0 0.0
        %1544 = vmatprep.subr.mxu0 0.0
        %1545 = vmatpush1.xpose.msra.mxu0 0.0
        %1546 = vmatprep.subr.mxu0 0.0
        %1547 = vmatpush1.xpose.msra.mxu0 0.0
        %1548 = vmatprep.subr.mxu0 0.0
        %1549 = vmatpush1.xpose.msra.mxu0 0.0
        %1550 = vmatprep.subr.mxu0 0.0
        %1551 = vmatpush1.xpose.msra.mxu0 0.0
        %1552 = vmatprep.subr.mxu0 0.0
        %1553 = vmatpush1.xpose.msra.mxu0 0.0
        %1554 = vmatprep.subr.mxu0 0.0
        %1555 = vmatpush1.xpose.msra.mxu0 0.0
        %1556 = vmatprep.subr.mxu0 0.0
        %1557 = vmatpush1.xpose.msra.mxu0 0.0
        %1558 = vmatprep.subr.mxu0 0.0
        %1559 = vmatpush1.xpose.msra.mxu0 0.0
        %1560 = vmatprep.subr.mxu0 0.0
        %1561 = vmatpush1.xpose.msra.mxu0 0.0
        %1562 = vmatprep.subr.mxu0 0.0
        %1563 = vmatpush1.xpose.msra.mxu0 0.0
        %1564 = vmatprep.subr.mxu0 0.0
        %1565 = vmatpush1.xpose.msra.mxu0 0.0
        %1566 = vmatprep.subr.mxu0 0.0
        %1567 = vmatpush1.xpose.msra.mxu0 0.0
        %1568 = vmatprep.mubr.f32.mxu0 0.0
        %1569 = vmatmul.mubr.f32.gmra.mrb[0].mxu0 %v1454
        %v1570 = vpop.f32.mrb[0].mxu0
        %v1571 = vadd.f32 0.0, %v1570
        %v1572 = vpop.f32.mrb[0].mxu0
        %1573 = vdwg.mxu0
        %v1574 = vadd.f32 %v1450, 0.0
        %v1575 = vadd.f32 %v1571, 0.0
        %v1576 = vadd.f32 %v1450, %v1331
        %v1577 = vadd.f32 %v1571, %v1331
        %1578 = vmax.xlane.f32.xlu0 %v1576
        %v1579 = vpop.xlane.xlu0 %1578
        %1580 = vmax.xlane.f32.xlu0 %v1577
        %v1581 = vpop.xlane.xlu0 %1580
        %v1582 = vsub.f32 %v1576, %v1579
        %v1583 = vsub.f32 %v1577, %v1581
        %v1584 = vmul.f32 %v1582, 1.442695
        %v1585 = vpow.pop %v1584
        %v1586 = vmul.f32 %v1583, 1.442695
        %v1587 = vpow.pop %v1586
        %1588 = vadd.xlane.f32.xlu0 %v1585
        %v1589 = vpop.xlane.xlu0 %1588
        %1590 = vadd.xlane.f32.xlu0 %v1587
        %v1591 = vpop.xlane.xlu0 %1590
        %v1592 = vrcp.pop %v1589
        %v1593 = vrcp.pop %v1591
        %v1594 = vmul.f32 %v1585, %v1592
        %v1595 = vmul.f32 %v1587, %v1593
        %1596 = vmatprep.subr.mxu0 0.0
        %1597 = vmatpush1.msra.mxu0 %v1154
        %1598 = vmatprep.subr.mxu0 0.0
        %1599 = vmatpush1.msra.mxu0 %v1159
        %1600 = vmatprep.subr.mxu0 0.0
        %1601 = vmatpush1.msra.mxu0 %v1164
        %1602 = vmatprep.subr.mxu0 0.0
        %1603 = vmatpush1.msra.mxu0 %v1169
        %1604 = vmatprep.subr.mxu0 0.0
        %1605 = vmatpush1.msra.mxu0 %v1174
        %1606 = vmatprep.subr.mxu0 0.0
        %1607 = vmatpush1.msra.mxu0 %v1179
        %1608 = vmatprep.subr.mxu0 0.0
        %1609 = vmatpush1.msra.mxu0 %v1184
        %1610 = vmatprep.subr.mxu0 0.0
        %1611 = vmatpush1.msra.mxu0 %v1189
        %1612 = vmatprep.subr.mxu0 0.0
        %1613 = vmatpush1.msra.mxu0 %v1194
        %1614 = vmatprep.subr.mxu0 0.0
        %1615 = vmatpush1.msra.mxu0 %v1199
        %1616 = vmatprep.subr.mxu0 0.0
        %1617 = vmatpush1.msra.mxu0 %v1204
        %1618 = vmatprep.subr.mxu0 0.0
        %1619 = vmatpush1.msra.mxu0 %v1209
        %1620 = vmatprep.subr.mxu0 0.0
        %1621 = vmatpush1.msra.mxu0 %v1214
        %1622 = vmatprep.subr.mxu0 0.0
        %1623 = vmatpush1.msra.mxu0 %v1219
        %1624 = vmatprep.subr.mxu0 0.0
        %1625 = vmatpush1.msra.mxu0 %v1224
        %1626 = vmatprep.subr.mxu0 0.0
        %1627 = vmatpush1.msra.mxu0 %v1229
        %1628 = vmatprep.subr.mxu0 0.0
        %1629 = vmatpush1.msra.mxu0 0.0
        %1630 = vmatprep.subr.mxu0 0.0
        %1631 = vmatpush1.msra.mxu0 0.0
        %1632 = vmatprep.subr.mxu0 0.0
        %1633 = vmatpush1.msra.mxu0 0.0
        %1634 = vmatprep.subr.mxu0 0.0
        %1635 = vmatpush1.msra.mxu0 0.0
        %1636 = vmatprep.subr.mxu0 0.0
        %1637 = vmatpush1.msra.mxu0 0.0
        %1638 = vmatprep.subr.mxu0 0.0
        %1639 = vmatpush1.msra.mxu0 0.0
        %1640 = vmatprep.subr.mxu0 0.0
        %1641 = vmatpush1.msra.mxu0 0.0
        %1642 = vmatprep.subr.mxu0 0.0
        %1643 = vmatpush1.msra.mxu0 0.0
        %1644 = vmatprep.subr.mxu0 0.0
        %1645 = vmatpush1.msra.mxu0 0.0
        %1646 = vmatprep.subr.mxu0 0.0
        %1647 = vmatpush1.msra.mxu0 0.0
        %1648 = vmatprep.subr.mxu0 0.0
        %1649 = vmatpush1.msra.mxu0 0.0
        %1650 = vmatprep.subr.mxu0 0.0
        %1651 = vmatpush1.msra.mxu0 0.0
        %1652 = vmatprep.subr.mxu0 0.0
        %1653 = vmatpush1.msra.mxu0 0.0
        %1654 = vmatprep.subr.mxu0 0.0
        %1655 = vmatpush1.msra.mxu0 0.0
        %1656 = vmatprep.subr.mxu0 0.0
        %1657 = vmatpush1.msra.mxu0 0.0
        %1658 = vmatprep.subr.mxu0 0.0
        %1659 = vmatpush1.msra.mxu0 0.0
        %1660 = vmatprep.mubr.f32.mxu0 0.0
        %1661 = vmatmul.mubr.f32.gmra.mrb[0].mxu0 %v1594
        %v1662 = vpop.f32.mrb[0].mxu0
        %v1663 = vadd.f32 0.0, %v1662
        %v1664 = vpop.f32.mrb[0].mxu0
        %1665 = vdwg.mxu0
        %1666 = vmatprep.subr.mxu0 0.0
        %1667 = vmatpush1.msra.mxu0 %v1234
        %1668 = vmatprep.subr.mxu0 0.0
        %1669 = vmatpush1.msra.mxu0 %v1239
        %1670 = vmatprep.subr.mxu0 0.0
        %1671 = vmatpush1.msra.mxu0 %v1244
        %1672 = vmatprep.subr.mxu0 0.0
        %1673 = vmatpush1.msra.mxu0 %v1249
        %1674 = vmatprep.subr.mxu0 0.0
        %1675 = vmatpush1.msra.mxu0 %v1254
        %1676 = vmatprep.subr.mxu0 0.0
        %1677 = vmatpush1.msra.mxu0 %v1259
        %1678 = vmatprep.subr.mxu0 0.0
        %1679 = vmatpush1.msra.mxu0 %v1264
        %1680 = vmatprep.subr.mxu0 0.0
        %1681 = vmatpush1.msra.mxu0 %v1269
        %1682 = vmatprep.subr.mxu0 0.0
        %1683 = vmatpush1.msra.mxu0 %v1274
        %1684 = vmatprep.subr.mxu0 0.0
        %1685 = vmatpush1.msra.mxu0 %v1279
        %1686 = vmatprep.subr.mxu0 0.0
        %1687 = vmatpush1.msra.mxu0 %v1284
        %1688 = vmatprep.subr.mxu0 0.0
        %1689 = vmatpush1.msra.mxu0 %v1289
        %1690 = vmatprep.subr.mxu0 0.0
        %1691 = vmatpush1.msra.mxu0 %v1294
        %1692 = vmatprep.subr.mxu0 0.0
        %1693 = vmatpush1.msra.mxu0 %v1299
        %1694 = vmatprep.subr.mxu0 0.0
        %1695 = vmatpush1.msra.mxu0 %v1304
        %1696 = vmatprep.subr.mxu0 0.0
        %1697 = vmatpush1.msra.mxu0 %v1309
        %1698 = vmatprep.subr.mxu0 0.0
        %1699 = vmatpush1.msra.mxu0 0.0
        %1700 = vmatprep.subr.mxu0 0.0
        %1701 = vmatpush1.msra.mxu0 0.0
        %1702 = vmatprep.subr.mxu0 0.0
        %1703 = vmatpush1.msra.mxu0 0.0
        %1704 = vmatprep.subr.mxu0 0.0
        %1705 = vmatpush1.msra.mxu0 0.0
        %1706 = vmatprep.subr.mxu0 0.0
        %1707 = vmatpush1.msra.mxu0 0.0
        %1708 = vmatprep.subr.mxu0 0.0
        %1709 = vmatpush1.msra.mxu0 0.0
        %1710 = vmatprep.subr.mxu0 0.0
        %1711 = vmatpush1.msra.mxu0 0.0
        %1712 = vmatprep.subr.mxu0 0.0
        %1713 = vmatpush1.msra.mxu0 0.0
        %1714 = vmatprep.subr.mxu0 0.0
        %1715 = vmatpush1.msra.mxu0 0.0
        %1716 = vmatprep.subr.mxu0 0.0
        %1717 = vmatpush1.msra.mxu0 0.0
        %1718 = vmatprep.subr.mxu0 0.0
        %1719 = vmatpush1.msra.mxu0 0.0
        %1720 = vmatprep.subr.mxu0 0.0
        %1721 = vmatpush1.msra.mxu0 0.0
        %1722 = vmatprep.subr.mxu0 0.0
        %1723 = vmatpush1.msra.mxu0 0.0
        %1724 = vmatprep.subr.mxu0 0.0
        %1725 = vmatpush1.msra.mxu0 0.0
        %1726 = vmatprep.subr.mxu0 0.0
        %1727 = vmatpush1.msra.mxu0 0.0
        %1728 = vmatprep.subr.mxu0 0.0
        %1729 = vmatpush1.msra.mxu0 0.0
        %1730 = vmatprep.mubr.f32.mxu0 0.0
        %1731 = vmatmul.mubr.f32.gmra.mrb[0].mxu0 %v1595
        %v1732 = vpop.f32.mrb[0].mxu0
        %v1733 = vadd.f32 0.0, %v1732
        %v1734 = vpop.f32.mrb[0].mxu0
        %1735 = vdwg.mxu0
        %1736 = vrot.lane.b32.xlu0 %v660, 96
        %v1737 = vpop.permute.xlu0 %1736
        %1738 = vrot.lane.b32.xlu0 %v829, 96
        %v1739 = vpop.permute.xlu0 %1738
        %1740 = vrot.lane.b32.xlu0 %v834, 96
        %v1741 = vpop.permute.xlu0 %1740
        %1742 = vrot.lane.b32.xlu0 %v839, 96
        %v1743 = vpop.permute.xlu0 %1742
        %1744 = vrot.lane.b32.xlu0 %v844, 96
        %v1745 = vpop.permute.xlu0 %1744
        %1746 = vrot.lane.b32.xlu0 %v849, 96
        %v1747 = vpop.permute.xlu0 %1746
        %1748 = vrot.lane.b32.xlu0 %v854, 96
        %v1749 = vpop.permute.xlu0 %1748
        %1750 = vrot.lane.b32.xlu0 %v859, 96
        %v1751 = vpop.permute.xlu0 %1750
        %1752 = vrot.lane.b32.xlu0 %v864, 96
        %v1753 = vpop.permute.xlu0 %1752
        %1754 = vrot.lane.b32.xlu0 %v869, 96
        %v1755 = vpop.permute.xlu0 %1754
        %1756 = vrot.lane.b32.xlu0 %v874, 96
        %v1757 = vpop.permute.xlu0 %1756
        %1758 = vrot.lane.b32.xlu0 %v879, 96
        %v1759 = vpop.permute.xlu0 %1758
        %1760 = vrot.lane.b32.xlu0 %v884, 96
        %v1761 = vpop.permute.xlu0 %1760
        %1762 = vrot.lane.b32.xlu0 %v889, 96
        %v1763 = vpop.permute.xlu0 %1762
        %1764 = vrot.lane.b32.xlu0 %v894, 96
        %v1765 = vpop.permute.xlu0 %1764
        %1766 = vrot.lane.b32.xlu0 %v899, 96
        %v1767 = vpop.permute.xlu0 %1766
        %1768 = vrot.lane.b32.xlu0 %v904, 96
        %v1769 = vpop.permute.xlu0 %1768
        %v1770 = vsel %vm578, %v1737, 0
        %v1772 = vsel %vm578, %v1739, 0
        %v1774 = vsel %vm578, %v1741, 0
        %v1776 = vsel %vm578, %v1743, 0
        %v1778 = vsel %vm578, %v1745, 0
        %v1780 = vsel %vm578, %v1747, 0
        %v1782 = vsel %vm578, %v1749, 0
        %v1784 = vsel %vm578, %v1751, 0
        %v1786 = vsel %vm578, %v1753, 0
        %v1788 = vsel %vm578, %v1755, 0
        %v1790 = vsel %vm578, %v1757, 0
        %v1792 = vsel %vm578, %v1759, 0
        %v1794 = vsel %vm578, %v1761, 0
        %v1796 = vsel %vm578, %v1763, 0
        %v1798 = vsel %vm578, %v1765, 0
        %v1800 = vsel %vm578, %v1767, 0
        %v1802 = vsel %vm578, %v1769, 0
        %1804 = vmatprep.subr.mxu0 0.0
        %1805 = vmatpush1.xpose.msra.mxu0 %v1772
        %1806 = vmatprep.subr.mxu0 0.0
        %1807 = vmatpush1.xpose.msra.mxu0 %v1774
        %1808 = vmatprep.subr.mxu0 0.0
        %1809 = vmatpush1.xpose.msra.mxu0 %v1776
        %1810 = vmatprep.subr.mxu0 0.0
        %1811 = vmatpush1.xpose.msra.mxu0 %v1778
        %1812 = vmatprep.subr.mxu0 0.0
        %1813 = vmatpush1.xpose.msra.mxu0 %v1780
        %1814 = vmatprep.subr.mxu0 0.0
        %1815 = vmatpush1.xpose.msra.mxu0 %v1782
        %1816 = vmatprep.subr.mxu0 0.0
        %1817 = vmatpush1.xpose.msra.mxu0 %v1784
        %1818 = vmatprep.subr.mxu0 0.0
        %1819 = vmatpush1.xpose.msra.mxu0 %v1786
        %1820 = vmatprep.subr.mxu0 0.0
        %1821 = vmatpush1.xpose.msra.mxu0 %v1788
        %1822 = vmatprep.subr.mxu0 0.0
        %1823 = vmatpush1.xpose.msra.mxu0 %v1790
        %1824 = vmatprep.subr.mxu0 0.0
        %1825 = vmatpush1.xpose.msra.mxu0 %v1792
        %1826 = vmatprep.subr.mxu0 0.0
        %1827 = vmatpush1.xpose.msra.mxu0 %v1794
        %1828 = vmatprep.subr.mxu0 0.0
        %1829 = vmatpush1.xpose.msra.mxu0 %v1796
        %1830 = vmatprep.subr.mxu0 0.0
        %1831 = vmatpush1.xpose.msra.mxu0 %v1798
        %1832 = vmatprep.subr.mxu0 0.0
        %1833 = vmatpush1.xpose.msra.mxu0 %v1800
        %1834 = vmatprep.subr.mxu0 0.0
        %1835 = vmatpush1.xpose.msra.mxu0 %v1802
        %1836 = vmatprep.subr.mxu0 0.0
        %1837 = vmatpush1.xpose.msra.mxu0 0.0
        %1838 = vmatprep.subr.mxu0 0.0
        %1839 = vmatpush1.xpose.msra.mxu0 0.0
        %1840 = vmatprep.subr.mxu0 0.0
        %1841 = vmatpush1.xpose.msra.mxu0 0.0
        %1842 = vmatprep.subr.mxu0 0.0
        %1843 = vmatpush1.xpose.msra.mxu0 0.0
        %1844 = vmatprep.subr.mxu0 0.0
        %1845 = vmatpush1.xpose.msra.mxu0 0.0
        %1846 = vmatprep.subr.mxu0 0.0
        %1847 = vmatpush1.xpose.msra.mxu0 0.0
        %1848 = vmatprep.subr.mxu0 0.0
        %1849 = vmatpush1.xpose.msra.mxu0 0.0
        %1850 = vmatprep.subr.mxu0 0.0
        %1851 = vmatpush1.xpose.msra.mxu0 0.0
        %1852 = vmatprep.subr.mxu0 0.0
        %1853 = vmatpush1.xpose.msra.mxu0 0.0
        %1854 = vmatprep.subr.mxu0 0.0
        %1855 = vmatpush1.xpose.msra.mxu0 0.0
        %1856 = vmatprep.subr.mxu0 0.0
        %1857 = vmatpush1.xpose.msra.mxu0 0.0
        %1858 = vmatprep.subr.mxu0 0.0
        %1859 = vmatpush1.xpose.msra.mxu0 0.0
        %1860 = vmatprep.subr.mxu0 0.0
        %1861 = vmatpush1.xpose.msra.mxu0 0.0
        %1862 = vmatprep.subr.mxu0 0.0
        %1863 = vmatpush1.xpose.msra.mxu0 0.0
        %1864 = vmatprep.subr.mxu0 0.0
        %1865 = vmatpush1.xpose.msra.mxu0 0.0
        %1866 = vmatprep.subr.mxu0 0.0
        %1867 = vmatpush1.xpose.msra.mxu0 0.0
        %1868 = vmatprep.mubr.f32.mxu0 0.0
        %1869 = vmatmul.mubr.f32.gmra.mrb[0].mxu0 %v1770
        %v1870 = vpop.f32.mrb[0].mxu0
        %v1871 = vadd.f32 0.0, %v1870
        %v1872 = vpop.f32.mrb[0].mxu0
        %1873 = vdwg.mxu0
        %1874 = vrot.lane.b32.xlu0 %v661, 96
        %v1875 = vpop.permute.xlu0 %1874
        %1876 = vrot.lane.b32.xlu0 %v909, 96
        %v1877 = vpop.permute.xlu0 %1876
        %1878 = vrot.lane.b32.xlu0 %v914, 96
        %v1879 = vpop.permute.xlu0 %1878
        %1880 = vrot.lane.b32.xlu0 %v919, 96
        %v1881 = vpop.permute.xlu0 %1880
        %1882 = vrot.lane.b32.xlu0 %v924, 96
        %v1883 = vpop.permute.xlu0 %1882
        %1884 = vrot.lane.b32.xlu0 %v929, 96
        %v1885 = vpop.permute.xlu0 %1884
        %1886 = vrot.lane.b32.xlu0 %v934, 96
        %v1887 = vpop.permute.xlu0 %1886
        %1888 = vrot.lane.b32.xlu0 %v939, 96
        %v1889 = vpop.permute.xlu0 %1888
        %1890 = vrot.lane.b32.xlu0 %v944, 96
        %v1891 = vpop.permute.xlu0 %1890
        %1892 = vrot.lane.b32.xlu0 %v949, 96
        %v1893 = vpop.permute.xlu0 %1892
        %1894 = vrot.lane.b32.xlu0 %v954, 96
        %v1895 = vpop.permute.xlu0 %1894
        %1896 = vrot.lane.b32.xlu0 %v959, 96
        %v1897 = vpop.permute.xlu0 %1896
        %1898 = vrot.lane.b32.xlu0 %v964, 96
        %v1899 = vpop.permute.xlu0 %1898
        %1900 = vrot.lane.b32.xlu0 %v969, 96
        %v1901 = vpop.permute.xlu0 %1900
        %1902 = vrot.lane.b32.xlu0 %v974, 96
        %v1903 = vpop.permute.xlu0 %1902
        %1904 = vrot.lane.b32.xlu0 %v979, 96
        %v1905 = vpop.permute.xlu0 %1904
        %1906 = vrot.lane.b32.xlu0 %v984, 96
        %v1907 = vpop.permute.xlu0 %1906
        %v1908 = vsel %vm578, %v1875, 0
        %v1910 = vsel %vm578, %v1877, 0
        %v1912 = vsel %vm578, %v1879, 0
        %v1914 = vsel %vm578, %v1881, 0
        %v1916 = vsel %vm578, %v1883, 0
        %v1918 = vsel %vm578, %v1885, 0
        %v1920 = vsel %vm578, %v1887, 0
        %v1922 = vsel %vm578, %v1889, 0
        %v1924 = vsel %vm578, %v1891, 0
        %v1926 = vsel %vm578, %v1893, 0
        %v1928 = vsel %vm578, %v1895, 0
        %v1930 = vsel %vm578, %v1897, 0
        %v1932 = vsel %vm578, %v1899, 0
        %v1934 = vsel %vm578, %v1901, 0
        %v1936 = vsel %vm578, %v1903, 0
        %v1938 = vsel %vm578, %v1905, 0
        %v1940 = vsel %vm578, %v1907, 0
        %1942 = vmatprep.subr.mxu0 0.0
        %1943 = vmatpush1.xpose.msra.mxu0 %v1910
        %1944 = vmatprep.subr.mxu0 0.0
        %1945 = vmatpush1.xpose.msra.mxu0 %v1912
        %1946 = vmatprep.subr.mxu0 0.0
        %1947 = vmatpush1.xpose.msra.mxu0 %v1914
        %1948 = vmatprep.subr.mxu0 0.0
        %1949 = vmatpush1.xpose.msra.mxu0 %v1916
        %1950 = vmatprep.subr.mxu0 0.0
        %1951 = vmatpush1.xpose.msra.mxu0 %v1918
        %1952 = vmatprep.subr.mxu0 0.0
        %1953 = vmatpush1.xpose.msra.mxu0 %v1920
        %1954 = vmatprep.subr.mxu0 0.0
        %1955 = vmatpush1.xpose.msra.mxu0 %v1922
        %1956 = vmatprep.subr.mxu0 0.0
        %1957 = vmatpush1.xpose.msra.mxu0 %v1924
        %1958 = vmatprep.subr.mxu0 0.0
        %1959 = vmatpush1.xpose.msra.mxu0 %v1926
        %1960 = vmatprep.subr.mxu0 0.0
        %1961 = vmatpush1.xpose.msra.mxu0 %v1928
        %1962 = vmatprep.subr.mxu0 0.0
        %1963 = vmatpush1.xpose.msra.mxu0 %v1930
        %1964 = vmatprep.subr.mxu0 0.0
        %1965 = vmatpush1.xpose.msra.mxu0 %v1932
        %1966 = vmatprep.subr.mxu0 0.0
        %1967 = vmatpush1.xpose.msra.mxu0 %v1934
        %1968 = vmatprep.subr.mxu0 0.0
        %1969 = vmatpush1.xpose.msra.mxu0 %v1936
        %1970 = vmatprep.subr.mxu0 0.0
        %1971 = vmatpush1.xpose.msra.mxu0 %v1938
        %1972 = vmatprep.subr.mxu0 0.0
        %1973 = vmatpush1.xpose.msra.mxu0 %v1940
        %1974 = vmatprep.subr.mxu0 0.0
        %1975 = vmatpush1.xpose.msra.mxu0 0.0
        %1976 = vmatprep.subr.mxu0 0.0
        %1977 = vmatpush1.xpose.msra.mxu0 0.0
        %1978 = vmatprep.subr.mxu0 0.0
        %1979 = vmatpush1.xpose.msra.mxu0 0.0
        %1980 = vmatprep.subr.mxu0 0.0
        %1981 = vmatpush1.xpose.msra.mxu0 0.0
        %1982 = vmatprep.subr.mxu0 0.0
        %1983 = vmatpush1.xpose.msra.mxu0 0.0
        %1984 = vmatprep.subr.mxu0 0.0
        %1985 = vmatpush1.xpose.msra.mxu0 0.0
        %1986 = vmatprep.subr.mxu0 0.0
        %1987 = vmatpush1.xpose.msra.mxu0 0.0
        %1988 = vmatprep.subr.mxu0 0.0
        %1989 = vmatpush1.xpose.msra.mxu0 0.0
        %1990 = vmatprep.subr.mxu0 0.0
        %1991 = vmatpush1.xpose.msra.mxu0 0.0
        %1992 = vmatprep.subr.mxu0 0.0
        %1993 = vmatpush1.xpose.msra.mxu0 0.0
        %1994 = vmatprep.subr.mxu0 0.0
        %1995 = vmatpush1.xpose.msra.mxu0 0.0
        %1996 = vmatprep.subr.mxu0 0.0
        %1997 = vmatpush1.xpose.msra.mxu0 0.0
        %1998 = vmatprep.subr.mxu0 0.0
        %1999 = vmatpush1.xpose.msra.mxu0 0.0
        %2000 = vmatprep.subr.mxu0 0.0
        %2001 = vmatpush1.xpose.msra.mxu0 0.0
        %2002 = vmatprep.subr.mxu0 0.0
        %2003 = vmatpush1.xpose.msra.mxu0 0.0
        %2004 = vmatprep.subr.mxu0 0.0
        %2005 = vmatpush1.xpose.msra.mxu0 0.0
        %2006 = vmatprep.mubr.f32.mxu0 0.0
        %2007 = vmatmul.mubr.f32.gmra.mrb[0].mxu0 %v1908
        %v2008 = vpop.f32.mrb[0].mxu0
        %v2009 = vadd.f32 0.0, %v2008
        %v2010 = vpop.f32.mrb[0].mxu0
        %2011 = vdwg.mxu0
        %v2012 = vadd.f32 %v1574, %v1871
        %v2013 = vadd.f32 %v1575, %v2009
        %v2014 = vadd.f32 %v1871, %v1331
        %v2015 = vadd.f32 %v2009, %v1331
        %2016 = vmax.xlane.f32.xlu0 %v2014
        %v2017 = vpop.xlane.xlu0 %2016
        %2018 = vmax.xlane.f32.xlu0 %v2015
        %v2019 = vpop.xlane.xlu0 %2018
        %v2020 = vsub.f32 %v2014, %v2017
        %v2021 = vsub.f32 %v2015, %v2019
        %v2022 = vmul.f32 %v2020, 1.442695
        %v2023 = vpow.pop %v2022
        %v2024 = vmul.f32 %v2021, 1.442695
        %v2025 = vpow.pop %v2024
        %2026 = vadd.xlane.f32.xlu0 %v2023
        %v2027 = vpop.xlane.xlu0 %2026
        %2028 = vadd.xlane.f32.xlu0 %v2025
        %v2029 = vpop.xlane.xlu0 %2028
        %v2030 = vrcp.pop %v2027
        %v2031 = vrcp.pop %v2029
        %v2032 = vmul.f32 %v2023, %v2030
        %v2033 = vmul.f32 %v2025, %v2031
        %2050 = vrot.lane.b32.xlu0 %v1154, 96
        %v2051 = vpop.permute.xlu0 %2050
        %2052 = vrot.lane.b32.xlu0 %v1159, 96
        %v2053 = vpop.permute.xlu0 %2052
        %2054 = vrot.lane.b32.xlu0 %v1164, 96
        %v2055 = vpop.permute.xlu0 %2054
        %2056 = vrot.lane.b32.xlu0 %v1169, 96
        %v2057 = vpop.permute.xlu0 %2056
        %2058 = vrot.lane.b32.xlu0 %v1174, 96
        %v2059 = vpop.permute.xlu0 %2058
        %2060 = vrot.lane.b32.xlu0 %v1179, 96
        %v2061 = vpop.permute.xlu0 %2060
        %2062 = vrot.lane.b32.xlu0 %v1184, 96
        %v2063 = vpop.permute.xlu0 %2062
        %2064 = vrot.lane.b32.xlu0 %v1189, 96
        %v2065 = vpop.permute.xlu0 %2064
        %2066 = vrot.lane.b32.xlu0 %v1194, 96
        %v2067 = vpop.permute.xlu0 %2066
        %2068 = vrot.lane.b32.xlu0 %v1199, 96
        %v2069 = vpop.permute.xlu0 %2068
        %2070 = vrot.lane.b32.xlu0 %v1204, 96
        %v2071 = vpop.permute.xlu0 %2070
        %2072 = vrot.lane.b32.xlu0 %v1209, 96
        %v2073 = vpop.permute.xlu0 %2072
        %2074 = vrot.lane.b32.xlu0 %v1214, 96
        %v2075 = vpop.permute.xlu0 %2074
        %2076 = vrot.lane.b32.xlu0 %v1219, 96
        %v2077 = vpop.permute.xlu0 %2076
        %2078 = vrot.lane.b32.xlu0 %v1224, 96
        %v2079 = vpop.permute.xlu0 %2078
        %2080 = vrot.lane.b32.xlu0 %v1229, 96
        %v2081 = vpop.permute.xlu0 %2080
        %2098 = vmatprep.subr.mxu0 0.0
        %2099 = vmatpush1.msra.mxu0 %v2051
        %2100 = vmatprep.subr.mxu0 0.0
        %2101 = vmatpush1.msra.mxu0 %v2053
        %2102 = vmatprep.subr.mxu0 0.0
        %2103 = vmatpush1.msra.mxu0 %v2055
        %2104 = vmatprep.subr.mxu0 0.0
        %2105 = vmatpush1.msra.mxu0 %v2057
        %2106 = vmatprep.subr.mxu0 0.0
        %2107 = vmatpush1.msra.mxu0 %v2059
        %2108 = vmatprep.subr.mxu0 0.0
        %2109 = vmatpush1.msra.mxu0 %v2061
        %2110 = vmatprep.subr.mxu0 0.0
        %2111 = vmatpush1.msra.mxu0 %v2063
        %2112 = vmatprep.subr.mxu0 0.0
        %2113 = vmatpush1.msra.mxu0 %v2065
        %2114 = vmatprep.subr.mxu0 0.0
        %2115 = vmatpush1.msra.mxu0 %v2067
        %2116 = vmatprep.subr.mxu0 0.0
        %2117 = vmatpush1.msra.mxu0 %v2069
        %2118 = vmatprep.subr.mxu0 0.0
        %2119 = vmatpush1.msra.mxu0 %v2071
        %2120 = vmatprep.subr.mxu0 0.0
        %2121 = vmatpush1.msra.mxu0 %v2073
        %2122 = vmatprep.subr.mxu0 0.0
        %2123 = vmatpush1.msra.mxu0 %v2075
        %2124 = vmatprep.subr.mxu0 0.0
        %2125 = vmatpush1.msra.mxu0 %v2077
        %2126 = vmatprep.subr.mxu0 0.0
        %2127 = vmatpush1.msra.mxu0 %v2079
        %2128 = vmatprep.subr.mxu0 0.0
        %2129 = vmatpush1.msra.mxu0 %v2081
        %2130 = vmatprep.subr.mxu0 0.0
        %2131 = vmatpush1.msra.mxu0 0.0
        %2132 = vmatprep.subr.mxu0 0.0
        %2133 = vmatpush1.msra.mxu0 0.0
        %2134 = vmatprep.subr.mxu0 0.0
        %2135 = vmatpush1.msra.mxu0 0.0
        %2136 = vmatprep.subr.mxu0 0.0
        %2137 = vmatpush1.msra.mxu0 0.0
        %2138 = vmatprep.subr.mxu0 0.0
        %2139 = vmatpush1.msra.mxu0 0.0
        %2140 = vmatprep.subr.mxu0 0.0
        %2141 = vmatpush1.msra.mxu0 0.0
        %2142 = vmatprep.subr.mxu0 0.0
        %2143 = vmatpush1.msra.mxu0 0.0
        %2144 = vmatprep.subr.mxu0 0.0
        %2145 = vmatpush1.msra.mxu0 0.0
        %2146 = vmatprep.subr.mxu0 0.0
        %2147 = vmatpush1.msra.mxu0 0.0
        %2148 = vmatprep.subr.mxu0 0.0
        %2149 = vmatpush1.msra.mxu0 0.0
        %2150 = vmatprep.subr.mxu0 0.0
        %2151 = vmatpush1.msra.mxu0 0.0
        %2152 = vmatprep.subr.mxu0 0.0
        %2153 = vmatpush1.msra.mxu0 0.0
        %2154 = vmatprep.subr.mxu0 0.0
        %2155 = vmatpush1.msra.mxu0 0.0
        %2156 = vmatprep.subr.mxu0 0.0
        %2157 = vmatpush1.msra.mxu0 0.0
        %2158 = vmatprep.subr.mxu0 0.0
        %2159 = vmatpush1.msra.mxu0 0.0
        %2160 = vmatprep.subr.mxu0 0.0
        %2161 = vmatpush1.msra.mxu0 0.0
        %2162 = vmatprep.mubr.f32.mxu0 0.0
        %2163 = vmatmul.mubr.f32.gmra.mrb[0].mxu0 %v2032
        %v2164 = vpop.f32.mrb[0].mxu0
        %v2165 = vadd.f32 0.0, %v2164
        %v2166 = vpop.f32.mrb[0].mxu0
        %2167 = vdwg.mxu0
        %2184 = vrot.lane.b32.xlu0 %v1234, 96
        %v2185 = vpop.permute.xlu0 %2184
        %2186 = vrot.lane.b32.xlu0 %v1239, 96
        %v2187 = vpop.permute.xlu0 %2186
        %2188 = vrot.lane.b32.xlu0 %v1244, 96
        %v2189 = vpop.permute.xlu0 %2188
        %2190 = vrot.lane.b32.xlu0 %v1249, 96
        %v2191 = vpop.permute.xlu0 %2190
        %2192 = vrot.lane.b32.xlu0 %v1254, 96
        %v2193 = vpop.permute.xlu0 %2192
        %2194 = vrot.lane.b32.xlu0 %v1259, 96
        %v2195 = vpop.permute.xlu0 %2194
        %2196 = vrot.lane.b32.xlu0 %v1264, 96
        %v2197 = vpop.permute.xlu0 %2196
        %2198 = vrot.lane.b32.xlu0 %v1269, 96
        %v2199 = vpop.permute.xlu0 %2198
        %2200 = vrot.lane.b32.xlu0 %v1274, 96
        %v2201 = vpop.permute.xlu0 %2200
        %2202 = vrot.lane.b32.xlu0 %v1279, 96
        %v2203 = vpop.permute.xlu0 %2202
        %2204 = vrot.lane.b32.xlu0 %v1284, 96
        %v2205 = vpop.permute.xlu0 %2204
        %2206 = vrot.lane.b32.xlu0 %v1289, 96
        %v2207 = vpop.permute.xlu0 %2206
        %2208 = vrot.lane.b32.xlu0 %v1294, 96
        %v2209 = vpop.permute.xlu0 %2208
        %2210 = vrot.lane.b32.xlu0 %v1299, 96
        %v2211 = vpop.permute.xlu0 %2210
        %2212 = vrot.lane.b32.xlu0 %v1304, 96
        %v2213 = vpop.permute.xlu0 %2212
        %2214 = vrot.lane.b32.xlu0 %v1309, 96
        %v2215 = vpop.permute.xlu0 %2214
        %2232 = vmatprep.subr.mxu0 0.0
        %2233 = vmatpush1.msra.mxu0 %v2185
        %2234 = vmatprep.subr.mxu0 0.0
        %2235 = vmatpush1.msra.mxu0 %v2187
        %2236 = vmatprep.subr.mxu0 0.0
        %2237 = vmatpush1.msra.mxu0 %v2189
        %2238 = vmatprep.subr.mxu0 0.0
        %2239 = vmatpush1.msra.mxu0 %v2191
        %2240 = vmatprep.subr.mxu0 0.0
        %2241 = vmatpush1.msra.mxu0 %v2193
        %2242 = vmatprep.subr.mxu0 0.0
        %2243 = vmatpush1.msra.mxu0 %v2195
        %2244 = vmatprep.subr.mxu0 0.0
        %2245 = vmatpush1.msra.mxu0 %v2197
        %2246 = vmatprep.subr.mxu0 0.0
        %2247 = vmatpush1.msra.mxu0 %v2199
        %2248 = vmatprep.subr.mxu0 0.0
        %2249 = vmatpush1.msra.mxu0 %v2201
        %2250 = vmatprep.subr.mxu0 0.0
        %2251 = vmatpush1.msra.mxu0 %v2203
        %2252 = vmatprep.subr.mxu0 0.0
        %2253 = vmatpush1.msra.mxu0 %v2205
        %2254 = vmatprep.subr.mxu0 0.0
        %2255 = vmatpush1.msra.mxu0 %v2207
        %2256 = vmatprep.subr.mxu0 0.0
        %2257 = vmatpush1.msra.mxu0 %v2209
        %2258 = vmatprep.subr.mxu0 0.0
        %2259 = vmatpush1.msra.mxu0 %v2211
        %2260 = vmatprep.subr.mxu0 0.0
        %2261 = vmatpush1.msra.mxu0 %v2213
        %2262 = vmatprep.subr.mxu0 0.0
        %2263 = vmatpush1.msra.mxu0 %v2215
        %2264 = vmatprep.subr.mxu0 0.0
        %2265 = vmatpush1.msra.mxu0 0.0
        %2266 = vmatprep.subr.mxu0 0.0
        %2267 = vmatpush1.msra.mxu0 0.0
        %2268 = vmatprep.subr.mxu0 0.0
        %2269 = vmatpush1.msra.mxu0 0.0
        %2270 = vmatprep.subr.mxu0 0.0
        %2271 = vmatpush1.msra.mxu0 0.0
        %2272 = vmatprep.subr.mxu0 0.0
        %2273 = vmatpush1.msra.mxu0 0.0
        %2274 = vmatprep.subr.mxu0 0.0
        %2275 = vmatpush1.msra.mxu0 0.0
        %2276 = vmatprep.subr.mxu0 0.0
        %2277 = vmatpush1.msra.mxu0 0.0
        %2278 = vmatprep.subr.mxu0 0.0
        %2279 = vmatpush1.msra.mxu0 0.0
        %2280 = vmatprep.subr.mxu0 0.0
        %2281 = vmatpush1.msra.mxu0 0.0
        %2282 = vmatprep.subr.mxu0 0.0
        %2283 = vmatpush1.msra.mxu0 0.0
        %2284 = vmatprep.subr.mxu0 0.0
        %2285 = vmatpush1.msra.mxu0 0.0
        %2286 = vmatprep.subr.mxu0 0.0
        %2287 = vmatpush1.msra.mxu0 0.0
        %2288 = vmatprep.subr.mxu0 0.0
        %2289 = vmatpush1.msra.mxu0 0.0
        %2290 = vmatprep.subr.mxu0 0.0
        %2291 = vmatpush1.msra.mxu0 0.0
        %2292 = vmatprep.subr.mxu0 0.0
        %2293 = vmatpush1.msra.mxu0 0.0
        %2294 = vmatprep.subr.mxu0 0.0
        %2295 = vmatpush1.msra.mxu0 0.0
        %2296 = vmatprep.mubr.f32.mxu0 0.0
        %2297 = vmatmul.mubr.f32.gmra.mrb[0].mxu0 %v2033
        %v2298 = vpop.f32.mrb[0].mxu0
        %v2299 = vadd.f32 0.0, %v2298
        %v2300 = vpop.f32.mrb[0].mxu0
        %2301 = vdwg.mxu0
        %v2303 = vsel %vm578, %v2165, 0
        %v2306 = vsel %vm578, %v2299, 0
        %2308 = vmatprep.subr.mxu0 0.0
        %2309 = vmatpush1.msra.mxu0 %v1316
        %2310 = vmatprep.subr.mxu0 0.0
        %2311 = vmatpush1.msra.mxu0 %v1317
        %2312 = vmatprep.subr.mxu0 0.0
        %2313 = vmatpush1.msra.mxu0 %v1318
        %2314 = vmatprep.subr.mxu0 0.0
        %2315 = vmatpush1.msra.mxu0 %v1319
        %2316 = vmatprep.subr.mxu0 0.0
        %2317 = vmatpush1.msra.mxu0 0.0
        %2318 = vmatprep.subr.mxu0 0.0
        %2319 = vmatpush1.msra.mxu0 0.0
        %2320 = vmatprep.subr.mxu0 0.0
        %2321 = vmatpush1.msra.mxu0 0.0
        %2322 = vmatprep.subr.mxu0 0.0
        %2323 = vmatpush1.msra.mxu0 0.0
        %2324 = vmatprep.subr.mxu0 0.0
        %2325 = vmatpush1.msra.mxu0 0.0
        %2326 = vmatprep.subr.mxu0 0.0
        %2327 = vmatpush1.msra.mxu0 0.0
        %2328 = vmatprep.subr.mxu0 0.0
        %2329 = vmatpush1.msra.mxu0 0.0
        %2330 = vmatprep.subr.mxu0 0.0
        %2331 = vmatpush1.msra.mxu0 0.0
        %2332 = vmatprep.subr.mxu0 0.0
        %2333 = vmatpush1.msra.mxu0 0.0
        %2334 = vmatprep.subr.mxu0 0.0
        %2335 = vmatpush1.msra.mxu0 0.0
        %2336 = vmatprep.subr.mxu0 0.0
        %2337 = vmatpush1.msra.mxu0 0.0
        %2338 = vmatprep.subr.mxu0 0.0
        %2339 = vmatpush1.msra.mxu0 0.0
        %2340 = vmatprep.subr.mxu0 0.0
        %2341 = vmatpush1.msra.mxu0 0.0
        %2342 = vmatprep.subr.mxu0 0.0
        %2343 = vmatpush1.msra.mxu0 0.0
        %2344 = vmatprep.subr.mxu0 0.0
        %2345 = vmatpush1.msra.mxu0 0.0
        %2346 = vmatprep.subr.mxu0 0.0
        %2347 = vmatpush1.msra.mxu0 0.0
        %2348 = vmatprep.subr.mxu0 0.0
        %2349 = vmatpush1.msra.mxu0 0.0
        %2350 = vmatprep.subr.mxu0 0.0
        %2351 = vmatpush1.msra.mxu0 0.0
        %2352 = vmatprep.subr.mxu0 0.0
        %2353 = vmatpush1.msra.mxu0 0.0
        %2354 = vmatprep.subr.mxu0 0.0
        %2355 = vmatpush1.msra.mxu0 0.0
        %2356 = vmatprep.subr.mxu0 0.0
        %2357 = vmatpush1.msra.mxu0 0.0
        %2358 = vmatprep.subr.mxu0 0.0
        %2359 = vmatpush1.msra.mxu0 0.0
        %2360 = vmatprep.subr.mxu0 0.0
        %2361 = vmatpush1.msra.mxu0 0.0
        %2362 = vmatprep.subr.mxu0 0.0
        %2363 = vmatpush1.msra.mxu0 0.0
        %2364 = vmatprep.subr.mxu0 0.0
        %2365 = vmatpush1.msra.mxu0 0.0
        %2366 = vmatprep.subr.mxu0 0.0
        %2367 = vmatpush1.msra.mxu0 0.0
        %2368 = vmatprep.subr.mxu0 0.0
        %2369 = vmatpush1.msra.mxu0 0.0
        %2370 = vmatprep.subr.mxu0 0.0
        %2371 = vmatpush1.msra.mxu0 0.0
        %2372 = vmatprep.mubr.f32.mxu0 0.0
        %2373 = vmatmul.mubr.f32.gmra.mrb[0].mxu0 %v2303
        %v2374 = vpop.f32.mrb[0].mxu0
        %v2375 = vadd.f32 0.0, %v2374
        %v2376 = vpop.f32.mrb[0].mxu0
        %2377 = vmatprep.mubr.f32.mxu0 0.0
        %2378 = vmatmul.mubr.f32.gmra.mrb[0].mxu0 %v2306
        %v2379 = vpop.f32.mrb[0].mxu0
        %v2380 = vadd.f32 0.0, %v2379
        %v2381 = vpop.f32.mrb[0].mxu0
        %2382 = vdwg.mxu0
        %v2384 = vsel %vm578, %v1663, 0
        %v2387 = vsel %vm578, %v1733, 0
        %2389 = vmatprep.subr.mxu0 0.0
        %2390 = vmatpush1.msra.mxu0 %v1312
        %2391 = vmatprep.subr.mxu0 0.0
        %2392 = vmatpush1.msra.mxu0 %v1313
        %2393 = vmatprep.subr.mxu0 0.0
        %2394 = vmatpush1.msra.mxu0 %v1314
        %2395 = vmatprep.subr.mxu0 0.0
        %2396 = vmatpush1.msra.mxu0 %v1315
        %2397 = vmatprep.subr.mxu0 0.0
        %2398 = vmatpush1.msra.mxu0 0.0
        %2399 = vmatprep.subr.mxu0 0.0
        %2400 = vmatpush1.msra.mxu0 0.0
        %2401 = vmatprep.subr.mxu0 0.0
        %2402 = vmatpush1.msra.mxu0 0.0
        %2403 = vmatprep.subr.mxu0 0.0
        %2404 = vmatpush1.msra.mxu0 0.0
        %2405 = vmatprep.subr.mxu0 0.0
        %2406 = vmatpush1.msra.mxu0 0.0
        %2407 = vmatprep.subr.mxu0 0.0
        %2408 = vmatpush1.msra.mxu0 0.0
        %2409 = vmatprep.subr.mxu0 0.0
        %2410 = vmatpush1.msra.mxu0 0.0
        %2411 = vmatprep.subr.mxu0 0.0
        %2412 = vmatpush1.msra.mxu0 0.0
        %2413 = vmatprep.subr.mxu0 0.0
        %2414 = vmatpush1.msra.mxu0 0.0
        %2415 = vmatprep.subr.mxu0 0.0
        %2416 = vmatpush1.msra.mxu0 0.0
        %2417 = vmatprep.subr.mxu0 0.0
        %2418 = vmatpush1.msra.mxu0 0.0
        %2419 = vmatprep.subr.mxu0 0.0
        %2420 = vmatpush1.msra.mxu0 0.0
        %2421 = vmatprep.subr.mxu0 0.0
        %2422 = vmatpush1.msra.mxu0 0.0
        %2423 = vmatprep.subr.mxu0 0.0
        %2424 = vmatpush1.msra.mxu0 0.0
        %2425 = vmatprep.subr.mxu0 0.0
        %2426 = vmatpush1.msra.mxu0 0.0
        %2427 = vmatprep.subr.mxu0 0.0
        %2428 = vmatpush1.msra.mxu0 0.0
        %2429 = vmatprep.subr.mxu0 0.0
        %2430 = vmatpush1.msra.mxu0 0.0
        %2431 = vmatprep.subr.mxu0 0.0
        %2432 = vmatpush1.msra.mxu0 0.0
        %2433 = vmatprep.subr.mxu0 0.0
        %2434 = vmatpush1.msra.mxu0 0.0
        %2435 = vmatprep.subr.mxu0 0.0
        %2436 = vmatpush1.msra.mxu0 0.0
        %2437 = vmatprep.subr.mxu0 0.0
        %2438 = vmatpush1.msra.mxu0 0.0
        %2439 = vmatprep.subr.mxu0 0.0
        %2440 = vmatpush1.msra.mxu0 0.0
        %2441 = vmatprep.subr.mxu0 0.0
        %2442 = vmatpush1.msra.mxu0 0.0
        %2443 = vmatprep.subr.mxu0 0.0
        %2444 = vmatpush1.msra.mxu0 0.0
        %2445 = vmatprep.subr.mxu0 0.0
        %2446 = vmatpush1.msra.mxu0 0.0
        %2447 = vmatprep.subr.mxu0 0.0
        %2448 = vmatpush1.msra.mxu0 0.0
        %2449 = vmatprep.subr.mxu0 0.0
        %2450 = vmatpush1.msra.mxu0 0.0
        %2451 = vmatprep.subr.mxu0 0.0
        %2452 = vmatpush1.msra.mxu0 0.0
        %2453 = vmatprep.mubr.f32.mxu0 0.0
        %2454 = vmatmul.mubr.f32.gmra.mrb[0].mxu0 %v2384
        %v2455 = vpop.f32.mrb[0].mxu0
        %v2456 = vadd.f32 %v2375, %v2455
        %v2457 = vpop.f32.mrb[0].mxu0
        %2458 = vmatprep.mubr.f32.mxu0 0.0
        %2459 = vmatmul.mubr.f32.gmra.mrb[0].mxu0 %v2387
        %v2460 = vpop.f32.mrb[0].mxu0
        %v2461 = vadd.f32 %v2380, %v2460
        %v2462 = vpop.f32.mrb[0].mxu0
        %2463 = vdwg.mxu0
        %2464 = vrot.lane.b32.xlu0 %v660, 64
        %v2465 = vpop.permute.xlu0 %2464
        %2466 = vrot.lane.b32.xlu0 %v829, 64
        %v2467 = vpop.permute.xlu0 %2466
        %2468 = vrot.lane.b32.xlu0 %v834, 64
        %v2469 = vpop.permute.xlu0 %2468
        %2470 = vrot.lane.b32.xlu0 %v839, 64
        %v2471 = vpop.permute.xlu0 %2470
        %2472 = vrot.lane.b32.xlu0 %v844, 64
        %v2473 = vpop.permute.xlu0 %2472
        %2474 = vrot.lane.b32.xlu0 %v849, 64
        %v2475 = vpop.permute.xlu0 %2474
        %2476 = vrot.lane.b32.xlu0 %v854, 64
        %v2477 = vpop.permute.xlu0 %2476
        %2478 = vrot.lane.b32.xlu0 %v859, 64
        %v2479 = vpop.permute.xlu0 %2478
        %2480 = vrot.lane.b32.xlu0 %v864, 64
        %v2481 = vpop.permute.xlu0 %2480
        %2482 = vrot.lane.b32.xlu0 %v869, 64
        %v2483 = vpop.permute.xlu0 %2482
        %2484 = vrot.lane.b32.xlu0 %v874, 64
        %v2485 = vpop.permute.xlu0 %2484
        %2486 = vrot.lane.b32.xlu0 %v879, 64
        %v2487 = vpop.permute.xlu0 %2486
        %2488 = vrot.lane.b32.xlu0 %v884, 64
        %v2489 = vpop.permute.xlu0 %2488
        %2490 = vrot.lane.b32.xlu0 %v889, 64
        %v2491 = vpop.permute.xlu0 %2490
        %2492 = vrot.lane.b32.xlu0 %v894, 64
        %v2493 = vpop.permute.xlu0 %2492
        %2494 = vrot.lane.b32.xlu0 %v899, 64
        %v2495 = vpop.permute.xlu0 %2494
        %2496 = vrot.lane.b32.xlu0 %v904, 64
        %v2497 = vpop.permute.xlu0 %2496
        %v2498 = vsel %vm578, %v2465, 0
        %v2500 = vsel %vm578, %v2467, 0
        %v2502 = vsel %vm578, %v2469, 0
        %v2504 = vsel %vm578, %v2471, 0
        %v2506 = vsel %vm578, %v2473, 0
        %v2508 = vsel %vm578, %v2475, 0
        %v2510 = vsel %vm578, %v2477, 0
        %v2512 = vsel %vm578, %v2479, 0
        %v2514 = vsel %vm578, %v2481, 0
        %v2516 = vsel %vm578, %v2483, 0
        %v2518 = vsel %vm578, %v2485, 0
        %v2520 = vsel %vm578, %v2487, 0
        %v2522 = vsel %vm578, %v2489, 0
        %v2524 = vsel %vm578, %v2491, 0
        %v2526 = vsel %vm578, %v2493, 0
        %v2528 = vsel %vm578, %v2495, 0
        %v2530 = vsel %vm578, %v2497, 0
        %2532 = vmatprep.subr.mxu0 0.0
        %2533 = vmatpush1.xpose.msra.mxu0 %v2500
        %2534 = vmatprep.subr.mxu0 0.0
        %2535 = vmatpush1.xpose.msra.mxu0 %v2502
        %2536 = vmatprep.subr.mxu0 0.0
        %2537 = vmatpush1.xpose.msra.mxu0 %v2504
        %2538 = vmatprep.subr.mxu0 0.0
        %2539 = vmatpush1.xpose.msra.mxu0 %v2506
        %2540 = vmatprep.subr.mxu0 0.0
        %2541 = vmatpush1.xpose.msra.mxu0 %v2508
        %2542 = vmatprep.subr.mxu0 0.0
        %2543 = vmatpush1.xpose.msra.mxu0 %v2510
        %2544 = vmatprep.subr.mxu0 0.0
        %2545 = vmatpush1.xpose.msra.mxu0 %v2512
        %2546 = vmatprep.subr.mxu0 0.0
        %2547 = vmatpush1.xpose.msra.mxu0 %v2514
        %2548 = vmatprep.subr.mxu0 0.0
        %2549 = vmatpush1.xpose.msra.mxu0 %v2516
        %2550 = vmatprep.subr.mxu0 0.0
        %2551 = vmatpush1.xpose.msra.mxu0 %v2518
        %2552 = vmatprep.subr.mxu0 0.0
        %2553 = vmatpush1.xpose.msra.mxu0 %v2520
        %2554 = vmatprep.subr.mxu0 0.0
        %2555 = vmatpush1.xpose.msra.mxu0 %v2522
        %2556 = vmatprep.subr.mxu0 0.0
        %2557 = vmatpush1.xpose.msra.mxu0 %v2524
        %2558 = vmatprep.subr.mxu0 0.0
        %2559 = vmatpush1.xpose.msra.mxu0 %v2526
        %2560 = vmatprep.subr.mxu0 0.0
        %2561 = vmatpush1.xpose.msra.mxu0 %v2528
        %2562 = vmatprep.subr.mxu0 0.0
        %2563 = vmatpush1.xpose.msra.mxu0 %v2530
        %2564 = vmatprep.subr.mxu0 0.0
        %2565 = vmatpush1.xpose.msra.mxu0 0.0
        %2566 = vmatprep.subr.mxu0 0.0
        %2567 = vmatpush1.xpose.msra.mxu0 0.0
        %2568 = vmatprep.subr.mxu0 0.0
        %2569 = vmatpush1.xpose.msra.mxu0 0.0
        %2570 = vmatprep.subr.mxu0 0.0
        %2571 = vmatpush1.xpose.msra.mxu0 0.0
        %2572 = vmatprep.subr.mxu0 0.0
        %2573 = vmatpush1.xpose.msra.mxu0 0.0
        %2574 = vmatprep.subr.mxu0 0.0
        %2575 = vmatpush1.xpose.msra.mxu0 0.0
        %2576 = vmatprep.subr.mxu0 0.0
        %2577 = vmatpush1.xpose.msra.mxu0 0.0
        %2578 = vmatprep.subr.mxu0 0.0
        %2579 = vmatpush1.xpose.msra.mxu0 0.0
        %2580 = vmatprep.subr.mxu0 0.0
        %2581 = vmatpush1.xpose.msra.mxu0 0.0
        %2582 = vmatprep.subr.mxu0 0.0
        %2583 = vmatpush1.xpose.msra.mxu0 0.0
        %2584 = vmatprep.subr.mxu0 0.0
        %2585 = vmatpush1.xpose.msra.mxu0 0.0
        %2586 = vmatprep.subr.mxu0 0.0
        %2587 = vmatpush1.xpose.msra.mxu0 0.0
        %2588 = vmatprep.subr.mxu0 0.0
        %2589 = vmatpush1.xpose.msra.mxu0 0.0
        %2590 = vmatprep.subr.mxu0 0.0
        %2591 = vmatpush1.xpose.msra.mxu0 0.0
        %2592 = vmatprep.subr.mxu0 0.0
        %2593 = vmatpush1.xpose.msra.mxu0 0.0
        %2594 = vmatprep.subr.mxu0 0.0
        %2595 = vmatpush1.xpose.msra.mxu0 0.0
        %2596 = vmatprep.mubr.f32.mxu0 0.0
        %2597 = vmatmul.mubr.f32.gmra.mrb[0].mxu0 %v2498
        %v2598 = vpop.f32.mrb[0].mxu0
        %v2599 = vadd.f32 0.0, %v2598
        %v2600 = vpop.f32.mrb[0].mxu0
        %2601 = vdwg.mxu0
        %2602 = vrot.lane.b32.xlu0 %v661, 64
        %v2603 = vpop.permute.xlu0 %2602
        %2604 = vrot.lane.b32.xlu0 %v909, 64
        %v2605 = vpop.permute.xlu0 %2604
        %2606 = vrot.lane.b32.xlu0 %v914, 64
        %v2607 = vpop.permute.xlu0 %2606
        %2608 = vrot.lane.b32.xlu0 %v919, 64
        %v2609 = vpop.permute.xlu0 %2608
        %2610 = vrot.lane.b32.xlu0 %v924, 64
        %v2611 = vpop.permute.xlu0 %2610
        %2612 = vrot.lane.b32.xlu0 %v929, 64
        %v2613 = vpop.permute.xlu0 %2612
        %2614 = vrot.lane.b32.xlu0 %v934, 64
        %v2615 = vpop.permute.xlu0 %2614
        %2616 = vrot.lane.b32.xlu0 %v939, 64
        %v2617 = vpop.permute.xlu0 %2616
        %2618 = vrot.lane.b32.xlu0 %v944, 64
        %v2619 = vpop.permute.xlu0 %2618
        %2620 = vrot.lane.b32.xlu0 %v949, 64
        %v2621 = vpop.permute.xlu0 %2620
        %2622 = vrot.lane.b32.xlu0 %v954, 64
        %v2623 = vpop.permute.xlu0 %2622
        %2624 = vrot.lane.b32.xlu0 %v959, 64
        %v2625 = vpop.permute.xlu0 %2624
        %2626 = vrot.lane.b32.xlu0 %v964, 64
        %v2627 = vpop.permute.xlu0 %2626
        %2628 = vrot.lane.b32.xlu0 %v969, 64
        %v2629 = vpop.permute.xlu0 %2628
        %2630 = vrot.lane.b32.xlu0 %v974, 64
        %v2631 = vpop.permute.xlu0 %2630
        %2632 = vrot.lane.b32.xlu0 %v979, 64
        %v2633 = vpop.permute.xlu0 %2632
        %2634 = vrot.lane.b32.xlu0 %v984, 64
        %v2635 = vpop.permute.xlu0 %2634
        %v2636 = vsel %vm578, %v2603, 0
        %v2638 = vsel %vm578, %v2605, 0
        %v2640 = vsel %vm578, %v2607, 0
        %v2642 = vsel %vm578, %v2609, 0
        %v2644 = vsel %vm578, %v2611, 0
        %v2646 = vsel %vm578, %v2613, 0
        %v2648 = vsel %vm578, %v2615, 0
        %v2650 = vsel %vm578, %v2617, 0
        %v2652 = vsel %vm578, %v2619, 0
        %v2654 = vsel %vm578, %v2621, 0
        %v2656 = vsel %vm578, %v2623, 0
        %v2658 = vsel %vm578, %v2625, 0
        %v2660 = vsel %vm578, %v2627, 0
        %v2662 = vsel %vm578, %v2629, 0
        %v2664 = vsel %vm578, %v2631, 0
        %v2666 = vsel %vm578, %v2633, 0
        %v2668 = vsel %vm578, %v2635, 0
        %2670 = vmatprep.subr.mxu0 0.0
        %2671 = vmatpush1.xpose.msra.mxu0 %v2638
        %2672 = vmatprep.subr.mxu0 0.0
        %2673 = vmatpush1.xpose.msra.mxu0 %v2640
        %2674 = vmatprep.subr.mxu0 0.0
        %2675 = vmatpush1.xpose.msra.mxu0 %v2642
        %2676 = vmatprep.subr.mxu0 0.0
        %2677 = vmatpush1.xpose.msra.mxu0 %v2644
        %2678 = vmatprep.subr.mxu0 0.0
        %2679 = vmatpush1.xpose.msra.mxu0 %v2646
        %2680 = vmatprep.subr.mxu0 0.0
        %2681 = vmatpush1.xpose.msra.mxu0 %v2648
        %2682 = vmatprep.subr.mxu0 0.0
        %2683 = vmatpush1.xpose.msra.mxu0 %v2650
        %2684 = vmatprep.subr.mxu0 0.0
        %2685 = vmatpush1.xpose.msra.mxu0 %v2652
        %2686 = vmatprep.subr.mxu0 0.0
        %2687 = vmatpush1.xpose.msra.mxu0 %v2654
        %2688 = vmatprep.subr.mxu0 0.0
        %2689 = vmatpush1.xpose.msra.mxu0 %v2656
        %2690 = vmatprep.subr.mxu0 0.0
        %2691 = vmatpush1.xpose.msra.mxu0 %v2658
        %2692 = vmatprep.subr.mxu0 0.0
        %2693 = vmatpush1.xpose.msra.mxu0 %v2660
        %2694 = vmatprep.subr.mxu0 0.0
        %2695 = vmatpush1.xpose.msra.mxu0 %v2662
        %2696 = vmatprep.subr.mxu0 0.0
        %2697 = vmatpush1.xpose.msra.mxu0 %v2664
        %2698 = vmatprep.subr.mxu0 0.0
        %2699 = vmatpush1.xpose.msra.mxu0 %v2666
        %2700 = vmatprep.subr.mxu0 0.0
        %2701 = vmatpush1.xpose.msra.mxu0 %v2668
        %2702 = vmatprep.subr.mxu0 0.0
        %2703 = vmatpush1.xpose.msra.mxu0 0.0
        %2704 = vmatprep.subr.mxu0 0.0
        %2705 = vmatpush1.xpose.msra.mxu0 0.0
        %2706 = vmatprep.subr.mxu0 0.0
        %2707 = vmatpush1.xpose.msra.mxu0 0.0
        %2708 = vmatprep.subr.mxu0 0.0
        %2709 = vmatpush1.xpose.msra.mxu0 0.0
        %2710 = vmatprep.subr.mxu0 0.0
        %2711 = vmatpush1.xpose.msra.mxu0 0.0
        %2712 = vmatprep.subr.mxu0 0.0
        %2713 = vmatpush1.xpose.msra.mxu0 0.0
        %2714 = vmatprep.subr.mxu0 0.0
        %2715 = vmatpush1.xpose.msra.mxu0 0.0
        %2716 = vmatprep.subr.mxu0 0.0
        %2717 = vmatpush1.xpose.msra.mxu0 0.0
        %2718 = vmatprep.subr.mxu0 0.0
        %2719 = vmatpush1.xpose.msra.mxu0 0.0
        %2720 = vmatprep.subr.mxu0 0.0
        %2721 = vmatpush1.xpose.msra.mxu0 0.0
        %2722 = vmatprep.subr.mxu0 0.0
        %2723 = vmatpush1.xpose.msra.mxu0 0.0
        %2724 = vmatprep.subr.mxu0 0.0
        %2725 = vmatpush1.xpose.msra.mxu0 0.0
        %2726 = vmatprep.subr.mxu0 0.0
        %2727 = vmatpush1.xpose.msra.mxu0 0.0
        %2728 = vmatprep.subr.mxu0 0.0
        %2729 = vmatpush1.xpose.msra.mxu0 0.0
        %2730 = vmatprep.subr.mxu0 0.0
        %2731 = vmatpush1.xpose.msra.mxu0 0.0
        %2732 = vmatprep.subr.mxu0 0.0
        %2733 = vmatpush1.xpose.msra.mxu0 0.0
        %2734 = vmatprep.mubr.f32.mxu0 0.0
        %2735 = vmatmul.mubr.f32.gmra.mrb[0].mxu0 %v2636
        %v2736 = vpop.f32.mrb[0].mxu0
        %v2737 = vadd.f32 0.0, %v2736
        %v2738 = vpop.f32.mrb[0].mxu0
        %2739 = vdwg.mxu0
        %v2740 = vadd.f32 %v2012, %v2599
        %v2741 = vadd.f32 %v2013, %v2737
        %v2742 = vadd.f32 %v2599, %v1331
        %v2743 = vadd.f32 %v2737, %v1331
        %2744 = vmax.xlane.f32.xlu0 %v2742
        %v2745 = vpop.xlane.xlu0 %2744
        %2746 = vmax.xlane.f32.xlu0 %v2743
        %v2747 = vpop.xlane.xlu0 %2746
        %v2748 = vsub.f32 %v2742, %v2745
        %v2749 = vsub.f32 %v2743, %v2747
        %v2750 = vmul.f32 %v2748, 1.442695
        %v2751 = vpow.pop %v2750
        %v2752 = vmul.f32 %v2749, 1.442695
        %v2753 = vpow.pop %v2752
        %2754 = vadd.xlane.f32.xlu0 %v2751
        %v2755 = vpop.xlane.xlu0 %2754
        %2756 = vadd.xlane.f32.xlu0 %v2753
        %v2757 = vpop.xlane.xlu0 %2756
        %v2758 = vrcp.pop %v2755
        %v2759 = vrcp.pop %v2757
        %v2760 = vmul.f32 %v2751, %v2758
        %v2761 = vmul.f32 %v2753, %v2759
        %2762 = vrot.lane.b32.xlu0 %v1154, 64
        %v2763 = vpop.permute.xlu0 %2762
        %2764 = vrot.lane.b32.xlu0 %v1159, 64
        %v2765 = vpop.permute.xlu0 %2764
        %2766 = vrot.lane.b32.xlu0 %v1164, 64
        %v2767 = vpop.permute.xlu0 %2766
        %2768 = vrot.lane.b32.xlu0 %v1169, 64
        %v2769 = vpop.permute.xlu0 %2768
        %2770 = vrot.lane.b32.xlu0 %v1174, 64
        %v2771 = vpop.permute.xlu0 %2770
        %2772 = vrot.lane.b32.xlu0 %v1179, 64
        %v2773 = vpop.permute.xlu0 %2772
        %2774 = vrot.lane.b32.xlu0 %v1184, 64
        %v2775 = vpop.permute.xlu0 %2774
        %2776 = vrot.lane.b32.xlu0 %v1189, 64
        %v2777 = vpop.permute.xlu0 %2776
        %2778 = vrot.lane.b32.xlu0 %v1194, 64
        %v2779 = vpop.permute.xlu0 %2778
        %2780 = vrot.lane.b32.xlu0 %v1199, 64
        %v2781 = vpop.permute.xlu0 %2780
        %2782 = vrot.lane.b32.xlu0 %v1204, 64
        %v2783 = vpop.permute.xlu0 %2782
        %2784 = vrot.lane.b32.xlu0 %v1209, 64
        %v2785 = vpop.permute.xlu0 %2784
        %2786 = vrot.lane.b32.xlu0 %v1214, 64
        %v2787 = vpop.permute.xlu0 %2786
        %2788 = vrot.lane.b32.xlu0 %v1219, 64
        %v2789 = vpop.permute.xlu0 %2788
        %2790 = vrot.lane.b32.xlu0 %v1224, 64
        %v2791 = vpop.permute.xlu0 %2790
        %2792 = vrot.lane.b32.xlu0 %v1229, 64
        %v2793 = vpop.permute.xlu0 %2792
        %2810 = vmatprep.subr.mxu0 0.0
        %2811 = vmatpush1.msra.mxu0 %v2763
        %2812 = vmatprep.subr.mxu0 0.0
        %2813 = vmatpush1.msra.mxu0 %v2765
        %2814 = vmatprep.subr.mxu0 0.0
        %2815 = vmatpush1.msra.mxu0 %v2767
        %2816 = vmatprep.subr.mxu0 0.0
        %2817 = vmatpush1.msra.mxu0 %v2769
        %2818 = vmatprep.subr.mxu0 0.0
        %2819 = vmatpush1.msra.mxu0 %v2771
        %2820 = vmatprep.subr.mxu0 0.0
        %2821 = vmatpush1.msra.mxu0 %v2773
        %2822 = vmatprep.subr.mxu0 0.0
        %2823 = vmatpush1.msra.mxu0 %v2775
        %2824 = vmatprep.subr.mxu0 0.0
        %2825 = vmatpush1.msra.mxu0 %v2777
        %2826 = vmatprep.subr.mxu0 0.0
        %2827 = vmatpush1.msra.mxu0 %v2779
        %2828 = vmatprep.subr.mxu0 0.0
        %2829 = vmatpush1.msra.mxu0 %v2781
        %2830 = vmatprep.subr.mxu0 0.0
        %2831 = vmatpush1.msra.mxu0 %v2783
        %2832 = vmatprep.subr.mxu0 0.0
        %2833 = vmatpush1.msra.mxu0 %v2785
        %2834 = vmatprep.subr.mxu0 0.0
        %2835 = vmatpush1.msra.mxu0 %v2787
        %2836 = vmatprep.subr.mxu0 0.0
        %2837 = vmatpush1.msra.mxu0 %v2789
        %2838 = vmatprep.subr.mxu0 0.0
        %2839 = vmatpush1.msra.mxu0 %v2791
        %2840 = vmatprep.subr.mxu0 0.0
        %2841 = vmatpush1.msra.mxu0 %v2793
        %2842 = vmatprep.subr.mxu0 0.0
        %2843 = vmatpush1.msra.mxu0 0.0
        %2844 = vmatprep.subr.mxu0 0.0
        %2845 = vmatpush1.msra.mxu0 0.0
        %2846 = vmatprep.subr.mxu0 0.0
        %2847 = vmatpush1.msra.mxu0 0.0
        %2848 = vmatprep.subr.mxu0 0.0
        %2849 = vmatpush1.msra.mxu0 0.0
        %2850 = vmatprep.subr.mxu0 0.0
        %2851 = vmatpush1.msra.mxu0 0.0
        %2852 = vmatprep.subr.mxu0 0.0
        %2853 = vmatpush1.msra.mxu0 0.0
        %2854 = vmatprep.subr.mxu0 0.0
        %2855 = vmatpush1.msra.mxu0 0.0
        %2856 = vmatprep.subr.mxu0 0.0
        %2857 = vmatpush1.msra.mxu0 0.0
        %2858 = vmatprep.subr.mxu0 0.0
        %2859 = vmatpush1.msra.mxu0 0.0
        %2860 = vmatprep.subr.mxu0 0.0
        %2861 = vmatpush1.msra.mxu0 0.0
        %2862 = vmatprep.subr.mxu0 0.0
        %2863 = vmatpush1.msra.mxu0 0.0
        %2864 = vmatprep.subr.mxu0 0.0
        %2865 = vmatpush1.msra.mxu0 0.0
        %2866 = vmatprep.subr.mxu0 0.0
        %2867 = vmatpush1.msra.mxu0 0.0
        %2868 = vmatprep.subr.mxu0 0.0
        %2869 = vmatpush1.msra.mxu0 0.0
        %2870 = vmatprep.subr.mxu0 0.0
        %2871 = vmatpush1.msra.mxu0 0.0
        %2872 = vmatprep.subr.mxu0 0.0
        %2873 = vmatpush1.msra.mxu0 0.0
        %2874 = vmatprep.mubr.f32.mxu0 0.0
        %2875 = vmatmul.mubr.f32.gmra.mrb[0].mxu0 %v2760
        %v2876 = vpop.f32.mrb[0].mxu0
        %v2877 = vadd.f32 0.0, %v2876
        %v2878 = vpop.f32.mrb[0].mxu0
        %2879 = vdwg.mxu0
        %2880 = vrot.lane.b32.xlu0 %v1234, 64
        %v2881 = vpop.permute.xlu0 %2880
        %2882 = vrot.lane.b32.xlu0 %v1239, 64
        %v2883 = vpop.permute.xlu0 %2882
        %2884 = vrot.lane.b32.xlu0 %v1244, 64
        %v2885 = vpop.permute.xlu0 %2884
        %2886 = vrot.lane.b32.xlu0 %v1249, 64
        %v2887 = vpop.permute.xlu0 %2886
        %2888 = vrot.lane.b32.xlu0 %v1254, 64
        %v2889 = vpop.permute.xlu0 %2888
        %2890 = vrot.lane.b32.xlu0 %v1259, 64
        %v2891 = vpop.permute.xlu0 %2890
        %2892 = vrot.lane.b32.xlu0 %v1264, 64
        %v2893 = vpop.permute.xlu0 %2892
        %2894 = vrot.lane.b32.xlu0 %v1269, 64
        %v2895 = vpop.permute.xlu0 %2894
        %2896 = vrot.lane.b32.xlu0 %v1274, 64
        %v2897 = vpop.permute.xlu0 %2896
        %2898 = vrot.lane.b32.xlu0 %v1279, 64
        %v2899 = vpop.permute.xlu0 %2898
        %2900 = vrot.lane.b32.xlu0 %v1284, 64
        %v2901 = vpop.permute.xlu0 %2900
        %2902 = vrot.lane.b32.xlu0 %v1289, 64
        %v2903 = vpop.permute.xlu0 %2902
        %2904 = vrot.lane.b32.xlu0 %v1294, 64
        %v2905 = vpop.permute.xlu0 %2904
        %2906 = vrot.lane.b32.xlu0 %v1299, 64
        %v2907 = vpop.permute.xlu0 %2906
        %2908 = vrot.lane.b32.xlu0 %v1304, 64
        %v2909 = vpop.permute.xlu0 %2908
        %2910 = vrot.lane.b32.xlu0 %v1309, 64
        %v2911 = vpop.permute.xlu0 %2910
        %2928 = vmatprep.subr.mxu0 0.0
        %2929 = vmatpush1.msra.mxu0 %v2881
        %2930 = vmatprep.subr.mxu0 0.0
        %2931 = vmatpush1.msra.mxu0 %v2883
        %2932 = vmatprep.subr.mxu0 0.0
        %2933 = vmatpush1.msra.mxu0 %v2885
        %2934 = vmatprep.subr.mxu0 0.0
        %2935 = vmatpush1.msra.mxu0 %v2887
        %2936 = vmatprep.subr.mxu0 0.0
        %2937 = vmatpush1.msra.mxu0 %v2889
        %2938 = vmatprep.subr.mxu0 0.0
        %2939 = vmatpush1.msra.mxu0 %v2891
        %2940 = vmatprep.subr.mxu0 0.0
        %2941 = vmatpush1.msra.mxu0 %v2893
        %2942 = vmatprep.subr.mxu0 0.0
        %2943 = vmatpush1.msra.mxu0 %v2895
        %2944 = vmatprep.subr.mxu0 0.0
        %2945 = vmatpush1.msra.mxu0 %v2897
        %2946 = vmatprep.subr.mxu0 0.0
        %2947 = vmatpush1.msra.mxu0 %v2899
        %2948 = vmatprep.subr.mxu0 0.0
        %2949 = vmatpush1.msra.mxu0 %v2901
        %2950 = vmatprep.subr.mxu0 0.0
        %2951 = vmatpush1.msra.mxu0 %v2903
        %2952 = vmatprep.subr.mxu0 0.0
        %2953 = vmatpush1.msra.mxu0 %v2905
        %2954 = vmatprep.subr.mxu0 0.0
        %2955 = vmatpush1.msra.mxu0 %v2907
        %2956 = vmatprep.subr.mxu0 0.0
        %2957 = vmatpush1.msra.mxu0 %v2909
        %2958 = vmatprep.subr.mxu0 0.0
        %2959 = vmatpush1.msra.mxu0 %v2911
        %2960 = vmatprep.subr.mxu0 0.0
        %2961 = vmatpush1.msra.mxu0 0.0
        %2962 = vmatprep.subr.mxu0 0.0
        %2963 = vmatpush1.msra.mxu0 0.0
        %2964 = vmatprep.subr.mxu0 0.0
        %2965 = vmatpush1.msra.mxu0 0.0
        %2966 = vmatprep.subr.mxu0 0.0
        %2967 = vmatpush1.msra.mxu0 0.0
        %2968 = vmatprep.subr.mxu0 0.0
        %2969 = vmatpush1.msra.mxu0 0.0
        %2970 = vmatprep.subr.mxu0 0.0
        %2971 = vmatpush1.msra.mxu0 0.0
        %2972 = vmatprep.subr.mxu0 0.0
        %2973 = vmatpush1.msra.mxu0 0.0
        %2974 = vmatprep.subr.mxu0 0.0
        %2975 = vmatpush1.msra.mxu0 0.0
        %2976 = vmatprep.subr.mxu0 0.0
        %2977 = vmatpush1.msra.mxu0 0.0
        %2978 = vmatprep.subr.mxu0 0.0
        %2979 = vmatpush1.msra.mxu0 0.0
        %2980 = vmatprep.subr.mxu0 0.0
        %2981 = vmatpush1.msra.mxu0 0.0
        %2982 = vmatprep.subr.mxu0 0.0
        %2983 = vmatpush1.msra.mxu0 0.0
        %2984 = vmatprep.subr.mxu0 0.0
        %2985 = vmatpush1.msra.mxu0 0.0
        %2986 = vmatprep.subr.mxu0 0.0
        %2987 = vmatpush1.msra.mxu0 0.0
        %2988 = vmatprep.subr.mxu0 0.0
        %2989 = vmatpush1.msra.mxu0 0.0
        %2990 = vmatprep.subr.mxu0 0.0
        %2991 = vmatpush1.msra.mxu0 0.0
        %2992 = vmatprep.mubr.f32.mxu0 0.0
        %2993 = vmatmul.mubr.f32.gmra.mrb[0].mxu0 %v2761
        %v2994 = vpop.f32.mrb[0].mxu0
        %v2995 = vadd.f32 0.0, %v2994
        %v2996 = vpop.f32.mrb[0].mxu0
        %2997 = vdwg.mxu0
        %v2999 = vsel %vm578, %v2877, 0
        %v3002 = vsel %vm578, %v2995, 0
        %3004 = vmatprep.subr.mxu0 0.0
        %3005 = vmatpush1.msra.mxu0 %v1320
        %3006 = vmatprep.subr.mxu0 0.0
        %3007 = vmatpush1.msra.mxu0 %v1321
        %3008 = vmatprep.subr.mxu0 0.0
        %3009 = vmatpush1.msra.mxu0 %v1322
        %3010 = vmatprep.subr.mxu0 0.0
        %3011 = vmatpush1.msra.mxu0 %v1323
        %3012 = vmatprep.subr.mxu0 0.0
        %3013 = vmatpush1.msra.mxu0 0.0
        %3014 = vmatprep.subr.mxu0 0.0
        %3015 = vmatpush1.msra.mxu0 0.0
        %3016 = vmatprep.subr.mxu0 0.0
        %3017 = vmatpush1.msra.mxu0 0.0
        %3018 = vmatprep.subr.mxu0 0.0
        %3019 = vmatpush1.msra.mxu0 0.0
        %3020 = vmatprep.subr.mxu0 0.0
        %3021 = vmatpush1.msra.mxu0 0.0
        %3022 = vmatprep.subr.mxu0 0.0
        %3023 = vmatpush1.msra.mxu0 0.0
        %3024 = vmatprep.subr.mxu0 0.0
        %3025 = vmatpush1.msra.mxu0 0.0
        %3026 = vmatprep.subr.mxu0 0.0
        %3027 = vmatpush1.msra.mxu0 0.0
        %3028 = vmatprep.subr.mxu0 0.0
        %3029 = vmatpush1.msra.mxu0 0.0
        %3030 = vmatprep.subr.mxu0 0.0
        %3031 = vmatpush1.msra.mxu0 0.0
        %3032 = vmatprep.subr.mxu0 0.0
        %3033 = vmatpush1.msra.mxu0 0.0
        %3034 = vmatprep.subr.mxu0 0.0
        %3035 = vmatpush1.msra.mxu0 0.0
        %3036 = vmatprep.subr.mxu0 0.0
        %3037 = vmatpush1.msra.mxu0 0.0
        %3038 = vmatprep.subr.mxu0 0.0
        %3039 = vmatpush1.msra.mxu0 0.0
        %3040 = vmatprep.subr.mxu0 0.0
        %3041 = vmatpush1.msra.mxu0 0.0
        %3042 = vmatprep.subr.mxu0 0.0
        %3043 = vmatpush1.msra.mxu0 0.0
        %3044 = vmatprep.subr.mxu0 0.0
        %3045 = vmatpush1.msra.mxu0 0.0
        %3046 = vmatprep.subr.mxu0 0.0
        %3047 = vmatpush1.msra.mxu0 0.0
        %3048 = vmatprep.subr.mxu0 0.0
        %3049 = vmatpush1.msra.mxu0 0.0
        %3050 = vmatprep.subr.mxu0 0.0
        %3051 = vmatpush1.msra.mxu0 0.0
        %3052 = vmatprep.subr.mxu0 0.0
        %3053 = vmatpush1.msra.mxu0 0.0
        %3054 = vmatprep.subr.mxu0 0.0
        %3055 = vmatpush1.msra.mxu0 0.0
        %3056 = vmatprep.subr.mxu0 0.0
        %3057 = vmatpush1.msra.mxu0 0.0
        %3058 = vmatprep.subr.mxu0 0.0
        %3059 = vmatpush1.msra.mxu0 0.0
        %3060 = vmatprep.subr.mxu0 0.0
        %3061 = vmatpush1.msra.mxu0 0.0
        %3062 = vmatprep.subr.mxu0 0.0
        %3063 = vmatpush1.msra.mxu0 0.0
        %3064 = vmatprep.subr.mxu0 0.0
        %3065 = vmatpush1.msra.mxu0 0.0
        %3066 = vmatprep.subr.mxu0 0.0
        %3067 = vmatpush1.msra.mxu0 0.0
        %3068 = vmatprep.mubr.f32.mxu0 0.0
        %3069 = vmatmul.mubr.f32.gmra.mrb[0].mxu0 %v2999
        %v3070 = vpop.f32.mrb[0].mxu0
        %v3071 = vadd.f32 0.0, %v3070
        %v3072 = vpop.f32.mrb[0].mxu0
        %3073 = vmatprep.mubr.f32.mxu0 0.0
        %3074 = vmatmul.mubr.f32.gmra.mrb[0].mxu0 %v3002
        %v3075 = vpop.f32.mrb[0].mxu0
        %v3076 = vadd.f32 0.0, %v3075
        %v3077 = vpop.f32.mrb[0].mxu0
        %3078 = vdwg.mxu0
        %v3079 = vadd.f32 %v2456, %v3071
        %v3080 = vadd.f32 %v2461, %v3076
        %3081 = vrot.lane.b32.xlu0 %v660, 32
        %v3082 = vpop.permute.xlu0 %3081
        %3083 = vrot.lane.b32.xlu0 %v829, 32
        %v3084 = vpop.permute.xlu0 %3083
        %3085 = vrot.lane.b32.xlu0 %v834, 32
        %v3086 = vpop.permute.xlu0 %3085
        %3087 = vrot.lane.b32.xlu0 %v839, 32
        %v3088 = vpop.permute.xlu0 %3087
        %3089 = vrot.lane.b32.xlu0 %v844, 32
        %v3090 = vpop.permute.xlu0 %3089
        %3091 = vrot.lane.b32.xlu0 %v849, 32
        %v3092 = vpop.permute.xlu0 %3091
        %3093 = vrot.lane.b32.xlu0 %v854, 32
        %v3094 = vpop.permute.xlu0 %3093
        %3095 = vrot.lane.b32.xlu0 %v859, 32
        %v3096 = vpop.permute.xlu0 %3095
        %3097 = vrot.lane.b32.xlu0 %v864, 32
        %v3098 = vpop.permute.xlu0 %3097
        %3099 = vrot.lane.b32.xlu0 %v869, 32
        %v3100 = vpop.permute.xlu0 %3099
        %3101 = vrot.lane.b32.xlu0 %v874, 32
        %v3102 = vpop.permute.xlu0 %3101
        %3103 = vrot.lane.b32.xlu0 %v879, 32
        %v3104 = vpop.permute.xlu0 %3103
        %3105 = vrot.lane.b32.xlu0 %v884, 32
        %v3106 = vpop.permute.xlu0 %3105
        %3107 = vrot.lane.b32.xlu0 %v889, 32
        %v3108 = vpop.permute.xlu0 %3107
        %3109 = vrot.lane.b32.xlu0 %v894, 32
        %v3110 = vpop.permute.xlu0 %3109
        %3111 = vrot.lane.b32.xlu0 %v899, 32
        %v3112 = vpop.permute.xlu0 %3111
        %3113 = vrot.lane.b32.xlu0 %v904, 32
        %v3114 = vpop.permute.xlu0 %3113
        %v3115 = vsel %vm578, %v3082, 0
        %v3117 = vsel %vm578, %v3084, 0
        %v3119 = vsel %vm578, %v3086, 0
        %v3121 = vsel %vm578, %v3088, 0
        %v3123 = vsel %vm578, %v3090, 0
        %v3125 = vsel %vm578, %v3092, 0
        %v3127 = vsel %vm578, %v3094, 0
        %v3129 = vsel %vm578, %v3096, 0
        %v3131 = vsel %vm578, %v3098, 0
        %v3133 = vsel %vm578, %v3100, 0
        %v3135 = vsel %vm578, %v3102, 0
        %v3137 = vsel %vm578, %v3104, 0
        %v3139 = vsel %vm578, %v3106, 0
        %v3141 = vsel %vm578, %v3108, 0
        %v3143 = vsel %vm578, %v3110, 0
        %v3145 = vsel %vm578, %v3112, 0
        %v3147 = vsel %vm578, %v3114, 0
        %3149 = vmatprep.subr.mxu0 0.0
        %3150 = vmatpush1.xpose.msra.mxu0 %v3117
        %3151 = vmatprep.subr.mxu0 0.0
        %3152 = vmatpush1.xpose.msra.mxu0 %v3119
        %3153 = vmatprep.subr.mxu0 0.0
        %3154 = vmatpush1.xpose.msra.mxu0 %v3121
        %3155 = vmatprep.subr.mxu0 0.0
        %3156 = vmatpush1.xpose.msra.mxu0 %v3123
        %3157 = vmatprep.subr.mxu0 0.0
        %3158 = vmatpush1.xpose.msra.mxu0 %v3125
        %3159 = vmatprep.subr.mxu0 0.0
        %3160 = vmatpush1.xpose.msra.mxu0 %v3127
        %3161 = vmatprep.subr.mxu0 0.0
        %3162 = vmatpush1.xpose.msra.mxu0 %v3129
        %3163 = vmatprep.subr.mxu0 0.0
        %3164 = vmatpush1.xpose.msra.mxu0 %v3131
        %3165 = vmatprep.subr.mxu0 0.0
        %3166 = vmatpush1.xpose.msra.mxu0 %v3133
        %3167 = vmatprep.subr.mxu0 0.0
        %3168 = vmatpush1.xpose.msra.mxu0 %v3135
        %3169 = vmatprep.subr.mxu0 0.0
        %3170 = vmatpush1.xpose.msra.mxu0 %v3137
        %3171 = vmatprep.subr.mxu0 0.0
        %3172 = vmatpush1.xpose.msra.mxu0 %v3139
        %3173 = vmatprep.subr.mxu0 0.0
        %3174 = vmatpush1.xpose.msra.mxu0 %v3141
        %3175 = vmatprep.subr.mxu0 0.0
        %3176 = vmatpush1.xpose.msra.mxu0 %v3143
        %3177 = vmatprep.subr.mxu0 0.0
        %3178 = vmatpush1.xpose.msra.mxu0 %v3145
        %3179 = vmatprep.subr.mxu0 0.0
        %3180 = vmatpush1.xpose.msra.mxu0 %v3147
        %3181 = vmatprep.subr.mxu0 0.0
        %3182 = vmatpush1.xpose.msra.mxu0 0.0
        %3183 = vmatprep.subr.mxu0 0.0
        %3184 = vmatpush1.xpose.msra.mxu0 0.0
        %3185 = vmatprep.subr.mxu0 0.0
        %3186 = vmatpush1.xpose.msra.mxu0 0.0
        %3187 = vmatprep.subr.mxu0 0.0
        %3188 = vmatpush1.xpose.msra.mxu0 0.0
        %3189 = vmatprep.subr.mxu0 0.0
        %3190 = vmatpush1.xpose.msra.mxu0 0.0
        %3191 = vmatprep.subr.mxu0 0.0
        %3192 = vmatpush1.xpose.msra.mxu0 0.0
        %3193 = vmatprep.subr.mxu0 0.0
        %3194 = vmatpush1.xpose.msra.mxu0 0.0
        %3195 = vmatprep.subr.mxu0 0.0
        %3196 = vmatpush1.xpose.msra.mxu0 0.0
        %3197 = vmatprep.subr.mxu0 0.0
        %3198 = vmatpush1.xpose.msra.mxu0 0.0
        %3199 = vmatprep.subr.mxu0 0.0
        %3200 = vmatpush1.xpose.msra.mxu0 0.0
        %3201 = vmatprep.subr.mxu0 0.0
        %3202 = vmatpush1.xpose.msra.mxu0 0.0
        %3203 = vmatprep.subr.mxu0 0.0
        %3204 = vmatpush1.xpose.msra.mxu0 0.0
        %3205 = vmatprep.subr.mxu0 0.0
        %3206 = vmatpush1.xpose.msra.mxu0 0.0
        %3207 = vmatprep.subr.mxu0 0.0
        %3208 = vmatpush1.xpose.msra.mxu0 0.0
        %3209 = vmatprep.subr.mxu0 0.0
        %3210 = vmatpush1.xpose.msra.mxu0 0.0
        %3211 = vmatprep.subr.mxu0 0.0
        %3212 = vmatpush1.xpose.msra.mxu0 0.0
        %3213 = vmatprep.mubr.f32.mxu0 0.0
        %3214 = vmatmul.mubr.f32.gmra.mrb[0].mxu0 %v3115
        %v3215 = vpop.f32.mrb[0].mxu0
        %v3216 = vadd.f32 0.0, %v3215
        %v3217 = vpop.f32.mrb[0].mxu0
        %3218 = vdwg.mxu0
        %3219 = vrot.lane.b32.xlu0 %v661, 32
        %v3220 = vpop.permute.xlu0 %3219
        %3221 = vrot.lane.b32.xlu0 %v909, 32
        %v3222 = vpop.permute.xlu0 %3221
        %3223 = vrot.lane.b32.xlu0 %v914, 32
        %v3224 = vpop.permute.xlu0 %3223
        %3225 = vrot.lane.b32.xlu0 %v919, 32
        %v3226 = vpop.permute.xlu0 %3225
        %3227 = vrot.lane.b32.xlu0 %v924, 32
        %v3228 = vpop.permute.xlu0 %3227
        %3229 = vrot.lane.b32.xlu0 %v929, 32
        %v3230 = vpop.permute.xlu0 %3229
        %3231 = vrot.lane.b32.xlu0 %v934, 32
        %v3232 = vpop.permute.xlu0 %3231
        %3233 = vrot.lane.b32.xlu0 %v939, 32
        %v3234 = vpop.permute.xlu0 %3233
        %3235 = vrot.lane.b32.xlu0 %v944, 32
        %v3236 = vpop.permute.xlu0 %3235
        %3237 = vrot.lane.b32.xlu0 %v949, 32
        %v3238 = vpop.permute.xlu0 %3237
        %3239 = vrot.lane.b32.xlu0 %v954, 32
        %v3240 = vpop.permute.xlu0 %3239
        %3241 = vrot.lane.b32.xlu0 %v959, 32
        %v3242 = vpop.permute.xlu0 %3241
        %3243 = vrot.lane.b32.xlu0 %v964, 32
        %v3244 = vpop.permute.xlu0 %3243
        %3245 = vrot.lane.b32.xlu0 %v969, 32
        %v3246 = vpop.permute.xlu0 %3245
        %3247 = vrot.lane.b32.xlu0 %v974, 32
        %v3248 = vpop.permute.xlu0 %3247
        %3249 = vrot.lane.b32.xlu0 %v979, 32
        %v3250 = vpop.permute.xlu0 %3249
        %3251 = vrot.lane.b32.xlu0 %v984, 32
        %v3252 = vpop.permute.xlu0 %3251
        %v3253 = vsel %vm578, %v3220, 0
        %v3255 = vsel %vm578, %v3222, 0
        %v3257 = vsel %vm578, %v3224, 0
        %v3259 = vsel %vm578, %v3226, 0
        %v3261 = vsel %vm578, %v3228, 0
        %v3263 = vsel %vm578, %v3230, 0
        %v3265 = vsel %vm578, %v3232, 0
        %v3267 = vsel %vm578, %v3234, 0
        %v3269 = vsel %vm578, %v3236, 0
        %v3271 = vsel %vm578, %v3238, 0
        %v3273 = vsel %vm578, %v3240, 0
        %v3275 = vsel %vm578, %v3242, 0
        %v3277 = vsel %vm578, %v3244, 0
        %v3279 = vsel %vm578, %v3246, 0
        %v3281 = vsel %vm578, %v3248, 0
        %v3283 = vsel %vm578, %v3250, 0
        %v3285 = vsel %vm578, %v3252, 0
        %3287 = vmatprep.subr.mxu0 0.0
        %3288 = vmatpush1.xpose.msra.mxu0 %v3255
        %3289 = vmatprep.subr.mxu0 0.0
        %3290 = vmatpush1.xpose.msra.mxu0 %v3257
        %3291 = vmatprep.subr.mxu0 0.0
        %3292 = vmatpush1.xpose.msra.mxu0 %v3259
        %3293 = vmatprep.subr.mxu0 0.0
        %3294 = vmatpush1.xpose.msra.mxu0 %v3261
        %3295 = vmatprep.subr.mxu0 0.0
        %3296 = vmatpush1.xpose.msra.mxu0 %v3263
        %3297 = vmatprep.subr.mxu0 0.0
        %3298 = vmatpush1.xpose.msra.mxu0 %v3265
        %3299 = vmatprep.subr.mxu0 0.0
        %3300 = vmatpush1.xpose.msra.mxu0 %v3267
        %3301 = vmatprep.subr.mxu0 0.0
        %3302 = vmatpush1.xpose.msra.mxu0 %v3269
        %3303 = vmatprep.subr.mxu0 0.0
        %3304 = vmatpush1.xpose.msra.mxu0 %v3271
        %3305 = vmatprep.subr.mxu0 0.0
        %3306 = vmatpush1.xpose.msra.mxu0 %v3273
        %3307 = vmatprep.subr.mxu0 0.0
        %3308 = vmatpush1.xpose.msra.mxu0 %v3275
        %3309 = vmatprep.subr.mxu0 0.0
        %3310 = vmatpush1.xpose.msra.mxu0 %v3277
        %3311 = vmatprep.subr.mxu0 0.0
        %3312 = vmatpush1.xpose.msra.mxu0 %v3279
        %3313 = vmatprep.subr.mxu0 0.0
        %3314 = vmatpush1.xpose.msra.mxu0 %v3281
        %3315 = vmatprep.subr.mxu0 0.0
        %3316 = vmatpush1.xpose.msra.mxu0 %v3283
        %3317 = vmatprep.subr.mxu0 0.0
        %3318 = vmatpush1.xpose.msra.mxu0 %v3285
        %3319 = vmatprep.subr.mxu0 0.0
        %3320 = vmatpush1.xpose.msra.mxu0 0.0
        %3321 = vmatprep.subr.mxu0 0.0
        %3322 = vmatpush1.xpose.msra.mxu0 0.0
        %3323 = vmatprep.subr.mxu0 0.0
        %3324 = vmatpush1.xpose.msra.mxu0 0.0
        %3325 = vmatprep.subr.mxu0 0.0
        %3326 = vmatpush1.xpose.msra.mxu0 0.0
        %3327 = vmatprep.subr.mxu0 0.0
        %3328 = vmatpush1.xpose.msra.mxu0 0.0
        %3329 = vmatprep.subr.mxu0 0.0
        %3330 = vmatpush1.xpose.msra.mxu0 0.0
        %3331 = vmatprep.subr.mxu0 0.0
        %3332 = vmatpush1.xpose.msra.mxu0 0.0
        %3333 = vmatprep.subr.mxu0 0.0
        %3334 = vmatpush1.xpose.msra.mxu0 0.0
        %3335 = vmatprep.subr.mxu0 0.0
        %3336 = vmatpush1.xpose.msra.mxu0 0.0
        %3337 = vmatprep.subr.mxu0 0.0
        %3338 = vmatpush1.xpose.msra.mxu0 0.0
        %3339 = vmatprep.subr.mxu0 0.0
        %3340 = vmatpush1.xpose.msra.mxu0 0.0
        %3341 = vmatprep.subr.mxu0 0.0
        %3342 = vmatpush1.xpose.msra.mxu0 0.0
        %3343 = vmatprep.subr.mxu0 0.0
        %3344 = vmatpush1.xpose.msra.mxu0 0.0
        %3345 = vmatprep.subr.mxu0 0.0
        %3346 = vmatpush1.xpose.msra.mxu0 0.0
        %3347 = vmatprep.subr.mxu0 0.0
        %3348 = vmatpush1.xpose.msra.mxu0 0.0
        %3349 = vmatprep.subr.mxu0 0.0
        %3350 = vmatpush1.xpose.msra.mxu0 0.0
        %3351 = vmatprep.mubr.f32.mxu0 0.0
        %3352 = vmatmul.mubr.f32.gmra.mrb[0].mxu0 %v3253
        %v3353 = vpop.f32.mrb[0].mxu0
        %v3354 = vadd.f32 0.0, %v3353
        %v3355 = vpop.f32.mrb[0].mxu0
        %3356 = vdwg.mxu0
        %v3357 = vadd.f32 %v2740, %v3216
        %v3358 = vadd.f32 %v2741, %v3354
        %v3359 = vadd.f32 %v3216, %v1331
        %v3360 = vadd.f32 %v3354, %v1331
        %3361 = vmax.xlane.f32.xlu0 %v3359
        %v3362 = vpop.xlane.xlu0 %3361
        %3363 = vmax.xlane.f32.xlu0 %v3360
        %v3364 = vpop.xlane.xlu0 %3363
        %v3365 = vsub.f32 %v3359, %v3362
        %v3366 = vsub.f32 %v3360, %v3364
        %v3367 = vmul.f32 %v3365, 1.442695
        %v3368 = vpow.pop %v3367
        %v3369 = vmul.f32 %v3366, 1.442695
        %v3370 = vpow.pop %v3369
        %3371 = vadd.xlane.f32.xlu0 %v3368
        %v3372 = vpop.xlane.xlu0 %3371
        %3373 = vadd.xlane.f32.xlu0 %v3370
        %v3374 = vpop.xlane.xlu0 %3373
        %v3375 = vrcp.pop %v3372
        %v3376 = vrcp.pop %v3374
        %v3377 = vmul.f32 %v3368, %v3375
        %v3378 = vmul.f32 %v3370, %v3376
        %3379 = vrot.lane.b32.xlu0 %v1154, 32
        %v3380 = vpop.permute.xlu0 %3379
        %3381 = vrot.lane.b32.xlu0 %v1159, 32
        %v3382 = vpop.permute.xlu0 %3381
        %3383 = vrot.lane.b32.xlu0 %v1164, 32
        %v3384 = vpop.permute.xlu0 %3383
        %3385 = vrot.lane.b32.xlu0 %v1169, 32
        %v3386 = vpop.permute.xlu0 %3385
        %3387 = vrot.lane.b32.xlu0 %v1174, 32
        %v3388 = vpop.permute.xlu0 %3387
        %3389 = vrot.lane.b32.xlu0 %v1179, 32
        %v3390 = vpop.permute.xlu0 %3389
        %3391 = vrot.lane.b32.xlu0 %v1184, 32
        %v3392 = vpop.permute.xlu0 %3391
        %3393 = vrot.lane.b32.xlu0 %v1189, 32
        %v3394 = vpop.permute.xlu0 %3393
        %3395 = vrot.lane.b32.xlu0 %v1194, 32
        %v3396 = vpop.permute.xlu0 %3395
        %3397 = vrot.lane.b32.xlu0 %v1199, 32
        %v3398 = vpop.permute.xlu0 %3397
        %3399 = vrot.lane.b32.xlu0 %v1204, 32
        %v3400 = vpop.permute.xlu0 %3399
        %3401 = vrot.lane.b32.xlu0 %v1209, 32
        %v3402 = vpop.permute.xlu0 %3401
        %3403 = vrot.lane.b32.xlu0 %v1214, 32
        %v3404 = vpop.permute.xlu0 %3403
        %3405 = vrot.lane.b32.xlu0 %v1219, 32
        %v3406 = vpop.permute.xlu0 %3405
        %3407 = vrot.lane.b32.xlu0 %v1224, 32
        %v3408 = vpop.permute.xlu0 %3407
        %3409 = vrot.lane.b32.xlu0 %v1229, 32
        %v3410 = vpop.permute.xlu0 %3409
        %3427 = vmatprep.subr.mxu0 0.0
        %3428 = vmatpush1.msra.mxu0 %v3380
        %3429 = vmatprep.subr.mxu0 0.0
        %3430 = vmatpush1.msra.mxu0 %v3382
        %3431 = vmatprep.subr.mxu0 0.0
        %3432 = vmatpush1.msra.mxu0 %v3384
        %3433 = vmatprep.subr.mxu0 0.0
        %3434 = vmatpush1.msra.mxu0 %v3386
        %3435 = vmatprep.subr.mxu0 0.0
        %3436 = vmatpush1.msra.mxu0 %v3388
        %3437 = vmatprep.subr.mxu0 0.0
        %3438 = vmatpush1.msra.mxu0 %v3390
        %3439 = vmatprep.subr.mxu0 0.0
        %3440 = vmatpush1.msra.mxu0 %v3392
        %3441 = vmatprep.subr.mxu0 0.0
        %3442 = vmatpush1.msra.mxu0 %v3394
        %3443 = vmatprep.subr.mxu0 0.0
        %3444 = vmatpush1.msra.mxu0 %v3396
        %3445 = vmatprep.subr.mxu0 0.0
        %3446 = vmatpush1.msra.mxu0 %v3398
        %3447 = vmatprep.subr.mxu0 0.0
        %3448 = vmatpush1.msra.mxu0 %v3400
        %3449 = vmatprep.subr.mxu0 0.0
        %3450 = vmatpush1.msra.mxu0 %v3402
        %3451 = vmatprep.subr.mxu0 0.0
        %3452 = vmatpush1.msra.mxu0 %v3404
        %3453 = vmatprep.subr.mxu0 0.0
        %3454 = vmatpush1.msra.mxu0 %v3406
        %3455 = vmatprep.subr.mxu0 0.0
        %3456 = vmatpush1.msra.mxu0 %v3408
        %3457 = vmatprep.subr.mxu0 0.0
        %3458 = vmatpush1.msra.mxu0 %v3410
        %3459 = vmatprep.subr.mxu0 0.0
        %3460 = vmatpush1.msra.mxu0 0.0
        %3461 = vmatprep.subr.mxu0 0.0
        %3462 = vmatpush1.msra.mxu0 0.0
        %3463 = vmatprep.subr.mxu0 0.0
        %3464 = vmatpush1.msra.mxu0 0.0
        %3465 = vmatprep.subr.mxu0 0.0
        %3466 = vmatpush1.msra.mxu0 0.0
        %3467 = vmatprep.subr.mxu0 0.0
        %3468 = vmatpush1.msra.mxu0 0.0
        %3469 = vmatprep.subr.mxu0 0.0
        %3470 = vmatpush1.msra.mxu0 0.0
        %3471 = vmatprep.subr.mxu0 0.0
        %3472 = vmatpush1.msra.mxu0 0.0
        %3473 = vmatprep.subr.mxu0 0.0
        %3474 = vmatpush1.msra.mxu0 0.0
        %3475 = vmatprep.subr.mxu0 0.0
        %3476 = vmatpush1.msra.mxu0 0.0
        %3477 = vmatprep.subr.mxu0 0.0
        %3478 = vmatpush1.msra.mxu0 0.0
        %3479 = vmatprep.subr.mxu0 0.0
        %3480 = vmatpush1.msra.mxu0 0.0
        %3481 = vmatprep.subr.mxu0 0.0
        %3482 = vmatpush1.msra.mxu0 0.0
        %3483 = vmatprep.subr.mxu0 0.0
        %3484 = vmatpush1.msra.mxu0 0.0
        %3485 = vmatprep.subr.mxu0 0.0
        %3486 = vmatpush1.msra.mxu0 0.0
        %3487 = vmatprep.subr.mxu0 0.0
        %3488 = vmatpush1.msra.mxu0 0.0
        %3489 = vmatprep.subr.mxu0 0.0
        %3490 = vmatpush1.msra.mxu0 0.0
        %3491 = vmatprep.mubr.f32.mxu0 0.0
        %3492 = vmatmul.mubr.f32.gmra.mrb[0].mxu0 %v3377
        %v3493 = vpop.f32.mrb[0].mxu0
        %v3494 = vadd.f32 0.0, %v3493
        %v3495 = vpop.f32.mrb[0].mxu0
        %3496 = vdwg.mxu0
        %3497 = vrot.lane.b32.xlu0 %v1234, 32
        %v3498 = vpop.permute.xlu0 %3497
        %3499 = vrot.lane.b32.xlu0 %v1239, 32
        %v3500 = vpop.permute.xlu0 %3499
        %3501 = vrot.lane.b32.xlu0 %v1244, 32
        %v3502 = vpop.permute.xlu0 %3501
        %3503 = vrot.lane.b32.xlu0 %v1249, 32
        %v3504 = vpop.permute.xlu0 %3503
        %3505 = vrot.lane.b32.xlu0 %v1254, 32
        %v3506 = vpop.permute.xlu0 %3505
        %3507 = vrot.lane.b32.xlu0 %v1259, 32
        %v3508 = vpop.permute.xlu0 %3507
        %3509 = vrot.lane.b32.xlu0 %v1264, 32
        %v3510 = vpop.permute.xlu0 %3509
        %3511 = vrot.lane.b32.xlu0 %v1269, 32
        %v3512 = vpop.permute.xlu0 %3511
        %3513 = vrot.lane.b32.xlu0 %v1274, 32
        %v3514 = vpop.permute.xlu0 %3513
        %3515 = vrot.lane.b32.xlu0 %v1279, 32
        %v3516 = vpop.permute.xlu0 %3515
        %3517 = vrot.lane.b32.xlu0 %v1284, 32
        %v3518 = vpop.permute.xlu0 %3517
        %3519 = vrot.lane.b32.xlu0 %v1289, 32
        %v3520 = vpop.permute.xlu0 %3519
        %3521 = vrot.lane.b32.xlu0 %v1294, 32
        %v3522 = vpop.permute.xlu0 %3521
        %3523 = vrot.lane.b32.xlu0 %v1299, 32
        %v3524 = vpop.permute.xlu0 %3523
        %3525 = vrot.lane.b32.xlu0 %v1304, 32
        %v3526 = vpop.permute.xlu0 %3525
        %3527 = vrot.lane.b32.xlu0 %v1309, 32
        %v3528 = vpop.permute.xlu0 %3527
        %3545 = vmatprep.subr.mxu0 0.0
        %3546 = vmatpush1.msra.mxu0 %v3498
        %3547 = vmatprep.subr.mxu0 0.0
        %3548 = vmatpush1.msra.mxu0 %v3500
        %3549 = vmatprep.subr.mxu0 0.0
        %3550 = vmatpush1.msra.mxu0 %v3502
        %3551 = vmatprep.subr.mxu0 0.0
        %3552 = vmatpush1.msra.mxu0 %v3504
        %3553 = vmatprep.subr.mxu0 0.0
        %3554 = vmatpush1.msra.mxu0 %v3506
        %3555 = vmatprep.subr.mxu0 0.0
        %3556 = vmatpush1.msra.mxu0 %v3508
        %3557 = vmatprep.subr.mxu0 0.0
        %3558 = vmatpush1.msra.mxu0 %v3510
        %3559 = vmatprep.subr.mxu0 0.0
        %3560 = vmatpush1.msra.mxu0 %v3512
        %3561 = vmatprep.subr.mxu0 0.0
        %3562 = vmatpush1.msra.mxu0 %v3514
        %3563 = vmatprep.subr.mxu0 0.0
        %3564 = vmatpush1.msra.mxu0 %v3516
        %3565 = vmatprep.subr.mxu0 0.0
        %3566 = vmatpush1.msra.mxu0 %v3518
        %3567 = vmatprep.subr.mxu0 0.0
        %3568 = vmatpush1.msra.mxu0 %v3520
        %3569 = vmatprep.subr.mxu0 0.0
        %3570 = vmatpush1.msra.mxu0 %v3522
        %3571 = vmatprep.subr.mxu0 0.0
        %3572 = vmatpush1.msra.mxu0 %v3524
        %3573 = vmatprep.subr.mxu0 0.0
        %3574 = vmatpush1.msra.mxu0 %v3526
        %3575 = vmatprep.subr.mxu0 0.0
        %3576 = vmatpush1.msra.mxu0 %v3528
        %3577 = vmatprep.subr.mxu0 0.0
        %3578 = vmatpush1.msra.mxu0 0.0
        %3579 = vmatprep.subr.mxu0 0.0
        %3580 = vmatpush1.msra.mxu0 0.0
        %3581 = vmatprep.subr.mxu0 0.0
        %3582 = vmatpush1.msra.mxu0 0.0
        %3583 = vmatprep.subr.mxu0 0.0
        %3584 = vmatpush1.msra.mxu0 0.0
        %3585 = vmatprep.subr.mxu0 0.0
        %3586 = vmatpush1.msra.mxu0 0.0
        %3587 = vmatprep.subr.mxu0 0.0
        %3588 = vmatpush1.msra.mxu0 0.0
        %3589 = vmatprep.subr.mxu0 0.0
        %3590 = vmatpush1.msra.mxu0 0.0
        %3591 = vmatprep.subr.mxu0 0.0
        %3592 = vmatpush1.msra.mxu0 0.0
        %3593 = vmatprep.subr.mxu0 0.0
        %3594 = vmatpush1.msra.mxu0 0.0
        %3595 = vmatprep.subr.mxu0 0.0
        %3596 = vmatpush1.msra.mxu0 0.0
        %3597 = vmatprep.subr.mxu0 0.0
        %3598 = vmatpush1.msra.mxu0 0.0
        %3599 = vmatprep.subr.mxu0 0.0
        %3600 = vmatpush1.msra.mxu0 0.0
        %3601 = vmatprep.subr.mxu0 0.0
        %3602 = vmatpush1.msra.mxu0 0.0
        %3603 = vmatprep.subr.mxu0 0.0
        %3604 = vmatpush1.msra.mxu0 0.0
        %3605 = vmatprep.subr.mxu0 0.0
        %3606 = vmatpush1.msra.mxu0 0.0
        %3607 = vmatprep.subr.mxu0 0.0
        %3608 = vmatpush1.msra.mxu0 0.0
        %3609 = vmatprep.mubr.f32.mxu0 0.0
        %3610 = vmatmul.mubr.f32.gmra.mrb[0].mxu0 %v3378
        %v3611 = vpop.f32.mrb[0].mxu0
        %v3612 = vadd.f32 0.0, %v3611
        %v3613 = vpop.f32.mrb[0].mxu0
        %3614 = vdwg.mxu0
        %v3616 = vsel %vm578, %v3494, 0
        %v3619 = vsel %vm578, %v3612, 0
        %3621 = vmatprep.subr.mxu0 0.0
        %3622 = vmatpush1.msra.mxu0 %v1324
        %3623 = vmatprep.subr.mxu0 0.0
        %3624 = vmatpush1.msra.mxu0 %v1325
        %3625 = vmatprep.subr.mxu0 0.0
        %3626 = vmatpush1.msra.mxu0 %v1326
        %3627 = vmatprep.subr.mxu0 0.0
        %3628 = vmatpush1.msra.mxu0 %v1327
        %3629 = vmatprep.subr.mxu0 0.0
        %3630 = vmatpush1.msra.mxu0 0.0
        %3631 = vmatprep.subr.mxu0 0.0
        %3632 = vmatpush1.msra.mxu0 0.0
        %3633 = vmatprep.subr.mxu0 0.0
        %3634 = vmatpush1.msra.mxu0 0.0
        %3635 = vmatprep.subr.mxu0 0.0
        %3636 = vmatpush1.msra.mxu0 0.0
        %3637 = vmatprep.subr.mxu0 0.0
        %3638 = vmatpush1.msra.mxu0 0.0
        %3639 = vmatprep.subr.mxu0 0.0
        %3640 = vmatpush1.msra.mxu0 0.0
        %3641 = vmatprep.subr.mxu0 0.0
        %3642 = vmatpush1.msra.mxu0 0.0
        %3643 = vmatprep.subr.mxu0 0.0
        %3644 = vmatpush1.msra.mxu0 0.0
        %3645 = vmatprep.subr.mxu0 0.0
        %3646 = vmatpush1.msra.mxu0 0.0
        %3647 = vmatprep.subr.mxu0 0.0
        %3648 = vmatpush1.msra.mxu0 0.0
        %3649 = vmatprep.subr.mxu0 0.0
        %3650 = vmatpush1.msra.mxu0 0.0
        %3651 = vmatprep.subr.mxu0 0.0
        %3652 = vmatpush1.msra.mxu0 0.0
        %3653 = vmatprep.subr.mxu0 0.0
        %3654 = vmatpush1.msra.mxu0 0.0
        %3655 = vmatprep.subr.mxu0 0.0
        %3656 = vmatpush1.msra.mxu0 0.0
        %3657 = vmatprep.subr.mxu0 0.0
        %3658 = vmatpush1.msra.mxu0 0.0
        %3659 = vmatprep.subr.mxu0 0.0
        %3660 = vmatpush1.msra.mxu0 0.0
        %3661 = vmatprep.subr.mxu0 0.0
        %3662 = vmatpush1.msra.mxu0 0.0
        %3663 = vmatprep.subr.mxu0 0.0
        %3664 = vmatpush1.msra.mxu0 0.0
        %3665 = vmatprep.subr.mxu0 0.0
        %3666 = vmatpush1.msra.mxu0 0.0
        %3667 = vmatprep.subr.mxu0 0.0
        %3668 = vmatpush1.msra.mxu0 0.0
        %3669 = vmatprep.subr.mxu0 0.0
        %3670 = vmatpush1.msra.mxu0 0.0
        %3671 = vmatprep.subr.mxu0 0.0
        %3672 = vmatpush1.msra.mxu0 0.0
        %3673 = vmatprep.subr.mxu0 0.0
        %3674 = vmatpush1.msra.mxu0 0.0
        %3675 = vmatprep.subr.mxu0 0.0
        %3676 = vmatpush1.msra.mxu0 0.0
        %3677 = vmatprep.subr.mxu0 0.0
        %3678 = vmatpush1.msra.mxu0 0.0
        %3679 = vmatprep.subr.mxu0 0.0
        %3680 = vmatpush1.msra.mxu0 0.0
        %3681 = vmatprep.subr.mxu0 0.0
        %3682 = vmatpush1.msra.mxu0 0.0
        %3683 = vmatprep.subr.mxu0 0.0
        %3684 = vmatpush1.msra.mxu0 0.0
        %3685 = vmatprep.mubr.f32.mxu0 0.0
        %3686 = vmatmul.mubr.f32.gmra.mrb[0].mxu0 %v3616
        %v3687 = vpop.f32.mrb[0].mxu0
        %v3688 = vadd.f32 0.0, %v3687
        %v3689 = vpop.f32.mrb[0].mxu0
        %3690 = vmatprep.mubr.f32.mxu0 0.0
        %3691 = vmatmul.mubr.f32.gmra.mrb[0].mxu0 %v3619
        %v3692 = vpop.f32.mrb[0].mxu0
        %v3693 = vadd.f32 0.0, %v3692
        %v3694 = vpop.f32.mrb[0].mxu0
        %3695 = vdwg.mxu0
        %v3696 = vadd.f32 %v3079, %v3688
        %v3697 = vadd.f32 %v3080, %v3693
        %v3698 = vmul.f32 %v3357, 0.25
        %v3699 = vmul.f32 %v3358, 0.25
        %3700 = vst [vmem:[%s443] sm:$0xff] %v3698
        %3701 = vst [vmem:[%s443 + $0x8] sm:$0xff] %v3699
        %v3702 = vadd.f32 %v472, %v3696
        %v3703 = vadd.f32 %v473, %v3697
        %v3704 = vsel %vm578, %v3702, 0.0
        %3705 = vadd.xlane.f32.xlu0 %v3704
        %v3706 = vpop.xlane.xlu0 %3705
        %v3707 = vsel %vm578, %v3703, 0.0
        %3708 = vadd.xlane.f32.xlu0 %v3707
        %v3709 = vpop.xlane.xlu0 %3708
        %v3710 = vrcp.pop 32.0
        %v3711 = vmul.f32 %v3706, %v3710
        %v3712 = vmul.f32 %v3709, %v3710
        %v3713 = vsub.f32 %v3702, %v3711
        %v3714 = vsub.f32 %v3703, %v3712
        %v3715 = vmul.f32 %v3713, %v3713
        %v3716 = vmul.f32 %v3714, %v3714
        %v3717 = vsel %vm578, %v3715, 0.0
        %3718 = vadd.xlane.f32.xlu0 %v3717
        %v3719 = vpop.xlane.xlu0 %3718
        %v3720 = vsel %vm578, %v3716, 0.0
        %3721 = vadd.xlane.f32.xlu0 %v3720
        %v3722 = vpop.xlane.xlu0 %3721
        %v3723 = vmul.f32 %v3719, %v3710
        %v3724 = vmul.f32 %v3722, %v3710
        %v3725 = vadd.f32 %v3723, 1e-05
        %v3726 = vadd.f32 %v3724, 1e-05
        %v3727 = vrsqrt.pop %v3725
        %v3728 = vrsqrt.pop %v3726
        %v3729 = vmul.f32 %v3713, %v3727
        %v3730 = vmul.f32 %v3714, %v3728
        %v3731 = vld [vmem:[%s8] sm:$0x1]
        %v3733 = vlaneseq
        %v3734 = vshrl.u32 %v3733, 7
        %v3735 = vsub.s32 0, %v3734
        %v3736 = vrot.slane %v3731, %v3735
        %v3738 = vmul.f32 %v3729, %v3736
        %v3739 = vmul.f32 %v3730, %v3736
        %v3740 = vld [vmem:[%s9] sm:$0x1]
        %v3742 = vlaneseq
        %v3743 = vshrl.u32 %v3742, 7
        %v3744 = vsub.s32 0, %v3743
        %v3745 = vrot.slane %v3740, %v3744
        %v3747 = vadd.f32 %v3738, %v3745
        %v3748 = vadd.f32 %v3739, %v3745
        %3749 = vst.msk [vmem:[%s436] sm:$0xff] %vm578, %v3747
        %3750 = vst.msk [vmem:[%s436 + $0x8] sm:$0xff] %vm578, %v3748
        %s3751 = sand.u32 %s267, 1
        %s3752 = scalar_lea.sflag [#allocation3], %s3751
        %s3753 = sand.u32 %s267, 1
        %s3754 = smul.addr %s3753, 16
        %s3755 = scalar_lea.vmem [#allocation2], %s3754
        %s3756 = sand.u32 %s293, 1
        %s3757 = scalar_lea.sflag [#allocation5], %s3756
        %s3758 = sand.u32 %s293, 1
        %s3759 = smul.addr %s3758, 16
        %s3760 = scalar_lea.vmem [#allocation4], %s3759
        // Predicated region
        $region61: #{tpu_custom_call.1} parent=59 // pred_check
          %p3761 = pneg %p277
        $region62: #{tpu_custom_call.1} parent=59 // pred_check_branch
          %3763 = sbr.rel (%p3761) target = $region64
        $region63: #{tpu_custom_call.1} parent=59 // pred_region
          %s3764 = smul.u32 2, %s29
          %s3766 = ssub.s32 256, 256
          %3767 = vsyncadd %s3752, %s3766
          %s3768 = smul.addr %s3764, 128
          %s3769 = scalar_lea.hbm %s10, %s3768
          %s3770 = sshll.u32 %s3755, 4
          %s3771 = int_to_ptr.vmem [resolvable:$true] %s3770
          %3776 = dma.vmem_to_hbm [thread:$0]  %s3771, 256, %s3769, %s3752, 128, 128, 8
        $region64: #{tpu_custom_call.1} parent=59 // pred_fallthru
          _
        // Predicated region
        $region65: #{tpu_custom_call.1} parent=59 // pred_check
          %p3777 = pneg %p303
        $region66: #{tpu_custom_call.1} parent=59 // pred_check_branch
          %3779 = sbr.rel (%p3777) target = $region68
        $region67: #{tpu_custom_call.1} parent=59 // pred_region
          %s3780 = smul.u32 2, %s29
          %s3782 = ssub.s32 256, 256
          %3783 = vsyncadd %s3757, %s3782
          %s3784 = smul.addr %s3780, 128
          %s3785 = scalar_lea.hbm %s11, %s3784
          %s3786 = sshll.u32 %s3760, 4
          %s3787 = int_to_ptr.vmem [resolvable:$true] %s3786
          %3792 = dma.vmem_to_hbm [thread:$0]  %s3787, 256, %s3785, %s3757, 128, 128, 8
        $region68: #{tpu_custom_call.1} parent=59 // pred_fallthru
          _
      $region60: #{tpu_custom_call.1} parent=5 // pred_fallthru
        _
      %p3793 = scmp.le.s32.totalorder 2, %s24
      // Predicated region
      $region69: #{tpu_custom_call.1} parent=5 // pred_check
        %p3794 = pneg %p3793
      $region70: #{tpu_custom_call.1} parent=5 // pred_check_branch
        %3796 = sbr.rel (%p3794) target = $region72
      $region71: #{tpu_custom_call.1} parent=5 // pred_region
        %s3797 = ssub.s32 %s24, 2
        // Predicated region
        $region73: #{tpu_custom_call.1} parent=71 // pred_check
          %p3798 = pneg %p283
        $region74: #{tpu_custom_call.1} parent=71 // pred_check_branch
          %3800 = sbr.rel (%p3798) target = $region76
        $region75: #{tpu_custom_call.1} parent=71 // pred_region
          %s3801 = sand.u32 %s268, 1
          %s3802 = scalar_lea.sflag [#allocation3], %s3801
          %s3803 = sand.u32 %s268, 1
          %s3804 = smul.addr %s3803, 16
          %s3805 = scalar_lea.vmem [#allocation2], %s3804
          %3806 = dma.done %s3802, 256
        $region76: #{tpu_custom_call.1} parent=71 // pred_fallthru
          _
        // Predicated region
        $region77: #{tpu_custom_call.1} parent=71 // pred_check
          %p3807 = pneg %p309
        $region78: #{tpu_custom_call.1} parent=71 // pred_check_branch
          %3809 = sbr.rel (%p3807) target = $region80
        $region79: #{tpu_custom_call.1} parent=71 // pred_region
          %s3810 = sand.u32 %s294, 1
          %s3811 = scalar_lea.sflag [#allocation5], %s3810
          %s3812 = sand.u32 %s294, 1
          %s3813 = smul.addr %s3812, 16
          %s3814 = scalar_lea.vmem [#allocation4], %s3813
          %3815 = dma.done %s3811, 256
        $region80: #{tpu_custom_call.1} parent=71 // pred_fallthru
          _
      $region72: #{tpu_custom_call.1} parent=5 // pred_fallthru
        _
    $region6: #{tpu_custom_call.1} parent=1 // loop_footer
      %s28 = sadd.s32 1, %s24
    $region7: #{tpu_custom_call.1} parent=1 // loop_footer_branch
      %23 = sbr.rel target = $region3
    $region8: #{tpu_custom_call.1} parent=1 // loop_exit
      _
    %3816 = vsyncpa [#allocation3], 1
    %s3817 = scalar_lea.sflag [#allocation3], 1
    %3818 = vsyncpa %s3817, 1
    %3819 = vsyncpa [#allocation5], 1
    %s3820 = scalar_lea.sflag [#allocation5], 1
    %3821 = vsyncpa %s3820, 1

</llo_original>
